<compile_context>
chip_gen: v5e
topology: v5e:2x2
jax: 0.10.0
libtpu: 0.0.40
codegen_flags: <defaults>
</compile_context>

<pallas_src>
import functools
import math

import jax
import jax.numpy as jnp
from jax import lax
from jax.experimental import pallas as pl
from jax.experimental.pallas import tpu as pltpu

CFG = dict(hidden=32, heads=4, intermediate=64, layers=2,
           vocab=128, max_pos=64, type_vocab=2)

_VMEM_LIMIT = 32 * 1024 * 1024


# ----------------------------------------------------------------------------
# In-kernel helpers (f32 math)
# ----------------------------------------------------------------------------
def _gelu(x):
    # exact GELU (matches torch.nn.functional.gelu default / BERT "gelu")
    return 0.5 * x * (1.0 + lax.erf(x * (1.0 / math.sqrt(2.0))))


def _layernorm_f32(x, gamma, beta, eps):
    mean = jnp.mean(x, axis=-1, keepdims=True)
    var = jnp.mean(jnp.square(x - mean), axis=-1, keepdims=True)
    return (x - mean) * lax.rsqrt(var + eps) * gamma + beta


# ----------------------------------------------------------------------------
# Fused encoder stack: embedding LN + L x (QKV -> attention -> proj+LN -> FFN+LN)
# ONE pallas_call; grid iterates over layers; activation carried in VMEM scratch.
# ----------------------------------------------------------------------------
def _encoder_stack_kernel(emb_ref, tt_ref, embg_ref, embb_ref,
                          wqkv_ref, bqkv_ref, wo_ref, bo_ref, g1_ref, be1_ref,
                          wi_ref, bi_ref, wf_ref, bf_ref, g2_ref, be2_ref,
                          o_ref, x_scr,
                          *, batch, seq, num_heads, eps):
    l = pl.program_id(0)
    hid = emb_ref.shape[-1]
    dh = hid // num_heads
    scale = 1.0 / math.sqrt(dh)

    # Embedding LayerNorm folded into the first grid step (no separate pallas_call).
    @pl.when(l == 0)
    def _():
        x_scr[...] = _layernorm_f32(emb_ref[...], embg_ref[...], embb_ref[...], eps)

    x = x_scr[...]                                   # [M, H] f32, carried across layers
    x_bf = x.astype(jnp.bfloat16)

    # Fused QKV projection over the whole batch (B*S rows in one MXU matmul).
    qkv = jnp.dot(x_bf, wqkv_ref[0],
                  preferred_element_type=jnp.float32) + bqkv_ref[0]      # [M, 3H] f32
    qkv3 = qkv.reshape(batch, seq, 3 * hid)          # row-dim split only

    # UniLM mask ingredients (built in-kernel from token_type_ids; hoisted out of loops).
    tt = tt_ref[...]                                 # [B, S] f32
    rows = lax.broadcasted_iota(jnp.int32, (seq, seq), 0)
    cols = lax.broadcasted_iota(jnp.int32, (seq, seq), 1)
    tril = (rows >= cols).astype(jnp.float32)

    wo = wo_ref[0]
    attn_rows = []
    for b in range(batch):
        # Additive seq2seq mask (0 / -1e4), pure VPU work hidden under the MXU.
        ttk = jnp.broadcast_to(tt[b:b + 1, :], (seq, seq))               # key side:   tt[j]
        ttq = ttk.T                                                      # query side: tt[i]
        bias = (1.0 - ((1.0 - ttk) * (1.0 - ttq) + ttq * tril)) * -10000.0

        # Build head-major operands from the transposed QKV block using sublane slices
        # and tiny 2-D transposes only (no sub-128-lane extracts, no per-head MXU ops).
        qkv_t = qkv3[b].T                                                # [3H, S] f32
        q_h, k_h, v_h = [], [], []
        for n in range(num_heads):
            r = n * dh
            q_h.append(qkv_t[r:r + dh].T)                                # [S, dh]
            k_h.append(qkv_t[hid + r:hid + r + dh])                      # [dh, S]
            v_h.append(qkv_t[2 * hid + r:2 * hid + r + dh])              # [dh, S]
        q = jnp.stack(q_h, axis=0).astype(jnp.bfloat16)                  # [nH, S, dh]
        k = jnp.stack(k_h, axis=0).astype(jnp.bfloat16)                  # [nH, dh, S]
        v = jnp.stack(v_h, axis=0).astype(jnp.bfloat16)                  # [nH, dh, S]

        # All heads in ONE batched dot_general for scores and ONE for context.
        sc = lax.dot_general(q, k, (((2,), (1,)), ((0,), (0,))),
                             preferred_element_type=jnp.float32)         # [nH, S, S]
        sc = sc * scale + bias
        sc = sc - jnp.max(sc, axis=-1, keepdims=True)
        p = jnp.exp(sc)
        p = p / jnp.sum(p, axis=-1, keepdims=True)                       # exact softmax
        ctx = lax.dot_general(v, p.astype(jnp.bfloat16),
                              (((2,), (2,)), ((0,), (0,))),
                              preferred_element_type=jnp.float32)        # [nH, dh, S]

        ctx2d = jnp.concatenate([ctx[n] for n in range(num_heads)], axis=0)   # [H, S]
        attn_rows.append(jnp.dot(ctx2d.T.astype(jnp.bfloat16), wo,
                                 preferred_element_type=jnp.float32))    # [S, H]

    # Output projection bias + residual + LayerNorm (whole batch, f32).
    attn = jnp.concatenate(attn_rows, axis=0) + bo_ref[0]                # [M, H] f32
    x1 = _layernorm_f32(attn + x, g1_ref[0], be1_ref[0], eps)

    # FFN: dense + GELU, dense, residual + LayerNorm (whole batch).
    inter = jnp.dot(x1.astype(jnp.bfloat16), wi_ref[0],
                    preferred_element_type=jnp.float32) + bi_ref[0]
    inter = _gelu(inter)
    ff = jnp.dot(inter.astype(jnp.bfloat16), wf_ref[0],
                 preferred_element_type=jnp.float32) + bf_ref[0]
    x2 = _layernorm_f32(ff + x1, g2_ref[0], be2_ref[0], eps)

    x_scr[...] = x2

    @pl.when(l == pl.num_programs(0) - 1)
    def _():
        o_ref[...] = x2.astype(o_ref.dtype)


def encoder_forward(emb, token_types_f32, p, *, batch, seq, num_heads, eps=1e-12):
    """emb: [B*S, H] f32 summed embeddings; token_types_f32: [B, S] f32 -> [B*S, H] bf16."""
    m, hid = emb.shape
    inter = p["Wi"].shape[-1]
    layers = p["Wqkv"].shape[0]

    def const(shape):
        return pl.BlockSpec(shape, lambda l: (0,) * len(shape))

    def per_layer(shape):
        return pl.BlockSpec((1,) + shape, lambda l: (l,) + (0,) * len(shape))

    in_specs = [
        const((m, hid)),                                        # summed embeddings
        const((batch, seq)),                                    # token_type_ids (f32)
        const((1, hid)), const((1, hid)),                       # embedding LayerNorm
        per_layer((hid, 3 * hid)), per_layer((1, 3 * hid)),     # fused QKV
        per_layer((hid, hid)), per_layer((1, hid)),             # output projection
        per_layer((1, hid)), per_layer((1, hid)),               # LN1
        per_layer((hid, inter)), per_layer((1, inter)),         # FFN in
        per_layer((inter, hid)), per_layer((1, hid)),           # FFN out
        per_layer((1, hid)), per_layer((1, hid)),               # LN2
    ]
    return pl.pallas_call(
        functools.partial(_encoder_stack_kernel, batch=batch, seq=seq,
                          num_heads=num_heads, eps=eps),
        out_shape=jax.ShapeDtypeStruct((m, hid), jnp.bfloat16),
        grid=(layers,),
        in_specs=in_specs,
        out_specs=const((m, hid)),
        scratch_shapes=[pltpu.VMEM((m, hid), jnp.float32)],     # carried activation
        compiler_params=pltpu.CompilerParams(
            dimension_semantics=("arbitrary",),                 # layer axis carries state
            vmem_limit_bytes=_VMEM_LIMIT),
    )(emb, token_types_f32, p["emb_ln_g"], p["emb_ln_b"],
      p["Wqkv"], p["bqkv"], p["Wo"], p["bo"], p["ln1_g"], p["ln1_b"],
      p["Wi"], p["bi"], p["Wf"], p["bf"], p["ln2_g"], p["ln2_b"])


# ----------------------------------------------------------------------------
# Fused LM head: dense+GELU+LN (once per row block) -> tied decoder logits
# (tiled over vocab) -> streamed masked cross-entropy across vocab tiles.
# ----------------------------------------------------------------------------
def _head_loss_kernel(x_ref, wt_ref, bt_ref, g_ref, b_ref, emb_ref, db_ref,
                      lab_ref, w_ref,
                      logits_ref, loss_ref,
                      t_scr, m_scr, l_scr, ll_scr, num_scr, den_scr,
                      *, eps, block_v):
    i = pl.program_id(0)
    j = pl.program_id(1)
    ni = pl.num_programs(0)
    nj = pl.num_programs(1)

    @pl.when(jnp.logical_and(i == 0, j == 0))
    def _():
        num_scr[...] = jnp.zeros_like(num_scr)
        den_scr[...] = jnp.zeros_like(den_scr)

    # Head transform (dense + GELU + LayerNorm) computed ONCE per row block.
    @pl.when(j == 0)
    def _():
        t = jnp.dot(x_ref[...], wt_ref[...],
                    preferred_element_type=jnp.float32) + bt_ref[...]
        t = _gelu(t)
        t = _layernorm_f32(t, g_ref[...], b_ref[...], eps)
        t_scr[...] = t.astype(jnp.bfloat16)
        m_scr[...] = jnp.full(m_scr.shape, -1e30, jnp.float32)
        l_scr[...] = jnp.zeros_like(l_scr)
        ll_scr[...] = jnp.zeros_like(ll_scr)

    # Tied decoder: contract against the UNtransposed [V, H] embedding tile.
    logits = lax.dot_general(t_scr[...], emb_ref[...], (((1,), (1,)), ((), ())),
                             preferred_element_type=jnp.float32) + db_ref[...]
    logits_ref[...] = logits                                    # lane-dense f32 tile

    # Streamed masked CE: online logsumexp + label logit across vocab tiles.
    labels = lab_ref[...]                                       # [tm, 1] int32
    m_prev = m_scr[...]
    m_new = jnp.maximum(m_prev, jnp.max(logits, axis=-1, keepdims=True))
    l_scr[...] = (l_scr[...] * jnp.exp(m_prev - m_new)
                  + jnp.sum(jnp.exp(logits - m_new), axis=-1, keepdims=True))
    m_scr[...] = m_new
    vocab_ids = lax.broadcasted_iota(jnp.int32, logits.shape, 1) + j * block_v
    ll_scr[...] += jnp.sum(jnp.where(vocab_ids == labels, logits, 0.0),
                           axis=-1, keepdims=True)

    @pl.when(j == nj - 1)
    def _():
        lse = m_scr[...] + jnp.log(l_scr[...])
        nll = lse - ll_scr[...]                                 # per-token CE
        nll = jnp.where(labels == 0, 0.0, nll)                  # ignore_index=0
        w = w_ref[...]                                          # [tm, 1] f32 target_mask
        num_scr[...] += jnp.sum(nll * w)
        den_scr[...] += jnp.sum(w)

    @pl.when(jnp.logical_and(i == ni - 1, j == nj - 1))
    def _():
        # TODO(synk): an SMEM scalar output would avoid this masked (1,1) VMEM store.
        loss_ref[...] = num_scr[...] / den_scr[...]


def head_logits_loss(x, p, labels_full, wmask_full, *, block_m=256, block_v=512, eps=1e-12):
    """x: [M, H] bf16 encoder output -> ([M, V] f32 logits, scalar loss)."""
    m, hid = x.shape
    v = p["word_emb"].shape[0]
    tm = m if m <= block_m else block_m
    tv = v if v <= block_v else block_v
    assert m % tm == 0 and v % tv == 0  # TODO(synk): ragged last tiles not handled
    grid = (m // tm, v // tv)           # vocab axis innermost (streamed CE)

    logits, loss = pl.pallas_call(
        functools.partial(_head_loss_kernel, eps=eps, block_v=tv),
        out_shape=(jax.ShapeDtypeStruct((m, v), jnp.float32),
                   jax.ShapeDtypeStruct((1, 1), jnp.float32)),
        grid=grid,
        in_specs=[
            pl.BlockSpec((tm, hid), lambda i, j: (i, 0)),       # encoder output rows
            pl.BlockSpec((hid, hid), lambda i, j: (0, 0)),      # head dense W
            pl.BlockSpec((1, hid), lambda i, j: (0, 0)),        # head dense b
            pl.BlockSpec((1, hid), lambda i, j: (0, 0)),        # head LN gamma
            pl.BlockSpec((1, hid), lambda i, j: (0, 0)),        # head LN beta
            pl.BlockSpec((tv, hid), lambda i, j: (j, 0)),       # tied word embedding tile
            pl.BlockSpec((1, tv), lambda i, j: (0, j)),         # decoder bias tile
            pl.BlockSpec((tm, 1), lambda i, j: (i, 0)),         # labels (shift folded in)
            pl.BlockSpec((tm, 1), lambda i, j: (i, 0)),         # target mask (shift folded)
        ],
        out_specs=[pl.BlockSpec((tm, tv), lambda i, j: (i, j)),
                   pl.BlockSpec((1, 1), lambda i, j: (0, 0))],
        scratch_shapes=[pltpu.VMEM((tm, hid), jnp.bfloat16),    # transformed rows
                        pltpu.VMEM((tm, 1), jnp.float32),       # running max
                        pltpu.VMEM((tm, 1), jnp.float32),       # running sum-exp
                        pltpu.VMEM((tm, 1), jnp.float32),       # label logit
                        pltpu.VMEM((1, 1), jnp.float32),        # loss numerator
                        pltpu.VMEM((1, 1), jnp.float32)],       # loss denominator
        compiler_params=pltpu.CompilerParams(
            dimension_semantics=("arbitrary", "arbitrary"),     # global scalar accumulation
            vmem_limit_bytes=_VMEM_LIMIT),
    )(x, p["head_Wt"], p["head_bt"], p["head_ln_g"], p["head_ln_b"],
      p["word_emb"], p["decoder_bias"], labels_full, wmask_full)
    return logits, loss[0, 0]


# ----------------------------------------------------------------------------
# Parameters (bf16 weights for MXU; f32 biases/LN params; layer weights stacked on L)
# ----------------------------------------------------------------------------
def init_params(key, cfg):
    H, I, V = cfg["hidden"], cfg["intermediate"], cfg["vocab"]
    P, T, L = cfg["max_pos"], cfg["type_vocab"], cfg["layers"]
    std = 0.02
    keys = iter(jax.random.split(key, 16))

    def nrm(shape):
        return (std * jax.random.normal(next(keys), shape, jnp.float32)).astype(jnp.bfloat16)

    ones = lambda s: jnp.ones(s, jnp.float32)
    zeros = lambda s: jnp.zeros(s, jnp.float32)

    return {
        "word_emb": nrm((V, H)),            # tied with the decoder
        "pos_emb": nrm((P, H)),
        "type_emb": nrm((T, H)),
        "emb_ln_g": ones((1, H)), "emb_ln_b": zeros((1, H)),
        "head_Wt": nrm((H, H)), "head_bt": zeros((1, H)),
        "head_ln_g": ones((1, H)), "head_ln_b": zeros((1, H)),
        "decoder_bias": zeros((1, V)),
        # Stacked per-layer encoder weights (leading dim = layer index).
        "Wqkv": nrm((L, H, 3 * H)), "bqkv": zeros((L, 1, 3 * H)),
        "Wo": nrm((L, H, H)), "bo": zeros((L, 1, H)),
        "ln1_g": ones((L, 1, H)), "ln1_b": zeros((L, 1, H)),
        "Wi": nrm((L, H, I)), "bi": zeros((L, 1, I)),
        "Wf": nrm((L, I, H)), "bf": zeros((L, 1, H)),
        "ln2_g": ones((L, 1, H)), "ln2_b": zeros((L, 1, H)),
    }


# ----------------------------------------------------------------------------
# Forward pass
# ----------------------------------------------------------------------------
def seq2seq_forward(params, input_ids, token_type_ids, labels=None):
    cfg = CFG
    B, S = input_ids.shape
    H, nH, V = cfg["hidden"], cfg["heads"], cfg["vocab"]
    M = B * S

    # Embedding gathers stay in XLA (glue); LayerNorm is folded into the encoder kernel.
    pos_ids = jnp.arange(S, dtype=jnp.int32)
    emb = (jnp.take(params["word_emb"], input_ids, axis=0).astype(jnp.float32)
           + jnp.take(params["pos_emb"], pos_ids, axis=0).astype(jnp.float32)[None, :, :]
           + jnp.take(params["type_emb"], token_type_ids, axis=0).astype(jnp.float32))
    # TODO(synk): dropout omitted (deterministic / eval semantics).

    x = encoder_forward(emb.reshape(M, H), token_type_ids.astype(jnp.float32),
                        params, batch=B, seq=S, num_heads=nH)      # [M, H] bf16

    # Fold the seq2seq shift into per-row label / mask vectors (no logits-sized XLA copy
    # feeding the loss): row (b, s) uses label[b, s] and mask = token_type[b, s+1], and
    # the padded last position per batch gets label 0 / weight 0.
    if labels is None:
        lab_full = jnp.zeros((M, 1), jnp.int32)
        w_full = jnp.zeros((M, 1), jnp.float32)
    else:
        lab_full = jnp.concatenate(
            [labels.astype(jnp.int32), jnp.zeros((B, 1), jnp.int32)], axis=1).reshape(M, 1)
        w_full = jnp.concatenate(
            [token_type_ids[:, 1:].astype(jnp.float32), jnp.zeros((B, 1), jnp.float32)],
            axis=1).reshape(M, 1)

    logits, loss = head_logits_loss(x, params, lab_full, w_full)
    predictions = logits.reshape(B, S, V)

    if labels is None:
        return predictions
    return predictions[:, :-1], loss


# ----------------------------------------------------------------------------
if __name__ == "__main__":
    B, S = 2, 8
    key = jax.random.PRNGKey(0)
    kp, ki = jax.random.split(key)
    params = init_params(kp, CFG)

    input_ids = jax.random.randint(ki, (B, S), 1, CFG["vocab"], dtype=jnp.int32)
    token_type_ids = jnp.concatenate(
        [jnp.zeros((B, S // 2), jnp.int32), jnp.ones((B, S // 2), jnp.int32)], axis=1)
    labels = input_ids[:, 1:]   # standard seq2seq shifted targets

    fwd = jax.jit(seq2seq_forward)
    predictions, loss = fwd(params, input_ids, token_type_ids, labels)
    jax.block_until_ready((predictions, loss))
    assert predictions.shape == (B, S - 1, CFG["vocab"])
    assert bool(jnp.isfinite(loss))
    print("KERNEL_OK")
</pallas_src>

<mosaic_0001>
module attributes {stable_mosaic.version = 11 : i64} {
  func.func @_encoder_stack_kernel(%arg0: i32, %arg1: memref<16x32xf32, #tpu.memory_space<vmem>>, %arg2: memref<2x8xf32, #tpu.memory_space<vmem>>, %arg3: memref<1x32xf32, #tpu.memory_space<vmem>>, %arg4: memref<1x32xf32, #tpu.memory_space<vmem>>, %arg5: memref<1x32x96xbf16, #tpu.memory_space<vmem>>, %arg6: memref<1x1x96xf32, #tpu.memory_space<vmem>>, %arg7: memref<1x32x32xbf16, #tpu.memory_space<vmem>>, %arg8: memref<1x1x32xf32, #tpu.memory_space<vmem>>, %arg9: memref<1x1x32xf32, #tpu.memory_space<vmem>>, %arg10: memref<1x1x32xf32, #tpu.memory_space<vmem>>, %arg11: memref<1x32x64xbf16, #tpu.memory_space<vmem>>, %arg12: memref<1x1x64xf32, #tpu.memory_space<vmem>>, %arg13: memref<1x64x32xbf16, #tpu.memory_space<vmem>>, %arg14: memref<1x1x32xf32, #tpu.memory_space<vmem>>, %arg15: memref<1x1x32xf32, #tpu.memory_space<vmem>>, %arg16: memref<1x1x32xf32, #tpu.memory_space<vmem>>, %arg17: memref<16x32xbf16, #tpu.memory_space<vmem>>, %arg18: memref<16x32xf32, #tpu.memory_space<vmem>>) attributes {dimension_semantics = [#tpu.dimension_semantics<arbitrary>], iteration_bounds = array<i64: 2>, scalar_prefetch = 0 : i64, scratch_operands = 1 : i64, tpu.core_type = #tpu.core_type<tc>, window_params = [{pipeline_mode = #tpu.pipeline_mode<synchronous>, transform_indices = @transform_0, window_bounds = array<i64: 16, 32>}, {pipeline_mode = #tpu.pipeline_mode<synchronous>, transform_indices = @transform_1, window_bounds = array<i64: 2, 8>}, {pipeline_mode = #tpu.pipeline_mode<synchronous>, transform_indices = @transform_2, window_bounds = array<i64: 1, 32>}, {pipeline_mode = #tpu.pipeline_mode<synchronous>, transform_indices = @transform_3, window_bounds = array<i64: 1, 32>}, {transform_indices = @transform_4, window_bounds = array<i64: 1, 32, 96>}, {transform_indices = @transform_5, window_bounds = array<i64: 1, 1, 96>}, {transform_indices = @transform_6, window_bounds = array<i64: 1, 32, 32>}, {transform_indices = @transform_7, window_bounds = array<i64: 1, 1, 32>}, {transform_indices = @transform_8, window_bounds = array<i64: 1, 1, 32>}, {transform_indices = @transform_9, window_bounds = array<i64: 1, 1, 32>}, {transform_indices = @transform_10, window_bounds = array<i64: 1, 32, 64>}, {transform_indices = @transform_11, window_bounds = array<i64: 1, 1, 64>}, {transform_indices = @transform_12, window_bounds = array<i64: 1, 64, 32>}, {transform_indices = @transform_13, window_bounds = array<i64: 1, 1, 32>}, {transform_indices = @transform_14, window_bounds = array<i64: 1, 1, 32>}, {transform_indices = @transform_15, window_bounds = array<i64: 1, 1, 32>}, {pipeline_mode = #tpu.pipeline_mode<synchronous>, transform_indices = @transform_16, window_bounds = array<i64: 16, 32>}]} {
    %c0_i32 = arith.constant 0 : i32
    %0 = arith.cmpi eq, %arg0, %c0_i32 : i32
    %1 = arith.extui %0 : i1 to i32
    %c0_i32_0 = arith.constant 0 : i32
    %2 = arith.cmpi ne, %1, %c0_i32_0 : i32
    scf.if %2 {
      %c0_78 = arith.constant 0 : index
      %c0_79 = arith.constant 0 : index
      %270 = vector.load %arg1[%c0_78, %c0_79] : memref<16x32xf32, #tpu.memory_space<vmem>>, vector<16x32xf32>
      %c0_80 = arith.constant 0 : index
      %c0_81 = arith.constant 0 : index
      %271 = vector.load %arg3[%c0_80, %c0_81] : memref<1x32xf32, #tpu.memory_space<vmem>>, vector<1x32xf32>
      %c0_82 = arith.constant 0 : index
      %c0_83 = arith.constant 0 : index
      %272 = vector.load %arg4[%c0_82, %c0_83] : memref<1x32xf32, #tpu.memory_space<vmem>>, vector<1x32xf32>
      %cst_84 = arith.constant dense<0.000000e+00> : vector<16xf32>
      %273 = vector.multi_reduction <add>, %270, %cst_84 [1] : vector<16x32xf32> to vector<16xf32>
      %274 = vector.shape_cast %273 : vector<16xf32> to vector<16x1xf32>
      %cst_85 = arith.constant 3.200000e+01 : f32
      %275 = vector.broadcast %cst_85 : f32 to vector<16x1xf32>
      %276 = arith.divf %274, %275 : vector<16x1xf32>
      %277 = vector.broadcast %276 : vector<16x1xf32> to vector<16x32xf32>
      %278 = arith.subf %270, %277 : vector<16x32xf32>
      %279 = arith.mulf %278, %278 : vector<16x32xf32>
      %cst_86 = arith.constant dense<0.000000e+00> : vector<16xf32>
      %280 = vector.multi_reduction <add>, %279, %cst_86 [1] : vector<16x32xf32> to vector<16xf32>
      %281 = vector.shape_cast %280 : vector<16xf32> to vector<16x1xf32>
      %cst_87 = arith.constant 3.200000e+01 : f32
      %282 = vector.broadcast %cst_87 : f32 to vector<16x1xf32>
      %283 = arith.divf %281, %282 : vector<16x1xf32>
      %284 = vector.broadcast %276 : vector<16x1xf32> to vector<16x32xf32>
      %285 = arith.subf %270, %284 : vector<16x32xf32>
      %cst_88 = arith.constant 9.99999996E-13 : f32
      %286 = vector.broadcast %cst_88 : f32 to vector<16x1xf32>
      %287 = arith.addf %283, %286 : vector<16x1xf32>
      %288 = math.rsqrt %287 : vector<16x1xf32>
      %289 = vector.broadcast %288 : vector<16x1xf32> to vector<16x32xf32>
      %290 = arith.mulf %285, %289 : vector<16x32xf32>
      %291 = vector.broadcast %271 : vector<1x32xf32> to vector<16x32xf32>
      %292 = arith.mulf %290, %291 : vector<16x32xf32>
      %293 = vector.broadcast %272 : vector<1x32xf32> to vector<16x32xf32>
      %294 = arith.addf %292, %293 : vector<16x32xf32>
      %c0_89 = arith.constant 0 : index
      %c0_90 = arith.constant 0 : index
      %295 = vector.load %arg18[%c0_89, %c0_90] : memref<16x32xf32, #tpu.memory_space<vmem>>, vector<16x32xf32>
      tpu.vector_store %arg18[%c0_89, %c0_90], %294 {strides = array<i32>} : memref<16x32xf32, #tpu.memory_space<vmem>>, vector<16x32xf32>,
    } else {
    }
    %c0 = arith.constant 0 : index
    %c0_1 = arith.constant 0 : index
    %3 = vector.load %arg18[%c0, %c0_1] : memref<16x32xf32, #tpu.memory_space<vmem>>, vector<16x32xf32>
    %4 = arith.truncf %3 : vector<16x32xf32> to vector<16x32xbf16>
    %c0_2 = arith.constant 0 : index
    %c0_3 = arith.constant 0 : index
    %c0_4 = arith.constant 0 : index
    %5 = vector.load %arg5[%c0_2, %c0_3, %c0_4] : memref<1x32x96xbf16, #tpu.memory_space<vmem>>, vector<1x32x96xbf16>
    %6 = vector.shape_cast %5 : vector<1x32x96xbf16> to vector<32x96xbf16>
    %cst = arith.constant dense<0.000000e+00> : vector<16x96xf32>
    %7 = tpu.matmul %4, %6, %cst {dimension_numbers = #tpu.dot_dimension_numbers<[1], [0], [0], [1], [0, 0, 1, 1], [], []>} : vector<16x32xbf16>, vector<32x96xbf16>, vector<16x96xf32> -> vector<16x96xf32>
    %c0_5 = arith.constant 0 : index
    %c0_6 = arith.constant 0 : index
    %c0_7 = arith.constant 0 : index
    %8 = vector.load %arg6[%c0_5, %c0_6, %c0_7] : memref<1x1x96xf32, #tpu.memory_space<vmem>>, vector<1x1x96xf32>
    %9 = vector.shape_cast %8 : vector<1x1x96xf32> to vector<1x96xf32>
    %10 = vector.broadcast %9 : vector<1x96xf32> to vector<16x96xf32>
    %11 = arith.addf %7, %10 : vector<16x96xf32>
    %12 = vector.shape_cast %11 : vector<16x96xf32> to vector<2x8x96xf32>
    %c0_8 = arith.constant 0 : index
    %c0_9 = arith.constant 0 : index
    %13 = vector.load %arg2[%c0_8, %c0_9] : memref<2x8xf32, #tpu.memory_space<vmem>>, vector<2x8xf32>
    %14 = tpu.iota {dimensions = array<i32: 0>} : vector<8x8xi32>
    %15 = tpu.iota {dimensions = array<i32: 1>} : vector<8x8xi32>
    %16 = arith.cmpi sge, %14, %15 : vector<8x8xi32>
    %17 = arith.extui %16 : vector<8x8xi1> to vector<8x8xi32>
    %18 = arith.sitofp %17 : vector<8x8xi32> to vector<8x8xf32>
    %c0_10 = arith.constant 0 : index
    %c0_11 = arith.constant 0 : index
    %c0_12 = arith.constant 0 : index
    %19 = vector.load %arg7[%c0_10, %c0_11, %c0_12] : memref<1x32x32xbf16, #tpu.memory_space<vmem>>, vector<1x32x32xbf16>
    %20 = vector.shape_cast %19 : vector<1x32x32xbf16> to vector<32x32xbf16>
    %21 = vector.extract_strided_slice %13 {offsets = [0, 0], sizes = [1, 8], strides = [1, 1]} : vector<2x8xf32> to vector<1x8xf32>
    %22 = vector.shape_cast %21 : vector<1x8xf32> to vector<1x8xf32>
    %23 = vector.broadcast %22 : vector<1x8xf32> to vector<8x8xf32>
    %24 = tpu.transpose %23, [1, 0] : vector<8x8xf32> -> vector<8x8xf32>
    %cst_13 = arith.constant 1.000000e+00 : f32
    %25 = vector.broadcast %cst_13 : f32 to vector<8x8xf32>
    %26 = arith.subf %25, %23 : vector<8x8xf32>
    %cst_14 = arith.constant 1.000000e+00 : f32
    %27 = vector.broadcast %cst_14 : f32 to vector<8x8xf32>
    %28 = arith.subf %27, %24 : vector<8x8xf32>
    %29 = arith.mulf %26, %28 : vector<8x8xf32>
    %30 = arith.mulf %24, %18 : vector<8x8xf32>
    %31 = arith.addf %29, %30 : vector<8x8xf32>
    %cst_15 = arith.constant 1.000000e+00 : f32
    %32 = vector.broadcast %cst_15 : f32 to vector<8x8xf32>
    %33 = arith.subf %32, %31 : vector<8x8xf32>
    %cst_16 = arith.constant -1.000000e+04 : f32
    %34 = vector.broadcast %cst_16 : f32 to vector<8x8xf32>
    %35 = arith.mulf %33, %34 : vector<8x8xf32>
    %36 = vector.extract_strided_slice %12 {offsets = [0, 0, 0], sizes = [1, 8, 96], strides = [1, 1, 1]} : vector<2x8x96xf32> to vector<1x8x96xf32>
    %37 = vector.shape_cast %36 : vector<1x8x96xf32> to vector<8x96xf32>
    %38 = tpu.transpose %37, [1, 0] : vector<8x96xf32> -> vector<96x8xf32>
    %39 = vector.extract_strided_slice %38 {offsets = [0, 0], sizes = [8, 8], strides = [1, 1]} : vector<96x8xf32> to vector<8x8xf32>
    %40 = tpu.transpose %39, [1, 0] : vector<8x8xf32> -> vector<8x8xf32>
    %41 = vector.extract_strided_slice %38 {offsets = [32, 0], sizes = [8, 8], strides = [1, 1]} : vector<96x8xf32> to vector<8x8xf32>
    %42 = vector.extract_strided_slice %38 {offsets = [64, 0], sizes = [8, 8], strides = [1, 1]} : vector<96x8xf32> to vector<8x8xf32>
    %43 = vector.extract_strided_slice %38 {offsets = [8, 0], sizes = [8, 8], strides = [1, 1]} : vector<96x8xf32> to vector<8x8xf32>
    %44 = tpu.transpose %43, [1, 0] : vector<8x8xf32> -> vector<8x8xf32>
    %45 = vector.extract_strided_slice %38 {offsets = [40, 0], sizes = [8, 8], strides = [1, 1]} : vector<96x8xf32> to vector<8x8xf32>
    %46 = vector.extract_strided_slice %38 {offsets = [72, 0], sizes = [8, 8], strides = [1, 1]} : vector<96x8xf32> to vector<8x8xf32>
    %47 = vector.extract_strided_slice %38 {offsets = [16, 0], sizes = [8, 8], strides = [1, 1]} : vector<96x8xf32> to vector<8x8xf32>
    %48 = tpu.transpose %47, [1, 0] : vector<8x8xf32> -> vector<8x8xf32>
    %49 = vector.extract_strided_slice %38 {offsets = [48, 0], sizes = [8, 8], strides = [1, 1]} : vector<96x8xf32> to vector<8x8xf32>
    %50 = vector.extract_strided_slice %38 {offsets = [80, 0], sizes = [8, 8], strides = [1, 1]} : vector<96x8xf32> to vector<8x8xf32>
    %51 = vector.extract_strided_slice %38 {offsets = [24, 0], sizes = [8, 8], strides = [1, 1]} : vector<96x8xf32> to vector<8x8xf32>
    %52 = tpu.transpose %51, [1, 0] : vector<8x8xf32> -> vector<8x8xf32>
    %53 = vector.extract_strided_slice %38 {offsets = [56, 0], sizes = [8, 8], strides = [1, 1]} : vector<96x8xf32> to vector<8x8xf32>
    %54 = vector.extract_strided_slice %38 {offsets = [88, 0], sizes = [8, 8], strides = [1, 1]} : vector<96x8xf32> to vector<8x8xf32>
    %55 = vector.shape_cast %40 : vector<8x8xf32> to vector<1x8x8xf32>
    %56 = vector.shape_cast %44 : vector<8x8xf32> to vector<1x8x8xf32>
    %57 = vector.shape_cast %48 : vector<8x8xf32> to vector<1x8x8xf32>
    %58 = vector.shape_cast %52 : vector<8x8xf32> to vector<1x8x8xf32>
    %59 = tpu.concatenate %55, %56, %57, %58 in 0 : vector<1x8x8xf32>, vector<1x8x8xf32>, vector<1x8x8xf32>, vector<1x8x8xf32> -> vector<4x8x8xf32>
    %60 = arith.truncf %59 : vector<4x8x8xf32> to vector<4x8x8xbf16>
    %61 = vector.shape_cast %41 : vector<8x8xf32> to vector<1x8x8xf32>
    %62 = vector.shape_cast %45 : vector<8x8xf32> to vector<1x8x8xf32>
    %63 = vector.shape_cast %49 : vector<8x8xf32> to vector<1x8x8xf32>
    %64 = vector.shape_cast %53 : vector<8x8xf32> to vector<1x8x8xf32>
    %65 = tpu.concatenate %61, %62, %63, %64 in 0 : vector<1x8x8xf32>, vector<1x8x8xf32>, vector<1x8x8xf32>, vector<1x8x8xf32> -> vector<4x8x8xf32>
    %66 = arith.truncf %65 : vector<4x8x8xf32> to vector<4x8x8xbf16>
    %67 = vector.shape_cast %42 : vector<8x8xf32> to vector<1x8x8xf32>
    %68 = vector.shape_cast %46 : vector<8x8xf32> to vector<1x8x8xf32>
    %69 = vector.shape_cast %50 : vector<8x8xf32> to vector<1x8x8xf32>
    %70 = vector.shape_cast %54 : vector<8x8xf32> to vector<1x8x8xf32>
    %71 = tpu.concatenate %67, %68, %69, %70 in 0 : vector<1x8x8xf32>, vector<1x8x8xf32>, vector<1x8x8xf32>, vector<1x8x8xf32> -> vector<4x8x8xf32>
    %72 = arith.truncf %71 : vector<4x8x8xf32> to vector<4x8x8xbf16>
    %cst_17 = arith.constant dense<0.000000e+00> : vector<4x8x8xf32>
    %73 = tpu.matmul %60, %66, %cst_17 {dimension_numbers = #tpu.dot_dimension_numbers<[2], [1], [1], [2], [0, 0, 0, 1, 1, 2], [0], [0]>} : vector<4x8x8xbf16>, vector<4x8x8xbf16>, vector<4x8x8xf32> -> vector<4x8x8xf32>
    %cst_18 = arith.constant 0.353553385 : f32
    %74 = vector.broadcast %cst_18 : f32 to vector<4x8x8xf32>
    %75 = arith.mulf %73, %74 : vector<4x8x8xf32>
    %76 = vector.shape_cast %35 : vector<8x8xf32> to vector<1x8x8xf32>
    %77 = vector.broadcast %76 : vector<1x8x8xf32> to vector<4x8x8xf32>
    %78 = arith.addf %75, %77 : vector<4x8x8xf32>
    %cst_19 = arith.constant dense<0xFF800000> : vector<4x8xf32>
    %79 = vector.multi_reduction <maximumf>, %78, %cst_19 [2] : vector<4x8x8xf32> to vector<4x8xf32>
    %80 = vector.shape_cast %79 : vector<4x8xf32> to vector<4x8x1xf32>
    %81 = vector.broadcast %80 : vector<4x8x1xf32> to vector<4x8x8xf32>
    %82 = arith.subf %78, %81 : vector<4x8x8xf32>
    %83 = math.exp %82 : vector<4x8x8xf32>
    %cst_20 = arith.constant dense<0.000000e+00> : vector<4x8xf32>
    %84 = vector.multi_reduction <add>, %83, %cst_20 [2] : vector<4x8x8xf32> to vector<4x8xf32>
    %85 = vector.shape_cast %84 : vector<4x8xf32> to vector<4x8x1xf32>
    %86 = vector.broadcast %85 : vector<4x8x1xf32> to vector<4x8x8xf32>
    %87 = arith.divf %83, %86 : vector<4x8x8xf32>
    %88 = arith.truncf %87 : vector<4x8x8xf32> to vector<4x8x8xbf16>
    %cst_21 = arith.constant dense<0.000000e+00> : vector<4x8x8xf32>
    %89 = tpu.matmul %72, %88, %cst_21 {dimension_numbers = #tpu.dot_dimension_numbers<[2], [2], [1], [1], [0, 0, 0, 1, 1, 1], [0], [0]>} : vector<4x8x8xbf16>, vector<4x8x8xbf16>, vector<4x8x8xf32> -> vector<4x8x8xf32>
    %90 = vector.extract_strided_slice %89 {offsets = [0, 0, 0], sizes = [1, 8, 8], strides = [1, 1, 1]} : vector<4x8x8xf32> to vector<1x8x8xf32>
    %91 = vector.shape_cast %90 : vector<1x8x8xf32> to vector<8x8xf32>
    %92 = vector.extract_strided_slice %89 {offsets = [1, 0, 0], sizes = [1, 8, 8], strides = [1, 1, 1]} : vector<4x8x8xf32> to vector<1x8x8xf32>
    %93 = vector.shape_cast %92 : vector<1x8x8xf32> to vector<8x8xf32>
    %94 = vector.extract_strided_slice %89 {offsets = [2, 0, 0], sizes = [1, 8, 8], strides = [1, 1, 1]} : vector<4x8x8xf32> to vector<1x8x8xf32>
    %95 = vector.shape_cast %94 : vector<1x8x8xf32> to vector<8x8xf32>
    %96 = vector.extract_strided_slice %89 {offsets = [3, 0, 0], sizes = [1, 8, 8], strides = [1, 1, 1]} : vector<4x8x8xf32> to vector<1x8x8xf32>
    %97 = vector.shape_cast %96 : vector<1x8x8xf32> to vector<8x8xf32>
    %98 = tpu.concatenate %91, %93, %95, %97 in 0 : vector<8x8xf32>, vector<8x8xf32>, vector<8x8xf32>, vector<8x8xf32> -> vector<32x8xf32>
    %99 = tpu.transpose %98, [1, 0] : vector<32x8xf32> -> vector<8x32xf32>
    %100 = arith.truncf %99 : vector<8x32xf32> to vector<8x32xbf16>
    %cst_22 = arith.constant dense<0.000000e+00> : vector<8x32xf32>
    %101 = tpu.matmul %100, %20, %cst_22 {dimension_numbers = #tpu.dot_dimension_numbers<[1], [0], [0], [1], [0, 0, 1, 1], [], []>} : vector<8x32xbf16>, vector<32x32xbf16>, vector<8x32xf32> -> vector<8x32xf32>
    %102 = vector.extract_strided_slice %13 {offsets = [1, 0], sizes = [1, 8], strides = [1, 1]} : vector<2x8xf32> to vector<1x8xf32>
    %103 = vector.shape_cast %102 : vector<1x8xf32> to vector<1x8xf32>
    %104 = vector.broadcast %103 : vector<1x8xf32> to vector<8x8xf32>
    %105 = tpu.transpose %104, [1, 0] : vector<8x8xf32> -> vector<8x8xf32>
    %cst_23 = arith.constant 1.000000e+00 : f32
    %106 = vector.broadcast %cst_23 : f32 to vector<8x8xf32>
    %107 = arith.subf %106, %104 : vector<8x8xf32>
    %cst_24 = arith.constant 1.000000e+00 : f32
    %108 = vector.broadcast %cst_24 : f32 to vector<8x8xf32>
    %109 = arith.subf %108, %105 : vector<8x8xf32>
    %110 = arith.mulf %107, %109 : vector<8x8xf32>
    %111 = arith.mulf %105, %18 : vector<8x8xf32>
    %112 = arith.addf %110, %111 : vector<8x8xf32>
    %cst_25 = arith.constant 1.000000e+00 : f32
    %113 = vector.broadcast %cst_25 : f32 to vector<8x8xf32>
    %114 = arith.subf %113, %112 : vector<8x8xf32>
    %cst_26 = arith.constant -1.000000e+04 : f32
    %115 = vector.broadcast %cst_26 : f32 to vector<8x8xf32>
    %116 = arith.mulf %114, %115 : vector<8x8xf32>
    %117 = vector.extract_strided_slice %12 {offsets = [1, 0, 0], sizes = [1, 8, 96], strides = [1, 1, 1]} : vector<2x8x96xf32> to vector<1x8x96xf32>
    %118 = vector.shape_cast %117 : vector<1x8x96xf32> to vector<8x96xf32>
    %119 = tpu.transpose %118, [1, 0] : vector<8x96xf32> -> vector<96x8xf32>
    %120 = vector.extract_strided_slice %119 {offsets = [0, 0], sizes = [8, 8], strides = [1, 1]} : vector<96x8xf32> to vector<8x8xf32>
    %121 = tpu.transpose %120, [1, 0] : vector<8x8xf32> -> vector<8x8xf32>
    %122 = vector.extract_strided_slice %119 {offsets = [32, 0], sizes = [8, 8], strides = [1, 1]} : vector<96x8xf32> to vector<8x8xf32>
    %123 = vector.extract_strided_slice %119 {offsets = [64, 0], sizes = [8, 8], strides = [1, 1]} : vector<96x8xf32> to vector<8x8xf32>
    %124 = vector.extract_strided_slice %119 {offsets = [8, 0], sizes = [8, 8], strides = [1, 1]} : vector<96x8xf32> to vector<8x8xf32>
    %125 = tpu.transpose %124, [1, 0] : vector<8x8xf32> -> vector<8x8xf32>
    %126 = vector.extract_strided_slice %119 {offsets = [40, 0], sizes = [8, 8], strides = [1, 1]} : vector<96x8xf32> to vector<8x8xf32>
    %127 = vector.extract_strided_slice %119 {offsets = [72, 0], sizes = [8, 8], strides = [1, 1]} : vector<96x8xf32> to vector<8x8xf32>
    %128 = vector.extract_strided_slice %119 {offsets = [16, 0], sizes = [8, 8], strides = [1, 1]} : vector<96x8xf32> to vector<8x8xf32>
    %129 = tpu.transpose %128, [1, 0] : vector<8x8xf32> -> vector<8x8xf32>
    %130 = vector.extract_strided_slice %119 {offsets = [48, 0], sizes = [8, 8], strides = [1, 1]} : vector<96x8xf32> to vector<8x8xf32>
    %131 = vector.extract_strided_slice %119 {offsets = [80, 0], sizes = [8, 8], strides = [1, 1]} : vector<96x8xf32> to vector<8x8xf32>
    %132 = vector.extract_strided_slice %119 {offsets = [24, 0], sizes = [8, 8], strides = [1, 1]} : vector<96x8xf32> to vector<8x8xf32>
    %133 = tpu.transpose %132, [1, 0] : vector<8x8xf32> -> vector<8x8xf32>
    %134 = vector.extract_strided_slice %119 {offsets = [56, 0], sizes = [8, 8], strides = [1, 1]} : vector<96x8xf32> to vector<8x8xf32>
    %135 = vector.extract_strided_slice %119 {offsets = [88, 0], sizes = [8, 8], strides = [1, 1]} : vector<96x8xf32> to vector<8x8xf32>
    %136 = vector.shape_cast %121 : vector<8x8xf32> to vector<1x8x8xf32>
    %137 = vector.shape_cast %125 : vector<8x8xf32> to vector<1x8x8xf32>
    %138 = vector.shape_cast %129 : vector<8x8xf32> to vector<1x8x8xf32>
    %139 = vector.shape_cast %133 : vector<8x8xf32> to vector<1x8x8xf32>
    %140 = tpu.concatenate %136, %137, %138, %139 in 0 : vector<1x8x8xf32>, vector<1x8x8xf32>, vector<1x8x8xf32>, vector<1x8x8xf32> -> vector<4x8x8xf32>
    %141 = arith.truncf %140 : vector<4x8x8xf32> to vector<4x8x8xbf16>
    %142 = vector.shape_cast %122 : vector<8x8xf32> to vector<1x8x8xf32>
    %143 = vector.shape_cast %126 : vector<8x8xf32> to vector<1x8x8xf32>
    %144 = vector.shape_cast %130 : vector<8x8xf32> to vector<1x8x8xf32>
    %145 = vector.shape_cast %134 : vector<8x8xf32> to vector<1x8x8xf32>
    %146 = tpu.concatenate %142, %143, %144, %145 in 0 : vector<1x8x8xf32>, vector<1x8x8xf32>, vector<1x8x8xf32>, vector<1x8x8xf32> -> vector<4x8x8xf32>
    %147 = arith.truncf %146 : vector<4x8x8xf32> to vector<4x8x8xbf16>
    %148 = vector.shape_cast %123 : vector<8x8xf32> to vector<1x8x8xf32>
    %149 = vector.shape_cast %127 : vector<8x8xf32> to vector<1x8x8xf32>
    %150 = vector.shape_cast %131 : vector<8x8xf32> to vector<1x8x8xf32>
    %151 = vector.shape_cast %135 : vector<8x8xf32> to vector<1x8x8xf32>
    %152 = tpu.concatenate %148, %149, %150, %151 in 0 : vector<1x8x8xf32>, vector<1x8x8xf32>, vector<1x8x8xf32>, vector<1x8x8xf32> -> vector<4x8x8xf32>
    %153 = arith.truncf %152 : vector<4x8x8xf32> to vector<4x8x8xbf16>
    %cst_27 = arith.constant dense<0.000000e+00> : vector<4x8x8xf32>
    %154 = tpu.matmul %141, %147, %cst_27 {dimension_numbers = #tpu.dot_dimension_numbers<[2], [1], [1], [2], [0, 0, 0, 1, 1, 2], [0], [0]>} : vector<4x8x8xbf16>, vector<4x8x8xbf16>, vector<4x8x8xf32> -> vector<4x8x8xf32>
    %cst_28 = arith.constant 0.353553385 : f32
    %155 = vector.broadcast %cst_28 : f32 to vector<4x8x8xf32>
    %156 = arith.mulf %154, %155 : vector<4x8x8xf32>
    %157 = vector.shape_cast %116 : vector<8x8xf32> to vector<1x8x8xf32>
    %158 = vector.broadcast %157 : vector<1x8x8xf32> to vector<4x8x8xf32>
    %159 = arith.addf %156, %158 : vector<4x8x8xf32>
    %cst_29 = arith.constant dense<0xFF800000> : vector<4x8xf32>
    %160 = vector.multi_reduction <maximumf>, %159, %cst_29 [2] : vector<4x8x8xf32> to vector<4x8xf32>
    %161 = vector.shape_cast %160 : vector<4x8xf32> to vector<4x8x1xf32>
    %162 = vector.broadcast %161 : vector<4x8x1xf32> to vector<4x8x8xf32>
    %163 = arith.subf %159, %162 : vector<4x8x8xf32>
    %164 = math.exp %163 : vector<4x8x8xf32>
    %cst_30 = arith.constant dense<0.000000e+00> : vector<4x8xf32>
    %165 = vector.multi_reduction <add>, %164, %cst_30 [2] : vector<4x8x8xf32> to vector<4x8xf32>
    %166 = vector.shape_cast %165 : vector<4x8xf32> to vector<4x8x1xf32>
    %167 = vector.broadcast %166 : vector<4x8x1xf32> to vector<4x8x8xf32>
    %168 = arith.divf %164, %167 : vector<4x8x8xf32>
    %169 = arith.truncf %168 : vector<4x8x8xf32> to vector<4x8x8xbf16>
    %cst_31 = arith.constant dense<0.000000e+00> : vector<4x8x8xf32>
    %170 = tpu.matmul %153, %169, %cst_31 {dimension_numbers = #tpu.dot_dimension_numbers<[2], [2], [1], [1], [0, 0, 0, 1, 1, 1], [0], [0]>} : vector<4x8x8xbf16>, vector<4x8x8xbf16>, vector<4x8x8xf32> -> vector<4x8x8xf32>
    %171 = vector.extract_strided_slice %170 {offsets = [0, 0, 0], sizes = [1, 8, 8], strides = [1, 1, 1]} : vector<4x8x8xf32> to vector<1x8x8xf32>
    %172 = vector.shape_cast %171 : vector<1x8x8xf32> to vector<8x8xf32>
    %173 = vector.extract_strided_slice %170 {offsets = [1, 0, 0], sizes = [1, 8, 8], strides = [1, 1, 1]} : vector<4x8x8xf32> to vector<1x8x8xf32>
    %174 = vector.shape_cast %173 : vector<1x8x8xf32> to vector<8x8xf32>
    %175 = vector.extract_strided_slice %170 {offsets = [2, 0, 0], sizes = [1, 8, 8], strides = [1, 1, 1]} : vector<4x8x8xf32> to vector<1x8x8xf32>
    %176 = vector.shape_cast %175 : vector<1x8x8xf32> to vector<8x8xf32>
    %177 = vector.extract_strided_slice %170 {offsets = [3, 0, 0], sizes = [1, 8, 8], strides = [1, 1, 1]} : vector<4x8x8xf32> to vector<1x8x8xf32>
    %178 = vector.shape_cast %177 : vector<1x8x8xf32> to vector<8x8xf32>
    %179 = tpu.concatenate %172, %174, %176, %178 in 0 : vector<8x8xf32>, vector<8x8xf32>, vector<8x8xf32>, vector<8x8xf32> -> vector<32x8xf32>
    %180 = tpu.transpose %179, [1, 0] : vector<32x8xf32> -> vector<8x32xf32>
    %181 = arith.truncf %180 : vector<8x32xf32> to vector<8x32xbf16>
    %cst_32 = arith.constant dense<0.000000e+00> : vector<8x32xf32>
    %182 = tpu.matmul %181, %20, %cst_32 {dimension_numbers = #tpu.dot_dimension_numbers<[1], [0], [0], [1], [0, 0, 1, 1], [], []>} : vector<8x32xbf16>, vector<32x32xbf16>, vector<8x32xf32> -> vector<8x32xf32>
    %183 = tpu.concatenate %101, %182 in 0 : vector<8x32xf32>, vector<8x32xf32> -> vector<16x32xf32>
    %c0_33 = arith.constant 0 : index
    %c0_34 = arith.constant 0 : index
    %c0_35 = arith.constant 0 : index
    %184 = vector.load %arg8[%c0_33, %c0_34, %c0_35] : memref<1x1x32xf32, #tpu.memory_space<vmem>>, vector<1x1x32xf32>
    %185 = vector.shape_cast %184 : vector<1x1x32xf32> to vector<1x32xf32>
    %186 = vector.broadcast %185 : vector<1x32xf32> to vector<16x32xf32>
    %187 = arith.addf %183, %186 : vector<16x32xf32>
    %188 = arith.addf %187, %3 : vector<16x32xf32>
    %c0_36 = arith.constant 0 : index
    %c0_37 = arith.constant 0 : index
    %c0_38 = arith.constant 0 : index
    %189 = vector.load %arg9[%c0_36, %c0_37, %c0_38] : memref<1x1x32xf32, #tpu.memory_space<vmem>>, vector<1x1x32xf32>
    %190 = vector.shape_cast %189 : vector<1x1x32xf32> to vector<1x32xf32>
    %c0_39 = arith.constant 0 : index
    %c0_40 = arith.constant 0 : index
    %c0_41 = arith.constant 0 : index
    %191 = vector.load %arg10[%c0_39, %c0_40, %c0_41] : memref<1x1x32xf32, #tpu.memory_space<vmem>>, vector<1x1x32xf32>
    %192 = vector.shape_cast %191 : vector<1x1x32xf32> to vector<1x32xf32>
    %cst_42 = arith.constant dense<0.000000e+00> : vector<16xf32>
    %193 = vector.multi_reduction <add>, %188, %cst_42 [1] : vector<16x32xf32> to vector<16xf32>
    %194 = vector.shape_cast %193 : vector<16xf32> to vector<16x1xf32>
    %cst_43 = arith.constant 3.200000e+01 : f32
    %195 = vector.broadcast %cst_43 : f32 to vector<16x1xf32>
    %196 = arith.divf %194, %195 : vector<16x1xf32>
    %197 = vector.broadcast %196 : vector<16x1xf32> to vector<16x32xf32>
    %198 = arith.subf %188, %197 : vector<16x32xf32>
    %199 = arith.mulf %198, %198 : vector<16x32xf32>
    %cst_44 = arith.constant dense<0.000000e+00> : vector<16xf32>
    %200 = vector.multi_reduction <add>, %199, %cst_44 [1] : vector<16x32xf32> to vector<16xf32>
    %201 = vector.shape_cast %200 : vector<16xf32> to vector<16x1xf32>
    %cst_45 = arith.constant 3.200000e+01 : f32
    %202 = vector.broadcast %cst_45 : f32 to vector<16x1xf32>
    %203 = arith.divf %201, %202 : vector<16x1xf32>
    %204 = vector.broadcast %196 : vector<16x1xf32> to vector<16x32xf32>
    %205 = arith.subf %188, %204 : vector<16x32xf32>
    %cst_46 = arith.constant 9.99999996E-13 : f32
    %206 = vector.broadcast %cst_46 : f32 to vector<16x1xf32>
    %207 = arith.addf %203, %206 : vector<16x1xf32>
    %208 = math.rsqrt %207 : vector<16x1xf32>
    %209 = vector.broadcast %208 : vector<16x1xf32> to vector<16x32xf32>
    %210 = arith.mulf %205, %209 : vector<16x32xf32>
    %211 = vector.broadcast %190 : vector<1x32xf32> to vector<16x32xf32>
    %212 = arith.mulf %210, %211 : vector<16x32xf32>
    %213 = vector.broadcast %192 : vector<1x32xf32> to vector<16x32xf32>
    %214 = arith.addf %212, %213 : vector<16x32xf32>
    %215 = arith.truncf %214 : vector<16x32xf32> to vector<16x32xbf16>
    %c0_47 = arith.constant 0 : index
    %c0_48 = arith.constant 0 : index
    %c0_49 = arith.constant 0 : index
    %216 = vector.load %arg11[%c0_47, %c0_48, %c0_49] : memref<1x32x64xbf16, #tpu.memory_space<vmem>>, vector<1x32x64xbf16>
    %217 = vector.shape_cast %216 : vector<1x32x64xbf16> to vector<32x64xbf16>
    %cst_50 = arith.constant dense<0.000000e+00> : vector<16x64xf32>
    %218 = tpu.matmul %215, %217, %cst_50 {dimension_numbers = #tpu.dot_dimension_numbers<[1], [0], [0], [1], [0, 0, 1, 1], [], []>} : vector<16x32xbf16>, vector<32x64xbf16>, vector<16x64xf32> -> vector<16x64xf32>
    %c0_51 = arith.constant 0 : index
    %c0_52 = arith.constant 0 : index
    %c0_53 = arith.constant 0 : index
    %219 = vector.load %arg12[%c0_51, %c0_52, %c0_53] : memref<1x1x64xf32, #tpu.memory_space<vmem>>, vector<1x1x64xf32>
    %220 = vector.shape_cast %219 : vector<1x1x64xf32> to vector<1x64xf32>
    %221 = vector.broadcast %220 : vector<1x64xf32> to vector<16x64xf32>
    %222 = arith.addf %218, %221 : vector<16x64xf32>
    %cst_54 = arith.constant 5.000000e-01 : f32
    %223 = vector.broadcast %cst_54 : f32 to vector<16x64xf32>
    %224 = arith.mulf %223, %222 : vector<16x64xf32>
    %cst_55 = arith.constant 0.707106769 : f32
    %225 = vector.broadcast %cst_55 : f32 to vector<16x64xf32>
    %226 = arith.mulf %222, %225 : vector<16x64xf32>
    %227 = math.erf %226 : vector<16x64xf32>
    %cst_56 = arith.constant 1.000000e+00 : f32
    %228 = vector.broadcast %cst_56 : f32 to vector<16x64xf32>
    %229 = arith.addf %228, %227 : vector<16x64xf32>
    %230 = arith.mulf %224, %229 : vector<16x64xf32>
    %231 = arith.truncf %230 : vector<16x64xf32> to vector<16x64xbf16>
    %c0_57 = arith.constant 0 : index
    %c0_58 = arith.constant 0 : index
    %c0_59 = arith.constant 0 : index
    %232 = vector.load %arg13[%c0_57, %c0_58, %c0_59] : memref<1x64x32xbf16, #tpu.memory_space<vmem>>, vector<1x64x32xbf16>
    %233 = vector.shape_cast %232 : vector<1x64x32xbf16> to vector<64x32xbf16>
    %cst_60 = arith.constant dense<0.000000e+00> : vector<16x32xf32>
    %234 = tpu.matmul %231, %233, %cst_60 {dimension_numbers = #tpu.dot_dimension_numbers<[1], [0], [0], [1], [0, 0, 1, 1], [], []>} : vector<16x64xbf16>, vector<64x32xbf16>, vector<16x32xf32> -> vector<16x32xf32>
    %c0_61 = arith.constant 0 : index
    %c0_62 = arith.constant 0 : index
    %c0_63 = arith.constant 0 : index
    %235 = vector.load %arg14[%c0_61, %c0_62, %c0_63] : memref<1x1x32xf32, #tpu.memory_space<vmem>>, vector<1x1x32xf32>
    %236 = vector.shape_cast %235 : vector<1x1x32xf32> to vector<1x32xf32>
    %237 = vector.broadcast %236 : vector<1x32xf32> to vector<16x32xf32>
    %238 = arith.addf %234, %237 : vector<16x32xf32>
    %239 = arith.addf %238, %214 : vector<16x32xf32>
    %c0_64 = arith.constant 0 : index
    %c0_65 = arith.constant 0 : index
    %c0_66 = arith.constant 0 : index
    %240 = vector.load %arg15[%c0_64, %c0_65, %c0_66] : memref<1x1x32xf32, #tpu.memory_space<vmem>>, vector<1x1x32xf32>
    %241 = vector.shape_cast %240 : vector<1x1x32xf32> to vector<1x32xf32>
    %c0_67 = arith.constant 0 : index
    %c0_68 = arith.constant 0 : index
    %c0_69 = arith.constant 0 : index
    %242 = vector.load %arg16[%c0_67, %c0_68, %c0_69] : memref<1x1x32xf32, #tpu.memory_space<vmem>>, vector<1x1x32xf32>
    %243 = vector.shape_cast %242 : vector<1x1x32xf32> to vector<1x32xf32>
    %cst_70 = arith.constant dense<0.000000e+00> : vector<16xf32>
    %244 = vector.multi_reduction <add>, %239, %cst_70 [1] : vector<16x32xf32> to vector<16xf32>
    %245 = vector.shape_cast %244 : vector<16xf32> to vector<16x1xf32>
    %cst_71 = arith.constant 3.200000e+01 : f32
    %246 = vector.broadcast %cst_71 : f32 to vector<16x1xf32>
    %247 = arith.divf %245, %246 : vector<16x1xf32>
    %248 = vector.broadcast %247 : vector<16x1xf32> to vector<16x32xf32>
    %249 = arith.subf %239, %248 : vector<16x32xf32>
    %250 = arith.mulf %249, %249 : vector<16x32xf32>
    %cst_72 = arith.constant dense<0.000000e+00> : vector<16xf32>
    %251 = vector.multi_reduction <add>, %250, %cst_72 [1] : vector<16x32xf32> to vector<16xf32>
    %252 = vector.shape_cast %251 : vector<16xf32> to vector<16x1xf32>
    %cst_73 = arith.constant 3.200000e+01 : f32
    %253 = vector.broadcast %cst_73 : f32 to vector<16x1xf32>
    %254 = arith.divf %252, %253 : vector<16x1xf32>
    %255 = vector.broadcast %247 : vector<16x1xf32> to vector<16x32xf32>
    %256 = arith.subf %239, %255 : vector<16x32xf32>
    %cst_74 = arith.constant 9.99999996E-13 : f32
    %257 = vector.broadcast %cst_74 : f32 to vector<16x1xf32>
    %258 = arith.addf %254, %257 : vector<16x1xf32>
    %259 = math.rsqrt %258 : vector<16x1xf32>
    %260 = vector.broadcast %259 : vector<16x1xf32> to vector<16x32xf32>
    %261 = arith.mulf %256, %260 : vector<16x32xf32>
    %262 = vector.broadcast %241 : vector<1x32xf32> to vector<16x32xf32>
    %263 = arith.mulf %261, %262 : vector<16x32xf32>
    %264 = vector.broadcast %243 : vector<1x32xf32> to vector<16x32xf32>
    %265 = arith.addf %263, %264 : vector<16x32xf32>
    %c0_75 = arith.constant 0 : index
    %c0_76 = arith.constant 0 : index
    %266 = vector.load %arg18[%c0_75, %c0_76] : memref<16x32xf32, #tpu.memory_space<vmem>>, vector<16x32xf32>
    tpu.vector_store %arg18[%c0_75, %c0_76], %265 {strides = array<i32>} : memref<16x32xf32, #tpu.memory_space<vmem>>, vector<16x32xf32>,
    %c1_i32 = arith.constant 1 : i32
    %267 = arith.cmpi eq, %arg0, %c1_i32 : i32
    %268 = arith.extui %267 : i1 to i32
    %c0_i32_77 = arith.constant 0 : i32
    %269 = arith.cmpi ne, %268, %c0_i32_77 : i32
    scf.if %269 {
      %270 = arith.truncf %265 : vector<16x32xf32> to vector<16x32xbf16>
      %c0_78 = arith.constant 0 : index
      %c0_79 = arith.constant 0 : index
      %271 = vector.load %arg17[%c0_78, %c0_79] : memref<16x32xbf16, #tpu.memory_space<vmem>>, vector<16x32xbf16>
      tpu.vector_store %arg17[%c0_78, %c0_79], %270 {strides = array<i32>} : memref<16x32xbf16, #tpu.memory_space<vmem>>, vector<16x32xbf16>,
    } else {
    }
    return
  }
  func.func @transform_0(%arg0: i32) -> (i32, i32) {
    %c0_i32 = arith.constant 0 : i32
    %c0_i32_0 = arith.constant 0 : i32
    %c0_i32_1 = arith.constant 0 : i32
    return %c0_i32, %c0_i32_0 : i32, i32
  }
  func.func @transform_1(%arg0: i32) -> (i32, i32) {
    %c0_i32 = arith.constant 0 : i32
    %c0_i32_0 = arith.constant 0 : i32
    %c0_i32_1 = arith.constant 0 : i32
    return %c0_i32, %c0_i32_0 : i32, i32
  }
  func.func @transform_2(%arg0: i32) -> (i32, i32) {
    %c0_i32 = arith.constant 0 : i32
    %c0_i32_0 = arith.constant 0 : i32
    %c0_i32_1 = arith.constant 0 : i32
    return %c0_i32, %c0_i32_0 : i32, i32
  }
  func.func @transform_3(%arg0: i32) -> (i32, i32) {
    %c0_i32 = arith.constant 0 : i32
    %c0_i32_0 = arith.constant 0 : i32
    %c0_i32_1 = arith.constant 0 : i32
    return %c0_i32, %c0_i32_0 : i32, i32
  }
  func.func @transform_4(%arg0: i32) -> (i32, i32, i32) {
    %c0_i32 = arith.constant 0 : i32
    %c0_i32_0 = arith.constant 0 : i32
    %c0_i32_1 = arith.constant 0 : i32
    return %arg0, %c0_i32, %c0_i32_0 : i32, i32, i32
  }
  func.func @transform_5(%arg0: i32) -> (i32, i32, i32) {
    %c0_i32 = arith.constant 0 : i32
    %c0_i32_0 = arith.constant 0 : i32
    %c0_i32_1 = arith.constant 0 : i32
    return %arg0, %c0_i32, %c0_i32_0 : i32, i32, i32
  }
  func.func @transform_6(%arg0: i32) -> (i32, i32, i32) {
    %c0_i32 = arith.constant 0 : i32
    %c0_i32_0 = arith.constant 0 : i32
    %c0_i32_1 = arith.constant 0 : i32
    return %arg0, %c0_i32, %c0_i32_0 : i32, i32, i32
  }
  func.func @transform_7(%arg0: i32) -> (i32, i32, i32) {
    %c0_i32 = arith.constant 0 : i32
    %c0_i32_0 = arith.constant 0 : i32
    %c0_i32_1 = arith.constant 0 : i32
    return %arg0, %c0_i32, %c0_i32_0 : i32, i32, i32
  }
  func.func @transform_8(%arg0: i32) -> (i32, i32, i32) {
    %c0_i32 = arith.constant 0 : i32
    %c0_i32_0 = arith.constant 0 : i32
    %c0_i32_1 = arith.constant 0 : i32
    return %arg0, %c0_i32, %c0_i32_0 : i32, i32, i32
  }
  func.func @transform_9(%arg0: i32) -> (i32, i32, i32) {
    %c0_i32 = arith.constant 0 : i32
    %c0_i32_0 = arith.constant 0 : i32
    %c0_i32_1 = arith.constant 0 : i32
    return %arg0, %c0_i32, %c0_i32_0 : i32, i32, i32
  }
  func.func @transform_10(%arg0: i32) -> (i32, i32, i32) {
    %c0_i32 = arith.constant 0 : i32
    %c0_i32_0 = arith.constant 0 : i32
    %c0_i32_1 = arith.constant 0 : i32
    return %arg0, %c0_i32, %c0_i32_0 : i32, i32, i32
  }
  func.func @transform_11(%arg0: i32) -> (i32, i32, i32) {
    %c0_i32 = arith.constant 0 : i32
    %c0_i32_0 = arith.constant 0 : i32
    %c0_i32_1 = arith.constant 0 : i32
    return %arg0, %c0_i32, %c0_i32_0 : i32, i32, i32
  }
  func.func @transform_12(%arg0: i32) -> (i32, i32, i32) {
    %c0_i32 = arith.constant 0 : i32
    %c0_i32_0 = arith.constant 0 : i32
    %c0_i32_1 = arith.constant 0 : i32
    return %arg0, %c0_i32, %c0_i32_0 : i32, i32, i32
  }
  func.func @transform_13(%arg0: i32) -> (i32, i32, i32) {
    %c0_i32 = arith.constant 0 : i32
    %c0_i32_0 = arith.constant 0 : i32
    %c0_i32_1 = arith.constant 0 : i32
    return %arg0, %c0_i32, %c0_i32_0 : i32, i32, i32
  }
  func.func @transform_14(%arg0: i32) -> (i32, i32, i32) {
    %c0_i32 = arith.constant 0 : i32
    %c0_i32_0 = arith.constant 0 : i32
    %c0_i32_1 = arith.constant 0 : i32
    return %arg0, %c0_i32, %c0_i32_0 : i32, i32, i32
  }
  func.func @transform_15(%arg0: i32) -> (i32, i32, i32) {
    %c0_i32 = arith.constant 0 : i32
    %c0_i32_0 = arith.constant 0 : i32
    %c0_i32_1 = arith.constant 0 : i32
    return %arg0, %c0_i32, %c0_i32_0 : i32, i32, i32
  }
  func.func @transform_16(%arg0: i32) -> (i32, i32) {
    %c0_i32 = arith.constant 0 : i32
    %c0_i32_0 = arith.constant 0 : i32
    %c0_i32_1 = arith.constant 0 : i32
    return %c0_i32, %c0_i32_0 : i32, i32
  }
}

module attributes {stable_mosaic.version = 11 : i64} {
  func.func @_head_loss_kernel(%arg0: i32, %arg1: i32, %arg2: memref<16x32xbf16, #tpu.memory_space<vmem>>, %arg3: memref<32x32xbf16, #tpu.memory_space<vmem>>, %arg4: memref<1x32xf32, #tpu.memory_space<vmem>>, %arg5: memref<1x32xf32, #tpu.memory_space<vmem>>, %arg6: memref<1x32xf32, #tpu.memory_space<vmem>>, %arg7: memref<128x32xbf16, #tpu.memory_space<vmem>>, %arg8: memref<1x128xf32, #tpu.memory_space<vmem>>, %arg9: memref<16x1xi32, #tpu.memory_space<vmem>>, %arg10: memref<16x1xf32, #tpu.memory_space<vmem>>, %arg11: memref<16x128xf32, #tpu.memory_space<vmem>>, %arg12: memref<1x1xf32, #tpu.memory_space<vmem>>, %arg13: memref<16x32xbf16, #tpu.memory_space<vmem>>, %arg14: memref<16x1xf32, #tpu.memory_space<vmem>>, %arg15: memref<16x1xf32, #tpu.memory_space<vmem>>, %arg16: memref<16x1xf32, #tpu.memory_space<vmem>>, %arg17: memref<1x1xf32, #tpu.memory_space<vmem>>, %arg18: memref<1x1xf32, #tpu.memory_space<vmem>>) attributes {dimension_semantics = [#tpu.dimension_semantics<arbitrary>, #tpu.dimension_semantics<arbitrary>], iteration_bounds = array<i64: 1, 1>, scalar_prefetch = 0 : i64, scratch_operands = 6 : i64, tpu.core_type = #tpu.core_type<tc>, window_params = [{transform_indices = @transform_0, window_bounds = array<i64: 16, 32>}, {pipeline_mode = #tpu.pipeline_mode<synchronous>, transform_indices = @transform_1, window_bounds = array<i64: 32, 32>}, {pipeline_mode = #tpu.pipeline_mode<synchronous>, transform_indices = @transform_2, window_bounds = array<i64: 1, 32>}, {pipeline_mode = #tpu.pipeline_mode<synchronous>, transform_indices = @transform_3, window_bounds = array<i64: 1, 32>}, {pipeline_mode = #tpu.pipeline_mode<synchronous>, transform_indices = @transform_4, window_bounds = array<i64: 1, 32>}, {transform_indices = @transform_5, window_bounds = array<i64: 128, 32>}, {transform_indices = @transform_6, window_bounds = array<i64: 1, 128>}, {transform_indices = @transform_7, window_bounds = array<i64: 16, 1>}, {transform_indices = @transform_8, window_bounds = array<i64: 16, 1>}, {transform_indices = @transform_9, window_bounds = array<i64: 16, 128>}, {pipeline_mode = #tpu.pipeline_mode<synchronous>, transform_indices = @transform_10, window_bounds = array<i64: 1, 1>}]} {
    %c0_i32 = arith.constant 0 : i32
    %0 = arith.cmpi eq, %arg0, %c0_i32 : i32
    %c0_i32_0 = arith.constant 0 : i32
    %1 = arith.cmpi eq, %arg1, %c0_i32_0 : i32
    %2 = arith.andi %0, %1 : i1
    %3 = arith.extui %2 : i1 to i32
    %c0_i32_1 = arith.constant 0 : i32
    %4 = arith.cmpi ne, %3, %c0_i32_1 : i32
    scf.if %4 {
      %cst_34 = arith.constant 0.000000e+00 : f32
      %53 = vector.broadcast %cst_34 : f32 to vector<1x1xf32>
      %c0_35 = arith.constant 0 : index
      %c0_36 = arith.constant 0 : index
      %54 = vector.load %arg17[%c0_35, %c0_36] : memref<1x1xf32, #tpu.memory_space<vmem>>, vector<1x1xf32>
      tpu.vector_store %arg17[%c0_35, %c0_36], %53 {strides = array<i32>} : memref<1x1xf32, #tpu.memory_space<vmem>>, vector<1x1xf32>,
      %cst_37 = arith.constant 0.000000e+00 : f32
      %55 = vector.broadcast %cst_37 : f32 to vector<1x1xf32>
      %c0_38 = arith.constant 0 : index
      %c0_39 = arith.constant 0 : index
      %56 = vector.load %arg18[%c0_38, %c0_39] : memref<1x1xf32, #tpu.memory_space<vmem>>, vector<1x1xf32>
      tpu.vector_store %arg18[%c0_38, %c0_39], %55 {strides = array<i32>} : memref<1x1xf32, #tpu.memory_space<vmem>>, vector<1x1xf32>,
    } else {
    }
    %c0_i32_2 = arith.constant 0 : i32
    %5 = arith.cmpi eq, %arg1, %c0_i32_2 : i32
    %6 = arith.extui %5 : i1 to i32
    %c0_i32_3 = arith.constant 0 : i32
    %7 = arith.cmpi ne, %6, %c0_i32_3 : i32
    scf.if %7 {
      %c0_34 = arith.constant 0 : index
      %c0_35 = arith.constant 0 : index
      %53 = vector.load %arg2[%c0_34, %c0_35] : memref<16x32xbf16, #tpu.memory_space<vmem>>, vector<16x32xbf16>
      %c0_36 = arith.constant 0 : index
      %c0_37 = arith.constant 0 : index
      %54 = vector.load %arg3[%c0_36, %c0_37] : memref<32x32xbf16, #tpu.memory_space<vmem>>, vector<32x32xbf16>
      %cst_38 = arith.constant dense<0.000000e+00> : vector<16x32xf32>
      %55 = tpu.matmul %53, %54, %cst_38 {dimension_numbers = #tpu.dot_dimension_numbers<[1], [0], [0], [1], [0, 0, 1, 1], [], []>} : vector<16x32xbf16>, vector<32x32xbf16>, vector<16x32xf32> -> vector<16x32xf32>
      %c0_39 = arith.constant 0 : index
      %c0_40 = arith.constant 0 : index
      %56 = vector.load %arg4[%c0_39, %c0_40] : memref<1x32xf32, #tpu.memory_space<vmem>>, vector<1x32xf32>
      %57 = vector.broadcast %56 : vector<1x32xf32> to vector<16x32xf32>
      %58 = arith.addf %55, %57 : vector<16x32xf32>
      %cst_41 = arith.constant 5.000000e-01 : f32
      %59 = vector.broadcast %cst_41 : f32 to vector<16x32xf32>
      %60 = arith.mulf %59, %58 : vector<16x32xf32>
      %cst_42 = arith.constant 0.707106769 : f32
      %61 = vector.broadcast %cst_42 : f32 to vector<16x32xf32>
      %62 = arith.mulf %58, %61 : vector<16x32xf32>
      %63 = math.erf %62 : vector<16x32xf32>
      %cst_43 = arith.constant 1.000000e+00 : f32
      %64 = vector.broadcast %cst_43 : f32 to vector<16x32xf32>
      %65 = arith.addf %64, %63 : vector<16x32xf32>
      %66 = arith.mulf %60, %65 : vector<16x32xf32>
      %c0_44 = arith.constant 0 : index
      %c0_45 = arith.constant 0 : index
      %67 = vector.load %arg5[%c0_44, %c0_45] : memref<1x32xf32, #tpu.memory_space<vmem>>, vector<1x32xf32>
      %c0_46 = arith.constant 0 : index
      %c0_47 = arith.constant 0 : index
      %68 = vector.load %arg6[%c0_46, %c0_47] : memref<1x32xf32, #tpu.memory_space<vmem>>, vector<1x32xf32>
      %cst_48 = arith.constant dense<0.000000e+00> : vector<16xf32>
      %69 = vector.multi_reduction <add>, %66, %cst_48 [1] : vector<16x32xf32> to vector<16xf32>
      %70 = vector.shape_cast %69 : vector<16xf32> to vector<16x1xf32>
      %cst_49 = arith.constant 3.200000e+01 : f32
      %71 = vector.broadcast %cst_49 : f32 to vector<16x1xf32>
      %72 = arith.divf %70, %71 : vector<16x1xf32>
      %73 = vector.broadcast %72 : vector<16x1xf32> to vector<16x32xf32>
      %74 = arith.subf %66, %73 : vector<16x32xf32>
      %75 = arith.mulf %74, %74 : vector<16x32xf32>
      %cst_50 = arith.constant dense<0.000000e+00> : vector<16xf32>
      %76 = vector.multi_reduction <add>, %75, %cst_50 [1] : vector<16x32xf32> to vector<16xf32>
      %77 = vector.shape_cast %76 : vector<16xf32> to vector<16x1xf32>
      %cst_51 = arith.constant 3.200000e+01 : f32
      %78 = vector.broadcast %cst_51 : f32 to vector<16x1xf32>
      %79 = arith.divf %77, %78 : vector<16x1xf32>
      %80 = vector.broadcast %72 : vector<16x1xf32> to vector<16x32xf32>
      %81 = arith.subf %66, %80 : vector<16x32xf32>
      %cst_52 = arith.constant 9.99999996E-13 : f32
      %82 = vector.broadcast %cst_52 : f32 to vector<16x1xf32>
      %83 = arith.addf %79, %82 : vector<16x1xf32>
      %84 = math.rsqrt %83 : vector<16x1xf32>
      %85 = vector.broadcast %84 : vector<16x1xf32> to vector<16x32xf32>
      %86 = arith.mulf %81, %85 : vector<16x32xf32>
      %87 = vector.broadcast %67 : vector<1x32xf32> to vector<16x32xf32>
      %88 = arith.mulf %86, %87 : vector<16x32xf32>
      %89 = vector.broadcast %68 : vector<1x32xf32> to vector<16x32xf32>
      %90 = arith.addf %88, %89 : vector<16x32xf32>
      %91 = arith.truncf %90 : vector<16x32xf32> to vector<16x32xbf16>
      %c0_53 = arith.constant 0 : index
      %c0_54 = arith.constant 0 : index
      %92 = vector.load %arg13[%c0_53, %c0_54] : memref<16x32xbf16, #tpu.memory_space<vmem>>, vector<16x32xbf16>
      tpu.vector_store %arg13[%c0_53, %c0_54], %91 {strides = array<i32>} : memref<16x32xbf16, #tpu.memory_space<vmem>>, vector<16x32xbf16>,
      %cst_55 = arith.constant -1.000000e+30 : f32
      %93 = vector.broadcast %cst_55 : f32 to vector<16x1xf32>
      %c0_56 = arith.constant 0 : index
      %c0_57 = arith.constant 0 : index
      %94 = vector.load %arg14[%c0_56, %c0_57] : memref<16x1xf32, #tpu.memory_space<vmem>>, vector<16x1xf32>
      tpu.vector_store %arg14[%c0_56, %c0_57], %93 {strides = array<i32>} : memref<16x1xf32, #tpu.memory_space<vmem>>, vector<16x1xf32>,
      %cst_58 = arith.constant 0.000000e+00 : f32
      %95 = vector.broadcast %cst_58 : f32 to vector<16x1xf32>
      %c0_59 = arith.constant 0 : index
      %c0_60 = arith.constant 0 : index
      %96 = vector.load %arg15[%c0_59, %c0_60] : memref<16x1xf32, #tpu.memory_space<vmem>>, vector<16x1xf32>
      tpu.vector_store %arg15[%c0_59, %c0_60], %95 {strides = array<i32>} : memref<16x1xf32, #tpu.memory_space<vmem>>, vector<16x1xf32>,
      %cst_61 = arith.constant 0.000000e+00 : f32
      %97 = vector.broadcast %cst_61 : f32 to vector<16x1xf32>
      %c0_62 = arith.constant 0 : index
      %c0_63 = arith.constant 0 : index
      %98 = vector.load %arg16[%c0_62, %c0_63] : memref<16x1xf32, #tpu.memory_space<vmem>>, vector<16x1xf32>
      tpu.vector_store %arg16[%c0_62, %c0_63], %97 {strides = array<i32>} : memref<16x1xf32, #tpu.memory_space<vmem>>, vector<16x1xf32>,
    } else {
    }
    %c0 = arith.constant 0 : index
    %c0_4 = arith.constant 0 : index
    %8 = vector.load %arg13[%c0, %c0_4] : memref<16x32xbf16, #tpu.memory_space<vmem>>, vector<16x32xbf16>
    %c0_5 = arith.constant 0 : index
    %c0_6 = arith.constant 0 : index
    %9 = vector.load %arg7[%c0_5, %c0_6] : memref<128x32xbf16, #tpu.memory_space<vmem>>, vector<128x32xbf16>
    %cst = arith.constant dense<0.000000e+00> : vector<16x128xf32>
    %10 = tpu.matmul %8, %9, %cst {dimension_numbers = #tpu.dot_dimension_numbers<[1], [1], [0], [0], [0, 0, 1, 0], [], []>} : vector<16x32xbf16>, vector<128x32xbf16>, vector<16x128xf32> -> vector<16x128xf32>
    %c0_7 = arith.constant 0 : index
    %c0_8 = arith.constant 0 : index
    %11 = vector.load %arg8[%c0_7, %c0_8] : memref<1x128xf32, #tpu.memory_space<vmem>>, vector<1x128xf32>
    %12 = vector.broadcast %11 : vector<1x128xf32> to vector<16x128xf32>
    %13 = arith.addf %10, %12 : vector<16x128xf32>
    %c0_9 = arith.constant 0 : index
    %c0_10 = arith.constant 0 : index
    %14 = vector.load %arg11[%c0_9, %c0_10] : memref<16x128xf32, #tpu.memory_space<vmem>>, vector<16x128xf32>
    tpu.vector_store %arg11[%c0_9, %c0_10], %13 {strides = array<i32>} : memref<16x128xf32, #tpu.memory_space<vmem>>, vector<16x128xf32>,
    %c0_11 = arith.constant 0 : index
    %c0_12 = arith.constant 0 : index
    %15 = vector.load %arg9[%c0_11, %c0_12] : memref<16x1xi32, #tpu.memory_space<vmem>>, vector<16x1xi32>
    %c0_13 = arith.constant 0 : index
    %c0_14 = arith.constant 0 : index
    %16 = vector.load %arg14[%c0_13, %c0_14] : memref<16x1xf32, #tpu.memory_space<vmem>>, vector<16x1xf32>
    %cst_15 = arith.constant dense<0xFF800000> : vector<16xf32>
    %17 = vector.multi_reduction <maximumf>, %13, %cst_15 [1] : vector<16x128xf32> to vector<16xf32>
    %18 = vector.shape_cast %17 : vector<16xf32> to vector<16x1xf32>
    %19 = arith.maximumf %16, %18 : vector<16x1xf32>
    %c0_16 = arith.constant 0 : index
    %c0_17 = arith.constant 0 : index
    %20 = vector.load %arg15[%c0_16, %c0_17] : memref<16x1xf32, #tpu.memory_space<vmem>>, vector<16x1xf32>
    %21 = arith.subf %16, %19 : vector<16x1xf32>
    %22 = math.exp %21 : vector<16x1xf32>
    %23 = arith.mulf %20, %22 : vector<16x1xf32>
    %24 = vector.broadcast %19 : vector<16x1xf32> to vector<16x128xf32>
    %25 = arith.subf %13, %24 : vector<16x128xf32>
    %26 = math.exp %25 : vector<16x128xf32>
    %cst_18 = arith.constant dense<0.000000e+00> : vector<16xf32>
    %27 = vector.multi_reduction <add>, %26, %cst_18 [1] : vector<16x128xf32> to vector<16xf32>
    %28 = vector.shape_cast %27 : vector<16xf32> to vector<16x1xf32>
    %29 = arith.addf %23, %28 : vector<16x1xf32>
    %c0_19 = arith.constant 0 : index
    %c0_20 = arith.constant 0 : index
    %30 = vector.load %arg15[%c0_19, %c0_20] : memref<16x1xf32, #tpu.memory_space<vmem>>, vector<16x1xf32>
    tpu.vector_store %arg15[%c0_19, %c0_20], %29 {strides = array<i32>} : memref<16x1xf32, #tpu.memory_space<vmem>>, vector<16x1xf32>,
    %c0_21 = arith.constant 0 : index
    %c0_22 = arith.constant 0 : index
    %31 = vector.load %arg14[%c0_21, %c0_22] : memref<16x1xf32, #tpu.memory_space<vmem>>, vector<16x1xf32>
    tpu.vector_store %arg14[%c0_21, %c0_22], %19 {strides = array<i32>} : memref<16x1xf32, #tpu.memory_space<vmem>>, vector<16x1xf32>,
    %32 = tpu.iota {dimensions = array<i32: 1>} : vector<16x128xi32>
    %c128_i32 = arith.constant 128 : i32
    %33 = arith.muli %arg1, %c128_i32 : i32
    %34 = vector.broadcast %33 : i32 to vector<16x128xi32>
    %35 = arith.addi %32, %34 : vector<16x128xi32>
    %c0_23 = arith.constant 0 : index
    %c0_24 = arith.constant 0 : index
    %36 = vector.load %arg16[%c0_23, %c0_24] : memref<16x1xf32, #tpu.memory_space<vmem>>, vector<16x1xf32>
    %37 = vector.broadcast %15 : vector<16x1xi32> to vector<16x128xi32>
    %38 = arith.cmpi eq, %35, %37 : vector<16x128xi32>
    %cst_25 = arith.constant 0.000000e+00 : f32
    %39 = vector.broadcast %cst_25 : f32 to vector<16x128xf32>
    %40 = arith.select %38, %13, %39 : vector<16x128xi1>, vector<16x128xf32>
    %cst_26 = arith.constant dense<0.000000e+00> : vector<16xf32>
    %41 = vector.multi_reduction <add>, %40, %cst_26 [1] : vector<16x128xf32> to vector<16xf32>
    %42 = vector.shape_cast %41 : vector<16xf32> to vector<16x1xf32>
    %43 = arith.addf %36, %42 : vector<16x1xf32>
    %c0_27 = arith.constant 0 : index
    %c0_28 = arith.constant 0 : index
    %44 = vector.load %arg16[%c0_27, %c0_28] : memref<16x1xf32, #tpu.memory_space<vmem>>, vector<16x1xf32>
    tpu.vector_store %arg16[%c0_27, %c0_28], %43 {strides = array<i32>} : memref<16x1xf32, #tpu.memory_space<vmem>>, vector<16x1xf32>,
    %c0_i32_29 = arith.constant 0 : i32
    %45 = arith.cmpi eq, %arg1, %c0_i32_29 : i32
    %46 = arith.extui %45 : i1 to i32
    %c0_i32_30 = arith.constant 0 : i32
    %47 = arith.cmpi ne, %46, %c0_i32_30 : i32
    scf.if %47 {
      %c0_34 = arith.constant 0 : index
      %c0_35 = arith.constant 0 : index
      %53 = vector.load %arg14[%c0_34, %c0_35] : memref<16x1xf32, #tpu.memory_space<vmem>>, vector<16x1xf32>
      %c0_36 = arith.constant 0 : index
      %c0_37 = arith.constant 0 : index
      %54 = vector.load %arg15[%c0_36, %c0_37] : memref<16x1xf32, #tpu.memory_space<vmem>>, vector<16x1xf32>
      %55 = math.log %54 : vector<16x1xf32>
      %56 = arith.addf %53, %55 : vector<16x1xf32>
      %c0_38 = arith.constant 0 : index
      %c0_39 = arith.constant 0 : index
      %57 = vector.load %arg16[%c0_38, %c0_39] : memref<16x1xf32, #tpu.memory_space<vmem>>, vector<16x1xf32>
      %58 = arith.subf %56, %57 : vector<16x1xf32>
      %c0_i32_40 = arith.constant 0 : i32
      %59 = vector.broadcast %c0_i32_40 : i32 to vector<16x1xi32>
      %60 = arith.cmpi eq, %15, %59 : vector<16x1xi32>
      %cst_41 = arith.constant 0.000000e+00 : f32
      %61 = vector.broadcast %cst_41 : f32 to vector<16x1xf32>
      %62 = arith.select %60, %61, %58 : vector<16x1xi1>, vector<16x1xf32>
      %c0_42 = arith.constant 0 : index
      %c0_43 = arith.constant 0 : index
      %63 = vector.load %arg10[%c0_42, %c0_43] : memref<16x1xf32, #tpu.memory_space<vmem>>, vector<16x1xf32>
      %c0_44 = arith.constant 0 : index
      %c0_45 = arith.constant 0 : index
      %64 = vector.load %arg17[%c0_44, %c0_45] : memref<1x1xf32, #tpu.memory_space<vmem>>, vector<1x1xf32>
      %65 = arith.mulf %62, %63 : vector<16x1xf32>
      %66 = vector.shape_cast %65 : vector<16x1xf32> to vector<1x16x1xf32>
      %cst_46 = arith.constant dense<0.000000e+00> : vector<1xf32>
      %67 = vector.multi_reduction <add>, %66, %cst_46 [1, 2] : vector<1x16x1xf32> to vector<1xf32>
      %68 = vector.shape_cast %67 : vector<1xf32> to vector<1x1x1xf32>
      %69 = vector.extract %68[0, 0, 0] : f32 from vector<1x1x1xf32>
      %70 = vector.broadcast %69 : f32 to vector<1x1xf32>
      %71 = arith.addf %64, %70 : vector<1x1xf32>
      %c0_47 = arith.constant 0 : index
      %c0_48 = arith.constant 0 : index
      %72 = vector.load %arg17[%c0_47, %c0_48] : memref<1x1xf32, #tpu.memory_space<vmem>>, vector<1x1xf32>
      tpu.vector_store %arg17[%c0_47, %c0_48], %71 {strides = array<i32>} : memref<1x1xf32, #tpu.memory_space<vmem>>, vector<1x1xf32>,
      %c0_49 = arith.constant 0 : index
      %c0_50 = arith.constant 0 : index
      %73 = vector.load %arg18[%c0_49, %c0_50] : memref<1x1xf32, #tpu.memory_space<vmem>>, vector<1x1xf32>
      %74 = vector.shape_cast %63 : vector<16x1xf32> to vector<1x16x1xf32>
      %cst_51 = arith.constant dense<0.000000e+00> : vector<1xf32>
      %75 = vector.multi_reduction <add>, %74, %cst_51 [1, 2] : vector<1x16x1xf32> to vector<1xf32>
      %76 = vector.shape_cast %75 : vector<1xf32> to vector<1x1x1xf32>
      %77 = vector.extract %76[0, 0, 0] : f32 from vector<1x1x1xf32>
      %78 = vector.broadcast %77 : f32 to vector<1x1xf32>
      %79 = arith.addf %73, %78 : vector<1x1xf32>
      %c0_52 = arith.constant 0 : index
      %c0_53 = arith.constant 0 : index
      %80 = vector.load %arg18[%c0_52, %c0_53] : memref<1x1xf32, #tpu.memory_space<vmem>>, vector<1x1xf32>
      tpu.vector_store %arg18[%c0_52, %c0_53], %79 {strides = array<i32>} : memref<1x1xf32, #tpu.memory_space<vmem>>, vector<1x1xf32>,
    } else {
    }
    %c0_i32_31 = arith.constant 0 : i32
    %48 = arith.cmpi eq, %arg0, %c0_i32_31 : i32
    %c0_i32_32 = arith.constant 0 : i32
    %49 = arith.cmpi eq, %arg1, %c0_i32_32 : i32
    %50 = arith.andi %48, %49 : i1
    %51 = arith.extui %50 : i1 to i32
    %c0_i32_33 = arith.constant 0 : i32
    %52 = arith.cmpi ne, %51, %c0_i32_33 : i32
    scf.if %52 {
      %c0_34 = arith.constant 0 : index
      %c0_35 = arith.constant 0 : index
      %53 = vector.load %arg17[%c0_34, %c0_35] : memref<1x1xf32, #tpu.memory_space<vmem>>, vector<1x1xf32>
      %c0_36 = arith.constant 0 : index
      %c0_37 = arith.constant 0 : index
      %54 = vector.load %arg18[%c0_36, %c0_37] : memref<1x1xf32, #tpu.memory_space<vmem>>, vector<1x1xf32>
      %55 = arith.divf %53, %54 : vector<1x1xf32>
      %c0_38 = arith.constant 0 : index
      %c0_39 = arith.constant 0 : index
      %56 = vector.load %arg12[%c0_38, %c0_39] : memref<1x1xf32, #tpu.memory_space<vmem>>, vector<1x1xf32>
      tpu.vector_store %arg12[%c0_38, %c0_39], %55 {strides = array<i32>} : memref<1x1xf32, #tpu.memory_space<vmem>>, vector<1x1xf32>,
    } else {
    }
    return
  }
  func.func @transform_0(%arg0: i32, %arg1: i32) -> (i32, i32) {
    %c0_i32 = arith.constant 0 : i32
    %c0_i32_0 = arith.constant 0 : i32
    return %arg0, %c0_i32 : i32, i32
  }
  func.func @transform_1(%arg0: i32, %arg1: i32) -> (i32, i32) {
    %c0_i32 = arith.constant 0 : i32
    %c0_i32_0 = arith.constant 0 : i32
    %c0_i32_1 = arith.constant 0 : i32
    return %c0_i32, %c0_i32_0 : i32, i32
  }
  func.func @transform_2(%arg0: i32, %arg1: i32) -> (i32, i32) {
    %c0_i32 = arith.constant 0 : i32
    %c0_i32_0 = arith.constant 0 : i32
    %c0_i32_1 = arith.constant 0 : i32
    return %c0_i32, %c0_i32_0 : i32, i32
  }
  func.func @transform_3(%arg0: i32, %arg1: i32) -> (i32, i32) {
    %c0_i32 = arith.constant 0 : i32
    %c0_i32_0 = arith.constant 0 : i32
    %c0_i32_1 = arith.constant 0 : i32
    return %c0_i32, %c0_i32_0 : i32, i32
  }
  func.func @transform_4(%arg0: i32, %arg1: i32) -> (i32, i32) {
    %c0_i32 = arith.constant 0 : i32
    %c0_i32_0 = arith.constant 0 : i32
    %c0_i32_1 = arith.constant 0 : i32
    return %c0_i32, %c0_i32_0 : i32, i32
  }
  func.func @transform_5(%arg0: i32, %arg1: i32) -> (i32, i32) {
    %c0_i32 = arith.constant 0 : i32
    %c0_i32_0 = arith.constant 0 : i32
    return %arg1, %c0_i32 : i32, i32
  }
  func.func @transform_6(%arg0: i32, %arg1: i32) -> (i32, i32) {
    %c0_i32 = arith.constant 0 : i32
    %c0_i32_0 = arith.constant 0 : i32
    return %c0_i32, %arg1 : i32, i32
  }
  func.func @transform_7(%arg0: i32, %arg1: i32) -> (i32, i32) {
    %c0_i32 = arith.constant 0 : i32
    %c0_i32_0 = arith.constant 0 : i32
    return %arg0, %c0_i32 : i32, i32
  }
  func.func @transform_8(%arg0: i32, %arg1: i32) -> (i32, i32) {
    %c0_i32 = arith.constant 0 : i32
    %c0_i32_0 = arith.constant 0 : i32
    return %arg0, %c0_i32 : i32, i32
  }
  func.func @transform_9(%arg0: i32, %arg1: i32) -> (i32, i32) {
    %c0_i32 = arith.constant 0 : i32
    return %arg0, %arg1 : i32, i32
  }
  func.func @transform_10(%arg0: i32, %arg1: i32) -> (i32, i32) {
    %c0_i32 = arith.constant 0 : i32
    %c0_i32_0 = arith.constant 0 : i32
    %c0_i32_1 = arith.constant 0 : i32
    return %c0_i32, %c0_i32_0 : i32, i32
  }
}

</mosaic_0001>

<llo_original>
// kernel: seq2seq_forward.3
$region0: #{seq2seq_forward.3}
  #allocation0 [shape = 'u32[]', space=smem, size = 0x4, offset = 0x4, fixed_abs, tag = 'smem constant byte address 0x4 - core index']
  #allocation1 [shape = 'u32[72,128]{1,0:T(1,128)}', space=vmem, size = 0x9000, scoped, tag = 'internal scratch']
  #allocation2 [shape = 'bf16[16,32]{1,0:T(8,128)(2,1)}', space=vmem, size = 0x1000, scoped, tag = 'scratch operand']
  #allocation3 [shape = 'f32[16,1]{1,0:T(8,128)}', space=vmem, size = 0x2000, scoped, tag = 'scratch operand']
  #allocation4 [shape = 'f32[16,1]{1,0:T(8,128)}', space=vmem, size = 0x2000, scoped, tag = 'scratch operand']
  #allocation5 [shape = 'f32[16,1]{1,0:T(8,128)}', space=vmem, size = 0x2000, scoped, tag = 'scratch operand']
  #allocation6 [shape = 'f32[1,1]{1,0:T(1,128)}', space=vmem, size = 0x200, scoped, tag = 'scratch operand']
  #allocation7 [shape = 'f32[1,1]{1,0:T(1,128)}', space=vmem, size = 0x200, scoped, tag = 'scratch operand']
  %s0 = inlined_call_operand.vmem [shape: bf16[16,32], index: 0, kind: input, shape index: {}]
  %s1 = inlined_call_operand.vmem [shape: bf16[32,32], index: 1, kind: input, shape index: {}]
  %s2 = inlined_call_operand.vmem [shape: f32[1,32], index: 2, kind: input, shape index: {}]
  %s3 = inlined_call_operand.vmem [shape: f32[1,32], index: 3, kind: input, shape index: {}]
  %s4 = inlined_call_operand.vmem [shape: f32[1,32], index: 4, kind: input, shape index: {}]
  %s5 = inlined_call_operand.vmem [shape: bf16[128,32], index: 5, kind: input, shape index: {}]
  %s6 = inlined_call_operand.vmem [shape: f32[1,128], index: 6, kind: input, shape index: {}]
  %s7 = inlined_call_operand.vmem [shape: s32[16,1], index: 7, kind: input, shape index: {}]
  %s8 = inlined_call_operand.vmem [shape: f32[16,1], index: 8, kind: input, shape index: {}]
  %s9 = inlined_call_operand.vmem [shape: f32[16,128], index: 9, kind: output, shape index: {0}]
  %s10 = inlined_call_operand.hbm [shape: f32[1,1], index: 10, kind: output, shape index: {1}]
  %11 = xla_tuple %s9, %s10
  %s12 = sld [smem:[#allocation0]]
  $region70: #{seq2seq_forward.3} parent=0
    _
  %s14 = ssub.s32 1, %s12
  %s15 = scalar_select 0, %s14, %s12
  $region1: #{seq2seq_forward.3} parent=0
    #allocation8 [shape = 'u8[512]{0}', space=vmem, size = 0x400, scoped, tag = 'output window, operand 1, single buffered']
    #allocation9 [shape = 's32[1]{0}', space=sflag, size = 0x4, scoped, tag = 'scoped memory for seq2seq_forward.3']
    %16 = vsyncpa [#allocation9], 0
    // Predicated region
    $region2: #{seq2seq_forward.3} parent=1 // pred_check
      _
    $region3: #{seq2seq_forward.3} parent=1 // pred_check_branch
      %18 = sbr.rel (0) target = $region5
    $region4: #{seq2seq_forward.3} parent=1 // pred_region
      _
    $region5: #{seq2seq_forward.3} parent=1 // pred_fallthru
      _
    // Predicated region
    $region6: #{seq2seq_forward.3} parent=1 // pred_check
      _
    $region7: #{seq2seq_forward.3} parent=1 // pred_check_branch
      %20 = sbr.rel (0) target = $region9
    $region8: #{seq2seq_forward.3} parent=1 // pred_region
      _
    $region9: #{seq2seq_forward.3} parent=1 // pred_fallthru
      _
    // Predicated region
    $region10: #{seq2seq_forward.3} parent=1 // pred_check
      _
    $region11: #{seq2seq_forward.3} parent=1 // pred_check_branch
      %22 = sbr.rel (0) target = $region13
    $region12: #{seq2seq_forward.3} parent=1 // pred_region
      _
    $region13: #{seq2seq_forward.3} parent=1 // pred_fallthru
      _
    // Predicated region
    $region14: #{seq2seq_forward.3} parent=1 // pred_check
      _
    $region15: #{seq2seq_forward.3} parent=1 // pred_check_branch
      %24 = sbr.rel (0) target = $region17
    $region16: #{seq2seq_forward.3} parent=1 // pred_region
      _
    $region17: #{seq2seq_forward.3} parent=1 // pred_fallthru
      _
    // Predicated region
    $region18: #{seq2seq_forward.3} parent=1 // pred_check
      _
    $region19: #{seq2seq_forward.3} parent=1 // pred_check_branch
      %26 = sbr.rel (0) target = $region21
    $region20: #{seq2seq_forward.3} parent=1 // pred_region
      _
    $region21: #{seq2seq_forward.3} parent=1 // pred_fallthru
      _
    // Predicated region
    $region22: #{seq2seq_forward.3} parent=1 // pred_check
      _
    $region23: #{seq2seq_forward.3} parent=1 // pred_check_branch
      %28 = sbr.rel (0) target = $region25
    $region24: #{seq2seq_forward.3} parent=1 // pred_region
      _
    $region25: #{seq2seq_forward.3} parent=1 // pred_fallthru
      _
    // Predicated region
    $region26: #{seq2seq_forward.3} parent=1 // pred_check
      _
    $region27: #{seq2seq_forward.3} parent=1 // pred_check_branch
      %30 = sbr.rel (0) target = $region29
    $region28: #{seq2seq_forward.3} parent=1 // pred_region
      _
    $region29: #{seq2seq_forward.3} parent=1 // pred_fallthru
      _
    // Predicated region
    $region30: #{seq2seq_forward.3} parent=1 // pred_check
      _
    $region31: #{seq2seq_forward.3} parent=1 // pred_check_branch
      %32 = sbr.rel (0) target = $region33
    $region32: #{seq2seq_forward.3} parent=1 // pred_region
      _
    $region33: #{seq2seq_forward.3} parent=1 // pred_fallthru
      _
    // Predicated region
    $region34: #{seq2seq_forward.3} parent=1 // pred_check
      _
    $region35: #{seq2seq_forward.3} parent=1 // pred_check_branch
      %34 = sbr.rel (0) target = $region37
    $region36: #{seq2seq_forward.3} parent=1 // pred_region
      _
    $region37: #{seq2seq_forward.3} parent=1 // pred_fallthru
      _
    %p36 = scmp.eq.s32.totalorder 0, 0
    %p37 = scmp.eq.s32.totalorder 0, 0
    %p38 = pnand %p36, %p37
    %p39 = pneg %p38
    // Predicated region
    $region38: #{seq2seq_forward.3} parent=1 // pred_check
      _
    $region39: #{seq2seq_forward.3} parent=1 // pred_check_branch
      %41 = sbr.rel (%p38) target = $region41
    $region40: #{seq2seq_forward.3} parent=1 // pred_region
      %vm42 = vcmask 0
      %43 = vst.msk [vmem:[#allocation6] sm:$0x1] %vm42, 0.0
      %44 = vst.msk [vmem:[#allocation7] sm:$0x1] %vm42, 0.0
    $region41: #{seq2seq_forward.3} parent=1 // pred_fallthru
      _
    // Predicated region
    $region42: #{seq2seq_forward.3} parent=1 // pred_check
      %p45 = pneg %p37
    $region43: #{seq2seq_forward.3} parent=1 // pred_check_branch
      %47 = sbr.rel (%p45) target = $region45
    $region44: #{seq2seq_forward.3} parent=1 // pred_region
      %v48 = vld [vmem:[%s0] sm:$0xf]
      %v49 = vld [vmem:[%s0 + $0x4] sm:$0xf]
      %v50 = vld [vmem:[%s1] sm:$0xf]
      %v51 = vld [vmem:[%s1 + $0x4] sm:$0xf]
      %v52 = vld [vmem:[%s1 + $0x8] sm:$0xf]
      %v53 = vld [vmem:[%s1 + $0xc] sm:$0xf]
      %v54 = vld [vmem:[%s2] sm:$0x1]
      %v56 = vperm.slane %v54, 0
      %v60 = vunpack.c.l.b16 %v48
      %v61 = vunpack.c.l.b16 %v49
      %v62 = vpack.c.b16 %v61, %v60
      %v67 = vunpack.c.l.b16 %v50
      %v68 = vunpack.c.l.b16 %v51
      %v69 = vunpack.c.l.b16 %v52
      %v70 = vunpack.c.l.b16 %v53
      %v71 = vpack.c.b16 %v68, %v67
      %v72 = vpack.c.b16 %v70, %v69
      %vm75 = vcmask 261120
      %v77 = vsel %vm75, %v62, 0
      %79 = vmatpush.bf16.msra.mxu0 0
      %80 = vmatpush.bf16.msra.mxu0 0
      %81 = vmatpush.bf16.msra.mxu0 0
      %82 = vmatpush.bf16.msra.mxu0 0
      %83 = vmatpush.bf16.msra.mxu0 0
      %84 = vmatpush.bf16.msra.mxu0 0
      %85 = vmatpush.bf16.msra.mxu0 %v72
      %86 = vmatpush.bf16.msra.mxu0 %v71
      %87 = vmatmul.bf16.gmra.mxu0 %v77
      %v88 = vpop.f32.mrf.mxu0
      %v89 = vadd.f32 %v56, %v88
      %v90 = vpop.f32.mrf.mxu0
      %v91 = vadd.f32 %v56, %v90
      %92 = vdwg.mxu0
      %v93 = vmul.f32 %v89, 0.5
      %v94 = vmul.f32 %v91, 0.5
      %v95 = vmul.f32 %v89, 0.70710677
      %v96 = vmul.f32 %v91, 0.70710677
      %v97 = vmul.f32 %v95, %v95
      %v98 = vmin.f32 16.0, %v97
      %v99 = vmul.f32 %v98, 2.1237322e-06
      %v100 = vadd.f32 %v99, 0.00028619796
      %v101 = vmul.f32 %v98, %v100
      %v102 = vadd.f32 %v101, 0.0036580483
      %v103 = vmul.f32 %v98, %v102
      %v104 = vadd.f32 %v103, 0.05243302
      %v105 = vmul.f32 %v98, %v104
      %v106 = vadd.f32 %v105, 0.18741608
      %v107 = vmul.f32 %v98, %v106
      %v108 = vadd.f32 %v107, 1.1283791
      %v109 = vmul.f32 %v95, %v108
      %v110 = vmul.f32 %v98, 3.8918573e-05
      %v111 = vadd.f32 %v110, 0.001143296
      %v112 = vmul.f32 %v98, %v111
      %v113 = vadd.f32 %v112, 0.014752088
      %v114 = vmul.f32 %v98, %v113
      %v115 = vadd.f32 %v114, 0.112945676
      %v116 = vmul.f32 %v98, %v115
      %v117 = vadd.f32 %v116, 0.4994258
      %v118 = vmul.f32 %v98, %v117
      %v119 = vadd.f32 %v118, 1.0
      %v120 = vrcp.pop %v119
      %v121 = vmul.f32 %v119, %v120
      %v122 = vsub.f32 1.0, %v121
      %v123 = vmul.f32 %v120, %v122
      %v124 = vadd.f32 %v120, %v123
      %vm125 = vweird.f32 %v119
      %vm126 = vweird.f32 %v120
      %vm127 = vmor %vm125, %vm126
      %v128 = vsel %vm127, %v120, %v124
      %v129 = vand.u32 2147483647, %v119
      %vm130 = vcmp.eq.f32.partialorder %v129, 8.507059e+37
      %v131 = vand.u32 %v119, 2147483648
      %v132 = vor.u32 1.1754944e-38, %v131
      %v133 = vsel %vm130, %v132, %v128
      %v134 = vmul.f32 %v109, %v133
      %v135 = vmin.f32 %v134, 1.0
      %v136 = vmax.f32 %v135, -1.0
      %v137 = vmul.f32 %v96, %v96
      %v138 = vmin.f32 16.0, %v137
      %v139 = vmul.f32 %v138, 2.1237322e-06
      %v140 = vadd.f32 %v139, 0.00028619796
      %v141 = vmul.f32 %v138, %v140
      %v142 = vadd.f32 %v141, 0.0036580483
      %v143 = vmul.f32 %v138, %v142
      %v144 = vadd.f32 %v143, 0.05243302
      %v145 = vmul.f32 %v138, %v144
      %v146 = vadd.f32 %v145, 0.18741608
      %v147 = vmul.f32 %v138, %v146
      %v148 = vadd.f32 %v147, 1.1283791
      %v149 = vmul.f32 %v96, %v148
      %v150 = vmul.f32 %v138, 3.8918573e-05
      %v151 = vadd.f32 %v150, 0.001143296
      %v152 = vmul.f32 %v138, %v151
      %v153 = vadd.f32 %v152, 0.014752088
      %v154 = vmul.f32 %v138, %v153
      %v155 = vadd.f32 %v154, 0.112945676
      %v156 = vmul.f32 %v138, %v155
      %v157 = vadd.f32 %v156, 0.4994258
      %v158 = vmul.f32 %v138, %v157
      %v159 = vadd.f32 %v158, 1.0
      %v160 = vrcp.pop %v159
      %v161 = vmul.f32 %v159, %v160
      %v162 = vsub.f32 1.0, %v161
      %v163 = vmul.f32 %v160, %v162
      %v164 = vadd.f32 %v160, %v163
      %vm165 = vweird.f32 %v159
      %vm166 = vweird.f32 %v160
      %vm167 = vmor %vm165, %vm166
      %v168 = vsel %vm167, %v160, %v164
      %v169 = vand.u32 2147483647, %v159
      %vm170 = vcmp.eq.f32.partialorder %v169, 8.507059e+37
      %v171 = vand.u32 %v159, 2147483648
      %v172 = vor.u32 1.1754944e-38, %v171
      %v173 = vsel %vm170, %v172, %v168
      %v174 = vmul.f32 %v149, %v173
      %v175 = vmin.f32 %v174, 1.0
      %v176 = vmax.f32 %v175, -1.0
      %v177 = vadd.f32 %v136, 1.0
      %v178 = vadd.f32 %v176, 1.0
      %v179 = vmul.f32 %v93, %v177
      %v180 = vmul.f32 %v94, %v178
      %v181 = vld [vmem:[%s3] sm:$0x1]
      %v182 = vld [vmem:[%s4] sm:$0x1]
      %v183 = vsel %vm75, %v179, 0.0
      %184 = vadd.xlane.f32.xlu0 %v183
      %v185 = vpop.xlane.xlu0 %184
      %v186 = vsel %vm75, %v180, 0.0
      %187 = vadd.xlane.f32.xlu0 %v186
      %v188 = vpop.xlane.xlu0 %187
      %v189 = vrcp.pop 32.0
      %v190 = vmul.f32 32.0, %v189
      %v191 = vsub.f32 1.0, %v190
      %v192 = vmul.f32 %v189, %v191
      %v193 = vadd.f32 %v189, %v192
      %vm194 = vweird.f32 %v189
      %v195 = vsel %vm194, %v189, %v193
      %v196 = vmul.f32 %v185, %v195
      %v197 = vmul.f32 %v188, %v195
      %v198 = vsub.f32 %v179, %v196
      %v199 = vsub.f32 %v180, %v197
      %v200 = vmul.f32 %v198, %v198
      %v201 = vmul.f32 %v199, %v199
      %v202 = vsel %vm75, %v200, 0.0
      %203 = vadd.xlane.f32.xlu0 %v202
      %v204 = vpop.xlane.xlu0 %203
      %v205 = vsel %vm75, %v201, 0.0
      %206 = vadd.xlane.f32.xlu0 %v205
      %v207 = vpop.xlane.xlu0 %206
      %v208 = vmul.f32 %v204, %v195
      %v209 = vmul.f32 %v207, %v195
      %v210 = vadd.f32 %v208, 1e-12
      %v211 = vadd.f32 %v209, 1e-12
      %v212 = vrsqrt.pop %v210
      %v213 = vmul.f32 %v212, %v210
      %v214 = vmul.f32 %v213, %v212
      %v215 = vmul.f32 0.5, %v214
      %v216 = vsub.f32 1.5, %v215
      %v217 = vmul.f32 %v212, %v216
      %vm218 = vweird.f32 %v210
      %vm219 = vweird.f32 %v212
      %vm220 = vmor %vm218, %vm219
      %v221 = vsel %vm220, %v212, %v217
      %v222 = vrsqrt.pop %v211
      %v223 = vmul.f32 %v222, %v211
      %v224 = vmul.f32 %v223, %v222
      %v225 = vmul.f32 0.5, %v224
      %v226 = vsub.f32 1.5, %v225
      %v227 = vmul.f32 %v222, %v226
      %vm228 = vweird.f32 %v211
      %vm229 = vweird.f32 %v222
      %vm230 = vmor %vm228, %vm229
      %v231 = vsel %vm230, %v222, %v227
      %v232 = vmul.f32 %v198, %v221
      %v233 = vmul.f32 %v199, %v231
      %v235 = vperm.slane %v181, 0
      %v237 = vmul.f32 %v232, %v235
      %v238 = vmul.f32 %v233, %v235
      %v240 = vperm.slane %v182, 0
      %v242 = vadd.f32 %v237, %v240
      %v243 = vadd.f32 %v238, %v240
      %v244 = vpack.c.bf16 %v242, %v242
      %v245 = vpack.c.bf16 %v243, %v243
      %vm246 = vcmask 257024
      %247 = vst.msk [vmem:[#allocation2] sm:$0xf] %vm246, %v244
      %248 = vst.msk [vmem:[#allocation2 + $0x4] sm:$0xf] %vm246, %v245
      %vm249 = vcmask 7168
      %250 = vst.msk [vmem:[#allocation3] sm:$0xff] %vm249, -1e+30
      %251 = vst.msk [vmem:[#allocation3 + $0x8] sm:$0xff] %vm249, -1e+30
      %252 = vst.msk [vmem:[#allocation4] sm:$0xff] %vm249, 0.0
      %253 = vst.msk [vmem:[#allocation4 + $0x8] sm:$0xff] %vm249, 0.0
      %254 = vst.msk [vmem:[#allocation5] sm:$0xff] %vm249, 0.0
      %255 = vst.msk [vmem:[#allocation5 + $0x8] sm:$0xff] %vm249, 0.0
    $region45: #{seq2seq_forward.3} parent=1 // pred_fallthru
      _
    %v256 = vld [vmem:[#allocation2] sm:$0xf]
    %v257 = vld [vmem:[#allocation2 + $0x4] sm:$0xf]
    %v258 = vld [vmem:[%s5] sm:$0xf]
    %v259 = vld [vmem:[%s5 + $0x4] sm:$0xf]
    %v260 = vld [vmem:[%s5 + $0x8] sm:$0xf]
    %v261 = vld [vmem:[%s5 + $0xc] sm:$0xf]
    %v262 = vld [vmem:[%s5 + $0x10] sm:$0xf]
    %v263 = vld [vmem:[%s5 + $0x14] sm:$0xf]
    %v264 = vld [vmem:[%s5 + $0x18] sm:$0xf]
    %v265 = vld [vmem:[%s5 + $0x1c] sm:$0xf]
    %v266 = vld [vmem:[%s5 + $0x20] sm:$0xf]
    %v267 = vld [vmem:[%s5 + $0x24] sm:$0xf]
    %v268 = vld [vmem:[%s5 + $0x28] sm:$0xf]
    %v269 = vld [vmem:[%s5 + $0x2c] sm:$0xf]
    %v270 = vld [vmem:[%s5 + $0x30] sm:$0xf]
    %v271 = vld [vmem:[%s5 + $0x34] sm:$0xf]
    %v272 = vld [vmem:[%s5 + $0x38] sm:$0xf]
    %v273 = vld [vmem:[%s5 + $0x3c] sm:$0xf]
    %v274 = vld [vmem:[%s6] sm:$0x1]
    %v276 = vperm.slane %v274, 0
    %v280 = vunpack.c.l.b16 %v256
    %v281 = vunpack.c.l.b16 %v257
    %v282 = vpack.c.b16 %v281, %v280
    %v299 = vunpack.c.l.b16 %v258
    %v300 = vunpack.c.l.b16 %v259
    %v301 = vunpack.c.l.b16 %v260
    %v302 = vunpack.c.l.b16 %v261
    %v303 = vunpack.c.l.b16 %v262
    %v304 = vunpack.c.l.b16 %v263
    %v305 = vunpack.c.l.b16 %v264
    %v306 = vunpack.c.l.b16 %v265
    %v307 = vunpack.c.l.b16 %v266
    %v308 = vunpack.c.l.b16 %v267
    %v309 = vunpack.c.l.b16 %v268
    %v310 = vunpack.c.l.b16 %v269
    %v311 = vunpack.c.l.b16 %v270
    %v312 = vunpack.c.l.b16 %v271
    %v313 = vunpack.c.l.b16 %v272
    %v314 = vunpack.c.l.b16 %v273
    %v315 = vpack.c.b16 %v300, %v299
    %v316 = vpack.c.b16 %v302, %v301
    %v317 = vpack.c.b16 %v304, %v303
    %v318 = vpack.c.b16 %v306, %v305
    %v319 = vpack.c.b16 %v308, %v307
    %v320 = vpack.c.b16 %v310, %v309
    %v321 = vpack.c.b16 %v312, %v311
    %v322 = vpack.c.b16 %v314, %v313
    %vm323 = vcmask 261120
    %v325 = vsel %vm323, %v282, 0
    %v328 = vsel %vm323, %v315, 0
    %v331 = vsel %vm323, %v316, 0
    %v334 = vsel %vm323, %v317, 0
    %v337 = vsel %vm323, %v318, 0
    %v340 = vsel %vm323, %v319, 0
    %v343 = vsel %vm323, %v320, 0
    %v346 = vsel %vm323, %v321, 0
    %v349 = vsel %vm323, %v322, 0
    %351 = vmatpush.bf16.xpose.msra.mxu0 %v349
    %352 = vmatpush.bf16.xpose.msra.mxu0 %v346
    %353 = vmatpush.bf16.xpose.msra.mxu0 %v343
    %354 = vmatpush.bf16.xpose.msra.mxu0 %v340
    %355 = vmatpush.bf16.xpose.msra.mxu0 %v337
    %356 = vmatpush.bf16.xpose.msra.mxu0 %v334
    %357 = vmatpush.bf16.xpose.msra.mxu0 %v331
    %358 = vmatpush.bf16.xpose.msra.mxu0 %v328
    %359 = vmatmul.bf16.gmra.mxu0 %v325
    %v360 = vpop.f32.mrf.mxu0
    %v361 = vadd.f32 %v276, %v360
    %v362 = vpop.f32.mrf.mxu0
    %v363 = vadd.f32 %v276, %v362
    %364 = vdwg.mxu0
    %365 = vst [vmem:[%s9] sm:$0xff] %v361
    %366 = vst [vmem:[%s9 + $0x8] sm:$0xff] %v363
    %v367 = vld [vmem:[%s7] sm:$0xff]
    %v368 = vld [vmem:[%s7 + $0x8] sm:$0xff]
    %v369 = vld [vmem:[#allocation3] sm:$0xff]
    %v370 = vld [vmem:[#allocation3 + $0x8] sm:$0xff]
    %371 = vmax.xlane.f32.xlu0 %v361
    %v372 = vpop.xlane.xlu0 %371
    %373 = vmax.xlane.f32.xlu0 %v363
    %v374 = vpop.xlane.xlu0 %373
    %v375 = vmax.f32 %v369, %v372
    %v376 = vmax.f32 %v370, %v374
    %v377 = vld [vmem:[#allocation4] sm:$0xff]
    %v378 = vld [vmem:[#allocation4 + $0x8] sm:$0xff]
    %v379 = vsub.f32 %v369, %v375
    %v380 = vsub.f32 %v370, %v376
    %v381 = vmul.f32 %v379, 1.442695
    %v382 = vpow.pop %v381
    %v383 = vmul.f32 %v380, 1.442695
    %v384 = vpow.pop %v383
    %v385 = vmul.f32 %v377, %v382
    %v386 = vmul.f32 %v378, %v384
    %388 = vset.pattern.permute.xlu0 0
    %389 = vperm.xlu0 %388, %v375
    %v390 = vpop.permute.xlu0 %389
    %393 = vset.pattern.permute.xlu0 0
    %394 = vperm.xlu0 %393, %v376
    %v395 = vpop.permute.xlu0 %394
    %v397 = vsub.f32 %v361, %v390
    %v398 = vsub.f32 %v363, %v395
    %v399 = vmul.f32 %v397, 1.442695
    %v400 = vpow.pop %v399
    %v401 = vmul.f32 %v398, 1.442695
    %v402 = vpow.pop %v401
    %403 = vadd.xlane.f32.xlu0 %v400
    %v404 = vpop.xlane.xlu0 %403
    %405 = vadd.xlane.f32.xlu0 %v402
    %v406 = vpop.xlane.xlu0 %405
    %v407 = vadd.f32 %v385, %v404
    %v408 = vadd.f32 %v386, %v406
    %vm409 = vcmask 7168
    %410 = vst.msk [vmem:[#allocation4] sm:$0xff] %vm409, %v407
    %411 = vst.msk [vmem:[#allocation4 + $0x8] sm:$0xff] %vm409, %v408
    %412 = vst.msk [vmem:[#allocation3] sm:$0xff] %vm409, %v375
    %413 = vst.msk [vmem:[#allocation3 + $0x8] sm:$0xff] %vm409, %v376
    %v414 = vlaneseq
    %v415 = vand.u32 %v414, 127
    %s416 = smul.u32 0, 128
    %v417 = vstv %s416
    %v418 = vadd.s32 %v415, %v417
    %v419 = vld [vmem:[#allocation5] sm:$0xff]
    %v420 = vld [vmem:[#allocation5 + $0x8] sm:$0xff]
    %421 = vset.pattern.permute.xlu0 0
    %422 = vperm.xlu0 %421, %v367
    %v423 = vpop.permute.xlu0 %422
    %424 = vset.pattern.permute.xlu0 0
    %425 = vperm.xlu0 %424, %v368
    %v426 = vpop.permute.xlu0 %425
    %vm427 = vcmp.eq.s32.totalorder %v418, %v423
    %vm428 = vcmp.eq.s32.totalorder %v418, %v426
    %v429 = vsel %vm427, %v361, 0.0
    %v430 = vsel %vm428, %v363, 0.0
    %431 = vadd.xlane.f32.xlu0 %v429
    %v432 = vpop.xlane.xlu0 %431
    %433 = vadd.xlane.f32.xlu0 %v430
    %v434 = vpop.xlane.xlu0 %433
    %v435 = vadd.f32 %v419, %v432
    %v436 = vadd.f32 %v420, %v434
    %437 = vst.msk [vmem:[#allocation5] sm:$0xff] %vm409, %v435
    %438 = vst.msk [vmem:[#allocation5 + $0x8] sm:$0xff] %vm409, %v436
    // Predicated region
    $region46: #{seq2seq_forward.3} parent=1 // pred_check
      %p439 = pneg %p37
    $region47: #{seq2seq_forward.3} parent=1 // pred_check_branch
      %441 = sbr.rel (%p439) target = $region49
    $region48: #{seq2seq_forward.3} parent=1 // pred_region
      %v442 = vld [vmem:[#allocation3] sm:$0xff]
      %v443 = vld [vmem:[#allocation3 + $0x8] sm:$0xff]
      %v444 = vld [vmem:[#allocation4] sm:$0xff]
      %v445 = vld [vmem:[#allocation4 + $0x8] sm:$0xff]
      %v446 = vlog2.pop %v444
      %v447 = vmul.f32 %v446, 0.6931472
      %v448 = vlog2.pop %v445
      %v449 = vmul.f32 %v448, 0.6931472
      %v450 = vadd.f32 %v442, %v447
      %v451 = vadd.f32 %v443, %v449
      %v452 = vld [vmem:[#allocation5] sm:$0xff]
      %v453 = vld [vmem:[#allocation5 + $0x8] sm:$0xff]
      %v454 = vsub.f32 %v450, %v452
      %v455 = vsub.f32 %v451, %v453
      %vm456 = vcmp.eq.s32.totalorder %v367, 0
      %vm457 = vcmp.eq.s32.totalorder %v368, 0
      %v458 = vsel %vm456, 0.0, %v454
      %v459 = vsel %vm457, 0.0, %v455
      %v460 = vld [vmem:[%s8] sm:$0xff]
      %v461 = vld [vmem:[%s8 + $0x8] sm:$0xff]
      %v462 = vld [vmem:[#allocation6] sm:$0x1]
      %v463 = vmul.f32 %v458, %v460
      %v464 = vmul.f32 %v459, %v461
      %v465 = vsel %vm409, %v463, 0.0
      %v466 = vsel %vm409, %v464, 0.0
      %v467 = vadd.f32 %v465, %v466
      %468 = vadd.xlane.f32.xlu0 %v467
      %v469 = vpop.xlane.xlu0 %468
      %v470 = vrot.slane %v469, 4
      %v471 = vadd.f32 %v469, %v470
      %v472 = vrot.slane %v471, 2
      %v473 = vadd.f32 %v471, %v472
      %v474 = vrot.slane %v473, 1
      %v475 = vadd.f32 %v473, %v474
      %s476 = vtos %v475
      %v477 = vstv %s476
      %v478 = vadd.f32 %v462, %v477
      %vm479 = vcmask 0
      %480 = vst.msk [vmem:[#allocation6] sm:$0x1] %vm479, %v478
      %v481 = vld [vmem:[#allocation7] sm:$0x1]
      %v482 = vsel %vm409, %v460, 0.0
      %v483 = vsel %vm409, %v461, 0.0
      %v484 = vadd.f32 %v482, %v483
      %485 = vadd.xlane.f32.xlu0 %v484
      %v486 = vpop.xlane.xlu0 %485
      %v487 = vrot.slane %v486, 4
      %v488 = vadd.f32 %v486, %v487
      %v489 = vrot.slane %v488, 2
      %v490 = vadd.f32 %v488, %v489
      %v491 = vrot.slane %v490, 1
      %v492 = vadd.f32 %v490, %v491
      %s493 = vtos %v492
      %v494 = vstv %s493
      %v495 = vadd.f32 %v481, %v494
      %496 = vst.msk [vmem:[#allocation7] sm:$0x1] %vm479, %v495
    $region49: #{seq2seq_forward.3} parent=1 // pred_fallthru
      _
    // Predicated region
    $region50: #{seq2seq_forward.3} parent=1 // pred_check
      _
    $region51: #{seq2seq_forward.3} parent=1 // pred_check_branch
      %498 = sbr.rel (%p38) target = $region53
    $region52: #{seq2seq_forward.3} parent=1 // pred_region
      %v499 = vld [vmem:[#allocation6] sm:$0x1]
      %v500 = vld [vmem:[#allocation7] sm:$0x1]
      %v501 = vrcp.pop %v500
      %v502 = vmul.f32 %v500, %v501
      %v503 = vsub.f32 1.0, %v502
      %v504 = vmul.f32 %v501, %v503
      %v505 = vadd.f32 %v501, %v504
      %vm506 = vweird.f32 %v500
      %vm507 = vweird.f32 %v501
      %vm508 = vmor %vm506, %vm507
      %v509 = vsel %vm508, %v501, %v505
      %v510 = vand.u32 2147483647, %v500
      %vm511 = vcmp.eq.f32.partialorder %v510, 8.507059e+37
      %v512 = vand.u32 %v500, 2147483648
      %v513 = vor.u32 1.1754944e-38, %v512
      %v514 = vsel %vm511, %v513, %v509
      %v515 = vmul.f32 %v499, %v514
      %vm516 = vcmask 0
      %517 = vst.msk [vmem:[#allocation8] sm:$0x1] %vm516, %v515
    $region53: #{seq2seq_forward.3} parent=1 // pred_fallthru
      _
    // Predicated region
    $region54: #{seq2seq_forward.3} parent=1 // pred_check
      _
    $region55: #{seq2seq_forward.3} parent=1 // pred_check_branch
      %519 = sbr.rel (0) target = $region57
    $region56: #{seq2seq_forward.3} parent=1 // pred_region
      _
    $region57: #{seq2seq_forward.3} parent=1 // pred_fallthru
      _
    // Predicated region
    $region58: #{seq2seq_forward.3} parent=1 // pred_check
      _
    $region59: #{seq2seq_forward.3} parent=1 // pred_check_branch
      %521 = sbr.rel (0) target = $region61
    $region60: #{seq2seq_forward.3} parent=1 // pred_region
      %523 = vsyncadd [#allocation9], 0
      %s525 = sshll.u32 [#allocation8], 4
      %s526 = int_to_ptr.vmem [resolvable:$true] %s525
      %s527 = sshll.u32 %s10, 4
      %s528 = int_to_ptr.hbm [resolvable:$true] %s527
      %530 = dma.vmem_to_hbm [thread:$0]  %s526, 16, %s528, [#allocation9]
    $region61: #{seq2seq_forward.3} parent=1 // pred_fallthru
      _
    // Predicated region
    $region62: #{seq2seq_forward.3} parent=1 // pred_check
      _
    $region63: #{seq2seq_forward.3} parent=1 // pred_check_branch
      %532 = sbr.rel (0) target = $region65
    $region64: #{seq2seq_forward.3} parent=1 // pred_region
      _
    $region65: #{seq2seq_forward.3} parent=1 // pred_fallthru
      _
    // Predicated region
    $region66: #{seq2seq_forward.3} parent=1 // pred_check
      _
    $region67: #{seq2seq_forward.3} parent=1 // pred_check_branch
      %534 = sbr.rel (0) target = $region69
    $region68: #{seq2seq_forward.3} parent=1 // pred_region
      %536 = dma.done [#allocation9], 16
    $region69: #{seq2seq_forward.3} parent=1 // pred_fallthru
      _
    %537 = vsyncpa [#allocation9], 1

// kernel: seq2seq_forward.2
$region0: #{seq2seq_forward.2}
  #allocation0 [shape = 'u32[]', space=smem, size = 0x4, offset = 0x4, fixed_abs, tag = 'smem constant byte address 0x4 - core index']
  #allocation1 [shape = 'u32[72,128]{1,0:T(1,128)}', space=vmem, size = 0x9000, scoped, tag = 'internal scratch']
  #allocation2 [shape = 'f32[16,32]{1,0:T(8,128)}', space=vmem, size = 0x2000, scoped, tag = 'scratch operand']
  %s0 = inlined_call_operand.vmem [shape: f32[16,32], index: 0, kind: input, shape index: {}]
  %s1 = inlined_call_operand.vmem [shape: f32[2,8], index: 1, kind: input, shape index: {}]
  %s2 = inlined_call_operand.vmem [shape: f32[1,32], index: 2, kind: input, shape index: {}]
  %s3 = inlined_call_operand.vmem [shape: f32[1,32], index: 3, kind: input, shape index: {}]
  %s4 = inlined_call_operand.vmem [shape: bf16[2,32,96], index: 4, kind: input, shape index: {}]
  %s5 = inlined_call_operand.vmem [shape: f32[2,1,96], index: 5, kind: input, shape index: {}]
  %s6 = inlined_call_operand.vmem [shape: bf16[2,32,32], index: 6, kind: input, shape index: {}]
  %s7 = inlined_call_operand.vmem [shape: f32[2,1,32], index: 7, kind: input, shape index: {}]
  %s8 = inlined_call_operand.vmem [shape: f32[2,1,32], index: 8, kind: input, shape index: {}]
  %s9 = inlined_call_operand.vmem [shape: f32[2,1,32], index: 9, kind: input, shape index: {}]
  %s10 = inlined_call_operand.vmem [shape: bf16[2,32,64], index: 10, kind: input, shape index: {}]
  %s11 = inlined_call_operand.vmem [shape: f32[2,1,64], index: 11, kind: input, shape index: {}]
  %s12 = inlined_call_operand.vmem [shape: bf16[2,64,32], index: 12, kind: input, shape index: {}]
  %s13 = inlined_call_operand.vmem [shape: f32[2,1,32], index: 13, kind: input, shape index: {}]
  %s14 = inlined_call_operand.vmem [shape: f32[2,1,32], index: 14, kind: input, shape index: {}]
  %s15 = inlined_call_operand.vmem [shape: f32[2,1,32], index: 15, kind: input, shape index: {}]
  %s16 = inlined_call_operand.vmem [shape: bf16[16,32], index: 16, kind: output, shape index: {}]
  %s17 = sld [smem:[#allocation0]]
  $region105: #{seq2seq_forward.2} parent=0
    _
  %s19 = ssub.s32 1, %s17
  %s20 = scalar_select 0, %s19, %s17
  loop: start=0, step=1, limit=4
  $region2: #{seq2seq_forward.2} parent=0 // loop_pre_header
    _
  $region3: #{seq2seq_forward.2} parent=0 // loop_header
    %s22 = sphi 0, %s26
    %p23 = scmp.ge.s32.totalorder %s22, 4
    %s30 = sphi 0, %s30
    %s32 = sphi 0, %s30
    %s33 = sphi 0, %s32
    %s47 = sphi 0, %s33
    %s51 = sphi 0, %s51
    %s53 = sphi 0, %s51
    %s54 = sphi 0, %s53
    %s68 = sphi 0, %s54
    %s72 = sphi 0, %s72
    %s74 = sphi 0, %s72
    %s75 = sphi 0, %s74
    %s89 = sphi 0, %s75
    %s93 = sphi 0, %s93
    %s95 = sphi 0, %s93
    %s96 = sphi 0, %s95
    %s110 = sphi 0, %s96
    %s116 = sphi 0, %s118
    %s119 = sphi 0, %s116
    %s120 = sphi 0, %s119
    %s136 = sphi 0, %s120
    %s142 = sphi 0, %s144
    %s145 = sphi 0, %s142
    %s146 = sphi 0, %s145
    %s162 = sphi 0, %s146
    %s168 = sphi 0, %s170
    %s171 = sphi 0, %s168
    %s172 = sphi 0, %s171
    %s188 = sphi 0, %s172
    %s194 = sphi 0, %s196
    %s197 = sphi 0, %s194
    %s198 = sphi 0, %s197
    %s214 = sphi 0, %s198
    %s220 = sphi 0, %s222
    %s223 = sphi 0, %s220
    %s224 = sphi 0, %s223
    %s240 = sphi 0, %s224
    %s246 = sphi 0, %s248
    %s249 = sphi 0, %s246
    %s250 = sphi 0, %s249
    %s266 = sphi 0, %s250
    %s272 = sphi 0, %s274
    %s275 = sphi 0, %s272
    %s276 = sphi 0, %s275
    %s292 = sphi 0, %s276
    %s298 = sphi 0, %s300
    %s301 = sphi 0, %s298
    %s302 = sphi 0, %s301
    %s318 = sphi 0, %s302
    %s324 = sphi 0, %s326
    %s327 = sphi 0, %s324
    %s328 = sphi 0, %s327
    %s344 = sphi 0, %s328
    %s350 = sphi 0, %s352
    %s353 = sphi 0, %s350
    %s354 = sphi 0, %s353
    %s370 = sphi 0, %s354
    %s376 = sphi 0, %s378
    %s379 = sphi 0, %s376
    %s380 = sphi 0, %s379
    %s396 = sphi 0, %s380
    %s402 = sphi 0, %s404
    %s405 = sphi 0, %s402
    %s406 = sphi 0, %s405
    %s422 = sphi 0, %s406
    %s426 = sphi 0, %s426
    %s428 = sphi 0, %s426
    %s429 = sphi 0, %s428
    %s443 = sphi 0, %s429
  $region4: #{seq2seq_forward.2} parent=0 // loop_header_branch
    %25 = sbr.rel (%p23) target = $region8
  $region5: #{seq2seq_forward.2} parent=0 // loop_body
    %s27 = ssub.s32 %s22, 1
    %s28 = ssub.s32 %s22, 2
    %s29 = sadd.s32 %s22, 1
    %s31 = sadd.s32 %s30, 1
    %p34 = scmp.eq.s32.totalorder %s22, 1
    %p35 = scmp.ne.s32.totalorder %s30, %s32
    %p36 = scmp.eq.s32.totalorder %s22, 0
    %p37 = por %p35, %p36
    %p38 = scmp.ne.s32.totalorder %s30, %s32
    %p39 = scmp.eq.s32.totalorder %s27, 1
    %p40 = por %p38, %p39
    %p41 = scmp.ne.s32.totalorder %s32, %s33
    %p42 = scmp.eq.s32.totalorder %s27, 0
    %p43 = por %p41, %p42
    %p44 = scmp.ne.s32.totalorder %s32, %s33
    %p45 = scmp.eq.s32.totalorder %s28, 1
    %p46 = por %p44, %p45
    %p48 = scmp.ne.s32.totalorder %s33, %s47
    %p49 = scmp.eq.s32.totalorder %s28, 0
    %p50 = por %p48, %p49
    %s52 = sadd.s32 %s51, 1
    %p55 = scmp.eq.s32.totalorder %s22, 1
    %p56 = scmp.ne.s32.totalorder %s51, %s53
    %p57 = scmp.eq.s32.totalorder %s22, 0
    %p58 = por %p56, %p57
    %p59 = scmp.ne.s32.totalorder %s51, %s53
    %p60 = scmp.eq.s32.totalorder %s27, 1
    %p61 = por %p59, %p60
    %p62 = scmp.ne.s32.totalorder %s53, %s54
    %p63 = scmp.eq.s32.totalorder %s27, 0
    %p64 = por %p62, %p63
    %p65 = scmp.ne.s32.totalorder %s53, %s54
    %p66 = scmp.eq.s32.totalorder %s28, 1
    %p67 = por %p65, %p66
    %p69 = scmp.ne.s32.totalorder %s54, %s68
    %p70 = scmp.eq.s32.totalorder %s28, 0
    %p71 = por %p69, %p70
    %s73 = sadd.s32 %s72, 1
    %p76 = scmp.eq.s32.totalorder %s22, 1
    %p77 = scmp.ne.s32.totalorder %s72, %s74
    %p78 = scmp.eq.s32.totalorder %s22, 0
    %p79 = por %p77, %p78
    %p80 = scmp.ne.s32.totalorder %s72, %s74
    %p81 = scmp.eq.s32.totalorder %s27, 1
    %p82 = por %p80, %p81
    %p83 = scmp.ne.s32.totalorder %s74, %s75
    %p84 = scmp.eq.s32.totalorder %s27, 0
    %p85 = por %p83, %p84
    %p86 = scmp.ne.s32.totalorder %s74, %s75
    %p87 = scmp.eq.s32.totalorder %s28, 1
    %p88 = por %p86, %p87
    %p90 = scmp.ne.s32.totalorder %s75, %s89
    %p91 = scmp.eq.s32.totalorder %s28, 0
    %p92 = por %p90, %p91
    %s94 = sadd.s32 %s93, 1
    %p97 = scmp.eq.s32.totalorder %s22, 1
    %p98 = scmp.ne.s32.totalorder %s93, %s95
    %p99 = scmp.eq.s32.totalorder %s22, 0
    %p100 = por %p98, %p99
    %p101 = scmp.ne.s32.totalorder %s93, %s95
    %p102 = scmp.eq.s32.totalorder %s27, 1
    %p103 = por %p101, %p102
    %p104 = scmp.ne.s32.totalorder %s95, %s96
    %p105 = scmp.eq.s32.totalorder %s27, 0
    %p106 = por %p104, %p105
    %p107 = scmp.ne.s32.totalorder %s95, %s96
    %p108 = scmp.eq.s32.totalorder %s28, 1
    %p109 = por %p107, %p108
    %p111 = scmp.ne.s32.totalorder %s96, %s110
    %p112 = scmp.eq.s32.totalorder %s28, 0
    %p113 = por %p111, %p112
    %s114 = ssub.s32 %s22, %s29
    %p115 = scmp.eq.s32.totalorder %s114, 0
    %s117 = sadd.s32 %s116, 1
    %s118 = scalar_select %p115, %s116, %s117
    %p121 = pneg %p115
    %p122 = scmp.eq.s32.totalorder %s22, 1
    %p123 = por %p121, %p122
    %p124 = scmp.ne.s32.totalorder %s116, %s119
    %p125 = scmp.eq.s32.totalorder %s22, 0
    %p126 = por %p124, %p125
    %p127 = scmp.ne.s32.totalorder %s116, %s119
    %p128 = scmp.eq.s32.totalorder %s27, 1
    %p129 = por %p127, %p128
    %p130 = scmp.ne.s32.totalorder %s119, %s120
    %p131 = scmp.eq.s32.totalorder %s27, 0
    %p132 = por %p130, %p131
    %p133 = scmp.ne.s32.totalorder %s119, %s120
    %p134 = scmp.eq.s32.totalorder %s28, 1
    %p135 = por %p133, %p134
    %p137 = scmp.ne.s32.totalorder %s120, %s136
    %p138 = scmp.eq.s32.totalorder %s28, 0
    %p139 = por %p137, %p138
    %s140 = ssub.s32 %s22, %s29
    %p141 = scmp.eq.s32.totalorder %s140, 0
    %s143 = sadd.s32 %s142, 1
    %s144 = scalar_select %p141, %s142, %s143
    %p147 = pneg %p141
    %p148 = scmp.eq.s32.totalorder %s22, 1
    %p149 = por %p147, %p148
    %p150 = scmp.ne.s32.totalorder %s142, %s145
    %p151 = scmp.eq.s32.totalorder %s22, 0
    %p152 = por %p150, %p151
    %p153 = scmp.ne.s32.totalorder %s142, %s145
    %p154 = scmp.eq.s32.totalorder %s27, 1
    %p155 = por %p153, %p154
    %p156 = scmp.ne.s32.totalorder %s145, %s146
    %p157 = scmp.eq.s32.totalorder %s27, 0
    %p158 = por %p156, %p157
    %p159 = scmp.ne.s32.totalorder %s145, %s146
    %p160 = scmp.eq.s32.totalorder %s28, 1
    %p161 = por %p159, %p160
    %p163 = scmp.ne.s32.totalorder %s146, %s162
    %p164 = scmp.eq.s32.totalorder %s28, 0
    %p165 = por %p163, %p164
    %s166 = ssub.s32 %s22, %s29
    %p167 = scmp.eq.s32.totalorder %s166, 0
    %s169 = sadd.s32 %s168, 1
    %s170 = scalar_select %p167, %s168, %s169
    %p173 = pneg %p167
    %p174 = scmp.eq.s32.totalorder %s22, 1
    %p175 = por %p173, %p174
    %p176 = scmp.ne.s32.totalorder %s168, %s171
    %p177 = scmp.eq.s32.totalorder %s22, 0
    %p178 = por %p176, %p177
    %p179 = scmp.ne.s32.totalorder %s168, %s171
    %p180 = scmp.eq.s32.totalorder %s27, 1
    %p181 = por %p179, %p180
    %p182 = scmp.ne.s32.totalorder %s171, %s172
    %p183 = scmp.eq.s32.totalorder %s27, 0
    %p184 = por %p182, %p183
    %p185 = scmp.ne.s32.totalorder %s171, %s172
    %p186 = scmp.eq.s32.totalorder %s28, 1
    %p187 = por %p185, %p186
    %p189 = scmp.ne.s32.totalorder %s172, %s188
    %p190 = scmp.eq.s32.totalorder %s28, 0
    %p191 = por %p189, %p190
    %s192 = ssub.s32 %s22, %s29
    %p193 = scmp.eq.s32.totalorder %s192, 0
    %s195 = sadd.s32 %s194, 1
    %s196 = scalar_select %p193, %s194, %s195
    %p199 = pneg %p193
    %p200 = scmp.eq.s32.totalorder %s22, 1
    %p201 = por %p199, %p200
    %p202 = scmp.ne.s32.totalorder %s194, %s197
    %p203 = scmp.eq.s32.totalorder %s22, 0
    %p204 = por %p202, %p203
    %p205 = scmp.ne.s32.totalorder %s194, %s197
    %p206 = scmp.eq.s32.totalorder %s27, 1
    %p207 = por %p205, %p206
    %p208 = scmp.ne.s32.totalorder %s197, %s198
    %p209 = scmp.eq.s32.totalorder %s27, 0
    %p210 = por %p208, %p209
    %p211 = scmp.ne.s32.totalorder %s197, %s198
    %p212 = scmp.eq.s32.totalorder %s28, 1
    %p213 = por %p211, %p212
    %p215 = scmp.ne.s32.totalorder %s198, %s214
    %p216 = scmp.eq.s32.totalorder %s28, 0
    %p217 = por %p215, %p216
    %s218 = ssub.s32 %s22, %s29
    %p219 = scmp.eq.s32.totalorder %s218, 0
    %s221 = sadd.s32 %s220, 1
    %s222 = scalar_select %p219, %s220, %s221
    %p225 = pneg %p219
    %p226 = scmp.eq.s32.totalorder %s22, 1
    %p227 = por %p225, %p226
    %p228 = scmp.ne.s32.totalorder %s220, %s223
    %p229 = scmp.eq.s32.totalorder %s22, 0
    %p230 = por %p228, %p229
    %p231 = scmp.ne.s32.totalorder %s220, %s223
    %p232 = scmp.eq.s32.totalorder %s27, 1
    %p233 = por %p231, %p232
    %p234 = scmp.ne.s32.totalorder %s223, %s224
    %p235 = scmp.eq.s32.totalorder %s27, 0
    %p236 = por %p234, %p235
    %p237 = scmp.ne.s32.totalorder %s223, %s224
    %p238 = scmp.eq.s32.totalorder %s28, 1
    %p239 = por %p237, %p238
    %p241 = scmp.ne.s32.totalorder %s224, %s240
    %p242 = scmp.eq.s32.totalorder %s28, 0
    %p243 = por %p241, %p242
    %s244 = ssub.s32 %s22, %s29
    %p245 = scmp.eq.s32.totalorder %s244, 0
    %s247 = sadd.s32 %s246, 1
    %s248 = scalar_select %p245, %s246, %s247
    %p251 = pneg %p245
    %p252 = scmp.eq.s32.totalorder %s22, 1
    %p253 = por %p251, %p252
    %p254 = scmp.ne.s32.totalorder %s246, %s249
    %p255 = scmp.eq.s32.totalorder %s22, 0
    %p256 = por %p254, %p255
    %p257 = scmp.ne.s32.totalorder %s246, %s249
    %p258 = scmp.eq.s32.totalorder %s27, 1
    %p259 = por %p257, %p258
    %p260 = scmp.ne.s32.totalorder %s249, %s250
    %p261 = scmp.eq.s32.totalorder %s27, 0
    %p262 = por %p260, %p261
    %p263 = scmp.ne.s32.totalorder %s249, %s250
    %p264 = scmp.eq.s32.totalorder %s28, 1
    %p265 = por %p263, %p264
    %p267 = scmp.ne.s32.totalorder %s250, %s266
    %p268 = scmp.eq.s32.totalorder %s28, 0
    %p269 = por %p267, %p268
    %s270 = ssub.s32 %s22, %s29
    %p271 = scmp.eq.s32.totalorder %s270, 0
    %s273 = sadd.s32 %s272, 1
    %s274 = scalar_select %p271, %s272, %s273
    %p277 = pneg %p271
    %p278 = scmp.eq.s32.totalorder %s22, 1
    %p279 = por %p277, %p278
    %p280 = scmp.ne.s32.totalorder %s272, %s275
    %p281 = scmp.eq.s32.totalorder %s22, 0
    %p282 = por %p280, %p281
    %p283 = scmp.ne.s32.totalorder %s272, %s275
    %p284 = scmp.eq.s32.totalorder %s27, 1
    %p285 = por %p283, %p284
    %p286 = scmp.ne.s32.totalorder %s275, %s276
    %p287 = scmp.eq.s32.totalorder %s27, 0
    %p288 = por %p286, %p287
    %p289 = scmp.ne.s32.totalorder %s275, %s276
    %p290 = scmp.eq.s32.totalorder %s28, 1
    %p291 = por %p289, %p290
    %p293 = scmp.ne.s32.totalorder %s276, %s292
    %p294 = scmp.eq.s32.totalorder %s28, 0
    %p295 = por %p293, %p294
    %s296 = ssub.s32 %s22, %s29
    %p297 = scmp.eq.s32.totalorder %s296, 0
    %s299 = sadd.s32 %s298, 1
    %s300 = scalar_select %p297, %s298, %s299
    %p303 = pneg %p297
    %p304 = scmp.eq.s32.totalorder %s22, 1
    %p305 = por %p303, %p304
    %p306 = scmp.ne.s32.totalorder %s298, %s301
    %p307 = scmp.eq.s32.totalorder %s22, 0
    %p308 = por %p306, %p307
    %p309 = scmp.ne.s32.totalorder %s298, %s301
    %p310 = scmp.eq.s32.totalorder %s27, 1
    %p311 = por %p309, %p310
    %p312 = scmp.ne.s32.totalorder %s301, %s302
    %p313 = scmp.eq.s32.totalorder %s27, 0
    %p314 = por %p312, %p313
    %p315 = scmp.ne.s32.totalorder %s301, %s302
    %p316 = scmp.eq.s32.totalorder %s28, 1
    %p317 = por %p315, %p316
    %p319 = scmp.ne.s32.totalorder %s302, %s318
    %p320 = scmp.eq.s32.totalorder %s28, 0
    %p321 = por %p319, %p320
    %s322 = ssub.s32 %s22, %s29
    %p323 = scmp.eq.s32.totalorder %s322, 0
    %s325 = sadd.s32 %s324, 1
    %s326 = scalar_select %p323, %s324, %s325
    %p329 = pneg %p323
    %p330 = scmp.eq.s32.totalorder %s22, 1
    %p331 = por %p329, %p330
    %p332 = scmp.ne.s32.totalorder %s324, %s327
    %p333 = scmp.eq.s32.totalorder %s22, 0
    %p334 = por %p332, %p333
    %p335 = scmp.ne.s32.totalorder %s324, %s327
    %p336 = scmp.eq.s32.totalorder %s27, 1
    %p337 = por %p335, %p336
    %p338 = scmp.ne.s32.totalorder %s327, %s328
    %p339 = scmp.eq.s32.totalorder %s27, 0
    %p340 = por %p338, %p339
    %p341 = scmp.ne.s32.totalorder %s327, %s328
    %p342 = scmp.eq.s32.totalorder %s28, 1
    %p343 = por %p341, %p342
    %p345 = scmp.ne.s32.totalorder %s328, %s344
    %p346 = scmp.eq.s32.totalorder %s28, 0
    %p347 = por %p345, %p346
    %s348 = ssub.s32 %s22, %s29
    %p349 = scmp.eq.s32.totalorder %s348, 0
    %s351 = sadd.s32 %s350, 1
    %s352 = scalar_select %p349, %s350, %s351
    %p355 = pneg %p349
    %p356 = scmp.eq.s32.totalorder %s22, 1
    %p357 = por %p355, %p356
    %p358 = scmp.ne.s32.totalorder %s350, %s353
    %p359 = scmp.eq.s32.totalorder %s22, 0
    %p360 = por %p358, %p359
    %p361 = scmp.ne.s32.totalorder %s350, %s353
    %p362 = scmp.eq.s32.totalorder %s27, 1
    %p363 = por %p361, %p362
    %p364 = scmp.ne.s32.totalorder %s353, %s354
    %p365 = scmp.eq.s32.totalorder %s27, 0
    %p366 = por %p364, %p365
    %p367 = scmp.ne.s32.totalorder %s353, %s354
    %p368 = scmp.eq.s32.totalorder %s28, 1
    %p369 = por %p367, %p368
    %p371 = scmp.ne.s32.totalorder %s354, %s370
    %p372 = scmp.eq.s32.totalorder %s28, 0
    %p373 = por %p371, %p372
    %s374 = ssub.s32 %s22, %s29
    %p375 = scmp.eq.s32.totalorder %s374, 0
    %s377 = sadd.s32 %s376, 1
    %s378 = scalar_select %p375, %s376, %s377
    %p381 = pneg %p375
    %p382 = scmp.eq.s32.totalorder %s22, 1
    %p383 = por %p381, %p382
    %p384 = scmp.ne.s32.totalorder %s376, %s379
    %p385 = scmp.eq.s32.totalorder %s22, 0
    %p386 = por %p384, %p385
    %p387 = scmp.ne.s32.totalorder %s376, %s379
    %p388 = scmp.eq.s32.totalorder %s27, 1
    %p389 = por %p387, %p388
    %p390 = scmp.ne.s32.totalorder %s379, %s380
    %p391 = scmp.eq.s32.totalorder %s27, 0
    %p392 = por %p390, %p391
    %p393 = scmp.ne.s32.totalorder %s379, %s380
    %p394 = scmp.eq.s32.totalorder %s28, 1
    %p395 = por %p393, %p394
    %p397 = scmp.ne.s32.totalorder %s380, %s396
    %p398 = scmp.eq.s32.totalorder %s28, 0
    %p399 = por %p397, %p398
    %s400 = ssub.s32 %s22, %s29
    %p401 = scmp.eq.s32.totalorder %s400, 0
    %s403 = sadd.s32 %s402, 1
    %s404 = scalar_select %p401, %s402, %s403
    %p407 = pneg %p401
    %p408 = scmp.eq.s32.totalorder %s22, 1
    %p409 = por %p407, %p408
    %p410 = scmp.ne.s32.totalorder %s402, %s405
    %p411 = scmp.eq.s32.totalorder %s22, 0
    %p412 = por %p410, %p411
    %p413 = scmp.ne.s32.totalorder %s402, %s405
    %p414 = scmp.eq.s32.totalorder %s27, 1
    %p415 = por %p413, %p414
    %p416 = scmp.ne.s32.totalorder %s405, %s406
    %p417 = scmp.eq.s32.totalorder %s27, 0
    %p418 = por %p416, %p417
    %p419 = scmp.ne.s32.totalorder %s405, %s406
    %p420 = scmp.eq.s32.totalorder %s28, 1
    %p421 = por %p419, %p420
    %p423 = scmp.ne.s32.totalorder %s406, %s422
    %p424 = scmp.eq.s32.totalorder %s28, 0
    %p425 = por %p423, %p424
    %s427 = sadd.s32 %s426, 1
    %p430 = scmp.eq.s32.totalorder %s22, 1
    %p431 = scmp.ne.s32.totalorder %s426, %s428
    %p432 = scmp.eq.s32.totalorder %s22, 0
    %p433 = por %p431, %p432
    %p434 = scmp.ne.s32.totalorder %s426, %s428
    %p435 = scmp.eq.s32.totalorder %s27, 1
    %p436 = por %p434, %p435
    %p437 = scmp.ne.s32.totalorder %s428, %s429
    %p438 = scmp.eq.s32.totalorder %s27, 0
    %p439 = por %p437, %p438
    %p440 = scmp.ne.s32.totalorder %s428, %s429
    %p441 = scmp.eq.s32.totalorder %s28, 1
    %p442 = por %p440, %p441
    %p444 = scmp.ne.s32.totalorder %s429, %s443
    %p445 = scmp.eq.s32.totalorder %s28, 0
    %p446 = por %p444, %p445
    %p447 = scmp.le.s32.totalorder 1, %s22
    %p448 = scmp.lt.s32.totalorder %s22, 3
    %p449 = pnand %p447, %p448
    %p450 = pneg %p449
    // Predicated region
    $region9: #{seq2seq_forward.2} parent=5 // pred_check
      _
    $region10: #{seq2seq_forward.2} parent=5 // pred_check_branch
      %452 = sbr.rel (%p449) target = $region12
    $region11: #{seq2seq_forward.2} parent=5 // pred_region
      %s453 = ssub.s32 %s22, 1
      // Predicated region
      $region13: #{seq2seq_forward.2} parent=11 // pred_check
        %p454 = pneg %p43
      $region14: #{seq2seq_forward.2} parent=11 // pred_check_branch
        %456 = sbr.rel (%p454) target = $region16
      $region15: #{seq2seq_forward.2} parent=11 // pred_region
        _
      $region16: #{seq2seq_forward.2} parent=11 // pred_fallthru
        _
      // Predicated region
      $region17: #{seq2seq_forward.2} parent=11 // pred_check
        %p457 = pneg %p64
      $region18: #{seq2seq_forward.2} parent=11 // pred_check_branch
        %459 = sbr.rel (%p457) target = $region20
      $region19: #{seq2seq_forward.2} parent=11 // pred_region
        _
      $region20: #{seq2seq_forward.2} parent=11 // pred_fallthru
        _
      // Predicated region
      $region21: #{seq2seq_forward.2} parent=11 // pred_check
        %p460 = pneg %p85
      $region22: #{seq2seq_forward.2} parent=11 // pred_check_branch
        %462 = sbr.rel (%p460) target = $region24
      $region23: #{seq2seq_forward.2} parent=11 // pred_region
        _
      $region24: #{seq2seq_forward.2} parent=11 // pred_fallthru
        _
      // Predicated region
      $region25: #{seq2seq_forward.2} parent=11 // pred_check
        %p463 = pneg %p106
      $region26: #{seq2seq_forward.2} parent=11 // pred_check_branch
        %465 = sbr.rel (%p463) target = $region28
      $region27: #{seq2seq_forward.2} parent=11 // pred_region
        _
      $region28: #{seq2seq_forward.2} parent=11 // pred_fallthru
        _
    $region12: #{seq2seq_forward.2} parent=5 // pred_fallthru
      _
    %p466 = scmp.lt.s32.totalorder %s22, 2
    // Predicated region
    $region29: #{seq2seq_forward.2} parent=5 // pred_check
      %p467 = pneg %p466
    $region30: #{seq2seq_forward.2} parent=5 // pred_check_branch
      %469 = sbr.rel (%p467) target = $region32
    $region31: #{seq2seq_forward.2} parent=5 // pred_region
      // Predicated region
      $region33: #{seq2seq_forward.2} parent=31 // pred_check
        %p470 = pneg %p126
      $region34: #{seq2seq_forward.2} parent=31 // pred_check_branch
        %472 = sbr.rel (%p470) target = $region36
      $region35: #{seq2seq_forward.2} parent=31 // pred_region
        %p473 = scmp.lt.s32.totalorder %s22, 1
        %s474 = scalar_select %p473, %s22, 1
        %s475 = smul.addr %s474, 4
        %s476 = smul.addr %s475, 4
        %s477 = scalar_lea.vmem %s4, %s476
      $region36: #{seq2seq_forward.2} parent=31 // pred_fallthru
        _
      // Predicated region
      $region37: #{seq2seq_forward.2} parent=31 // pred_check
        %p478 = pneg %p152
      $region38: #{seq2seq_forward.2} parent=31 // pred_check_branch
        %480 = sbr.rel (%p478) target = $region40
      $region39: #{seq2seq_forward.2} parent=31 // pred_region
        %p481 = scmp.lt.s32.totalorder %s22, 1
        %s482 = scalar_select %p481, %s22, 1
        %s483 = scalar_lea.vmem %s5, %s482
      $region40: #{seq2seq_forward.2} parent=31 // pred_fallthru
        _
      // Predicated region
      $region41: #{seq2seq_forward.2} parent=31 // pred_check
        %p484 = pneg %p178
      $region42: #{seq2seq_forward.2} parent=31 // pred_check_branch
        %486 = sbr.rel (%p484) target = $region44
      $region43: #{seq2seq_forward.2} parent=31 // pred_region
        %p487 = scmp.lt.s32.totalorder %s22, 1
        %s488 = scalar_select %p487, %s22, 1
        %s489 = smul.addr %s488, 4
        %s490 = smul.addr %s489, 4
        %s491 = scalar_lea.vmem %s6, %s490
      $region44: #{seq2seq_forward.2} parent=31 // pred_fallthru
        _
      // Predicated region
      $region45: #{seq2seq_forward.2} parent=31 // pred_check
        %p492 = pneg %p204
      $region46: #{seq2seq_forward.2} parent=31 // pred_check_branch
        %494 = sbr.rel (%p492) target = $region48
      $region47: #{seq2seq_forward.2} parent=31 // pred_region
        %p495 = scmp.lt.s32.totalorder %s22, 1
        %s496 = scalar_select %p495, %s22, 1
        %s497 = scalar_lea.vmem %s7, %s496
      $region48: #{seq2seq_forward.2} parent=31 // pred_fallthru
        _
      // Predicated region
      $region49: #{seq2seq_forward.2} parent=31 // pred_check
        %p498 = pneg %p230
      $region50: #{seq2seq_forward.2} parent=31 // pred_check_branch
        %500 = sbr.rel (%p498) target = $region52
      $region51: #{seq2seq_forward.2} parent=31 // pred_region
        %p501 = scmp.lt.s32.totalorder %s22, 1
        %s502 = scalar_select %p501, %s22, 1
        %s503 = scalar_lea.vmem %s8, %s502
      $region52: #{seq2seq_forward.2} parent=31 // pred_fallthru
        _
      // Predicated region
      $region53: #{seq2seq_forward.2} parent=31 // pred_check
        %p504 = pneg %p256
      $region54: #{seq2seq_forward.2} parent=31 // pred_check_branch
        %506 = sbr.rel (%p504) target = $region56
      $region55: #{seq2seq_forward.2} parent=31 // pred_region
        %p507 = scmp.lt.s32.totalorder %s22, 1
        %s508 = scalar_select %p507, %s22, 1
        %s509 = scalar_lea.vmem %s9, %s508
      $region56: #{seq2seq_forward.2} parent=31 // pred_fallthru
        _
      // Predicated region
      $region57: #{seq2seq_forward.2} parent=31 // pred_check
        %p510 = pneg %p282
      $region58: #{seq2seq_forward.2} parent=31 // pred_check_branch
        %512 = sbr.rel (%p510) target = $region60
      $region59: #{seq2seq_forward.2} parent=31 // pred_region
        %p513 = scmp.lt.s32.totalorder %s22, 1
        %s514 = scalar_select %p513, %s22, 1
        %s515 = smul.addr %s514, 4
        %s516 = smul.addr %s515, 4
        %s517 = scalar_lea.vmem %s10, %s516
      $region60: #{seq2seq_forward.2} parent=31 // pred_fallthru
        _
      // Predicated region
      $region61: #{seq2seq_forward.2} parent=31 // pred_check
        %p518 = pneg %p308
      $region62: #{seq2seq_forward.2} parent=31 // pred_check_branch
        %520 = sbr.rel (%p518) target = $region64
      $region63: #{seq2seq_forward.2} parent=31 // pred_region
        %p521 = scmp.lt.s32.totalorder %s22, 1
        %s522 = scalar_select %p521, %s22, 1
        %s523 = scalar_lea.vmem %s11, %s522
      $region64: #{seq2seq_forward.2} parent=31 // pred_fallthru
        _
      // Predicated region
      $region65: #{seq2seq_forward.2} parent=31 // pred_check
        %p524 = pneg %p334
      $region66: #{seq2seq_forward.2} parent=31 // pred_check_branch
        %526 = sbr.rel (%p524) target = $region68
      $region67: #{seq2seq_forward.2} parent=31 // pred_region
        %p527 = scmp.lt.s32.totalorder %s22, 1
        %s528 = scalar_select %p527, %s22, 1
        %s529 = smul.addr %s528, 8
        %s530 = smul.addr %s529, 4
        %s531 = scalar_lea.vmem %s12, %s530
      $region68: #{seq2seq_forward.2} parent=31 // pred_fallthru
        _
      // Predicated region
      $region69: #{seq2seq_forward.2} parent=31 // pred_check
        %p532 = pneg %p360
      $region70: #{seq2seq_forward.2} parent=31 // pred_check_branch
        %534 = sbr.rel (%p532) target = $region72
      $region71: #{seq2seq_forward.2} parent=31 // pred_region
        %p535 = scmp.lt.s32.totalorder %s22, 1
        %s536 = scalar_select %p535, %s22, 1
        %s537 = scalar_lea.vmem %s13, %s536
      $region72: #{seq2seq_forward.2} parent=31 // pred_fallthru
        _
      // Predicated region
      $region73: #{seq2seq_forward.2} parent=31 // pred_check
        %p538 = pneg %p386
      $region74: #{seq2seq_forward.2} parent=31 // pred_check_branch
        %540 = sbr.rel (%p538) target = $region76
      $region75: #{seq2seq_forward.2} parent=31 // pred_region
        %p541 = scmp.lt.s32.totalorder %s22, 1
        %s542 = scalar_select %p541, %s22, 1
        %s543 = scalar_lea.vmem %s14, %s542
      $region76: #{seq2seq_forward.2} parent=31 // pred_fallthru
        _
      // Predicated region
      $region77: #{seq2seq_forward.2} parent=31 // pred_check
        %p544 = pneg %p412
      $region78: #{seq2seq_forward.2} parent=31 // pred_check_branch
        %546 = sbr.rel (%p544) target = $region80
      $region79: #{seq2seq_forward.2} parent=31 // pred_region
        %p547 = scmp.lt.s32.totalorder %s22, 1
        %s548 = scalar_select %p547, %s22, 1
        %s549 = scalar_lea.vmem %s15, %s548
      $region80: #{seq2seq_forward.2} parent=31 // pred_fallthru
        _
    $region32: #{seq2seq_forward.2} parent=5 // pred_fallthru
      _
    %p550 = scmp.le.s32.totalorder 1, %s22
    %p551 = scmp.lt.s32.totalorder %s22, 3
    %p552 = pnand %p550, %p551
    %p553 = pneg %p552
    // Predicated region
    $region81: #{seq2seq_forward.2} parent=5 // pred_check
      _
    $region82: #{seq2seq_forward.2} parent=5 // pred_check_branch
      %555 = sbr.rel (%p552) target = $region84
    $region83: #{seq2seq_forward.2} parent=5 // pred_region
      %s556 = ssub.s32 %s22, 1
      %p557 = pneg %p43
      %p558 = pneg %p40
      %p559 = pneg %p64
      %p560 = pneg %p61
      %p561 = pneg %p85
      %p562 = pneg %p82
      %p563 = pneg %p106
      %p564 = pneg %p103
      %p565 = scmp.lt.s32.totalorder %s27, 1
      %s566 = scalar_select %p565, %s27, 1
      %s567 = smul.addr %s566, 4
      %s568 = smul.addr %s567, 4
      %s569 = scalar_lea.vmem %s4, %s568
      %p570 = pneg %p132
      %p571 = pneg %p129
      %p572 = scmp.lt.s32.totalorder %s27, 1
      %s573 = scalar_select %p572, %s27, 1
      %s574 = scalar_lea.vmem %s5, %s573
      %p575 = pneg %p158
      %p576 = pneg %p155
      %p577 = scmp.lt.s32.totalorder %s27, 1
      %s578 = scalar_select %p577, %s27, 1
      %s579 = smul.addr %s578, 4
      %s580 = smul.addr %s579, 4
      %s581 = scalar_lea.vmem %s6, %s580
      %p582 = pneg %p184
      %p583 = pneg %p181
      %p584 = scmp.lt.s32.totalorder %s27, 1
      %s585 = scalar_select %p584, %s27, 1
      %s586 = scalar_lea.vmem %s7, %s585
      %p587 = pneg %p210
      %p588 = pneg %p207
      %p589 = scmp.lt.s32.totalorder %s27, 1
      %s590 = scalar_select %p589, %s27, 1
      %s591 = scalar_lea.vmem %s8, %s590
      %p592 = pneg %p236
      %p593 = pneg %p233
      %p594 = scmp.lt.s32.totalorder %s27, 1
      %s595 = scalar_select %p594, %s27, 1
      %s596 = scalar_lea.vmem %s9, %s595
      %p597 = pneg %p262
      %p598 = pneg %p259
      %p599 = scmp.lt.s32.totalorder %s27, 1
      %s600 = scalar_select %p599, %s27, 1
      %s601 = smul.addr %s600, 4
      %s602 = smul.addr %s601, 4
      %s603 = scalar_lea.vmem %s10, %s602
      %p604 = pneg %p288
      %p605 = pneg %p285
      %p606 = scmp.lt.s32.totalorder %s27, 1
      %s607 = scalar_select %p606, %s27, 1
      %s608 = scalar_lea.vmem %s11, %s607
      %p609 = pneg %p314
      %p610 = pneg %p311
      %p611 = scmp.lt.s32.totalorder %s27, 1
      %s612 = scalar_select %p611, %s27, 1
      %s613 = smul.addr %s612, 8
      %s614 = smul.addr %s613, 4
      %s615 = scalar_lea.vmem %s12, %s614
      %p616 = pneg %p340
      %p617 = pneg %p337
      %p618 = scmp.lt.s32.totalorder %s27, 1
      %s619 = scalar_select %p618, %s27, 1
      %s620 = scalar_lea.vmem %s13, %s619
      %p621 = pneg %p366
      %p622 = pneg %p363
      %p623 = scmp.lt.s32.totalorder %s27, 1
      %s624 = scalar_select %p623, %s27, 1
      %s625 = scalar_lea.vmem %s14, %s624
      %p626 = pneg %p392
      %p627 = pneg %p389
      %p628 = scmp.lt.s32.totalorder %s27, 1
      %s629 = scalar_select %p628, %s27, 1
      %s630 = scalar_lea.vmem %s15, %s629
      %p631 = pneg %p418
      %p632 = pneg %p415
      %p633 = pneg %p439
      %p634 = pneg %p436
      %p635 = scmp.lt.s32.totalorder %s27, 1
      %s636 = scalar_select %p635, %s27, 1
      %s637 = smul.addr %s636, 4
      %s638 = smul.addr %s637, 4
      %s639 = scalar_lea.vmem %s4, %s638
      %p640 = scmp.lt.s32.totalorder %s27, 1
      %s641 = scalar_select %p640, %s27, 1
      %s642 = scalar_lea.vmem %s5, %s641
      %p643 = scmp.lt.s32.totalorder %s27, 1
      %s644 = scalar_select %p643, %s27, 1
      %s645 = smul.addr %s644, 4
      %s646 = smul.addr %s645, 4
      %s647 = scalar_lea.vmem %s6, %s646
      %p648 = scmp.lt.s32.totalorder %s27, 1
      %s649 = scalar_select %p648, %s27, 1
      %s650 = scalar_lea.vmem %s7, %s649
      %p651 = scmp.lt.s32.totalorder %s27, 1
      %s652 = scalar_select %p651, %s27, 1
      %s653 = scalar_lea.vmem %s8, %s652
      %p654 = scmp.lt.s32.totalorder %s27, 1
      %s655 = scalar_select %p654, %s27, 1
      %s656 = scalar_lea.vmem %s9, %s655
      %p657 = scmp.lt.s32.totalorder %s27, 1
      %s658 = scalar_select %p657, %s27, 1
      %s659 = smul.addr %s658, 4
      %s660 = smul.addr %s659, 4
      %s661 = scalar_lea.vmem %s10, %s660
      %p662 = scmp.lt.s32.totalorder %s27, 1
      %s663 = scalar_select %p662, %s27, 1
      %s664 = scalar_lea.vmem %s11, %s663
      %p665 = scmp.lt.s32.totalorder %s27, 1
      %s666 = scalar_select %p665, %s27, 1
      %s667 = smul.addr %s666, 8
      %s668 = smul.addr %s667, 4
      %s669 = scalar_lea.vmem %s12, %s668
      %p670 = scmp.lt.s32.totalorder %s27, 1
      %s671 = scalar_select %p670, %s27, 1
      %s672 = scalar_lea.vmem %s13, %s671
      %p673 = scmp.lt.s32.totalorder %s27, 1
      %s674 = scalar_select %p673, %s27, 1
      %s675 = scalar_lea.vmem %s14, %s674
      %p676 = scmp.lt.s32.totalorder %s27, 1
      %s677 = scalar_select %p676, %s27, 1
      %s678 = scalar_lea.vmem %s15, %s677
      %p680 = scmp.eq.s32.totalorder %s27, 0
      // Predicated region
      $region85: #{seq2seq_forward.2} parent=83 // pred_check
        %p681 = pneg %p680
      $region86: #{seq2seq_forward.2} parent=83 // pred_check_branch
        %683 = sbr.rel (%p681) target = $region88
      $region87: #{seq2seq_forward.2} parent=83 // pred_region
        %v684 = vld [vmem:[%s0] sm:$0xff]
        %v685 = vld [vmem:[%s0 + $0x8] sm:$0xff]
        %v686 = vld [vmem:[%s2] sm:$0x1]
        %v687 = vld [vmem:[%s3] sm:$0x1]
        %vm688 = vcmask 261120
        %v689 = vsel %vm688, %v684, 0.0
        %690 = vadd.xlane.f32.xlu0 %v689
        %v691 = vpop.xlane.xlu0 %690
        %v692 = vsel %vm688, %v685, 0.0
        %693 = vadd.xlane.f32.xlu0 %v692
        %v694 = vpop.xlane.xlu0 %693
        %v695 = vrcp.pop 32.0
        %v696 = vmul.f32 32.0, %v695
        %v697 = vsub.f32 1.0, %v696
        %v698 = vmul.f32 %v695, %v697
        %v699 = vadd.f32 %v695, %v698
        %vm700 = vweird.f32 %v695
        %v701 = vsel %vm700, %v695, %v699
        %v702 = vmul.f32 %v691, %v701
        %v703 = vmul.f32 %v694, %v701
        %v704 = vsub.f32 %v684, %v702
        %v705 = vsub.f32 %v685, %v703
        %v706 = vmul.f32 %v704, %v704
        %v707 = vmul.f32 %v705, %v705
        %v708 = vsel %vm688, %v706, 0.0
        %709 = vadd.xlane.f32.xlu0 %v708
        %v710 = vpop.xlane.xlu0 %709
        %v711 = vsel %vm688, %v707, 0.0
        %712 = vadd.xlane.f32.xlu0 %v711
        %v713 = vpop.xlane.xlu0 %712
        %v714 = vmul.f32 %v710, %v701
        %v715 = vmul.f32 %v713, %v701
        %v716 = vadd.f32 %v714, 1e-12
        %v717 = vadd.f32 %v715, 1e-12
        %v718 = vrsqrt.pop %v716
        %v719 = vmul.f32 %v718, %v716
        %v720 = vmul.f32 %v719, %v718
        %v721 = vmul.f32 0.5, %v720
        %v722 = vsub.f32 1.5, %v721
        %v723 = vmul.f32 %v718, %v722
        %vm724 = vweird.f32 %v716
        %vm725 = vweird.f32 %v718
        %vm726 = vmor %vm724, %vm725
        %v727 = vsel %vm726, %v718, %v723
        %v728 = vrsqrt.pop %v717
        %v729 = vmul.f32 %v728, %v717
        %v730 = vmul.f32 %v729, %v728
        %v731 = vmul.f32 0.5, %v730
        %v732 = vsub.f32 1.5, %v731
        %v733 = vmul.f32 %v728, %v732
        %vm734 = vweird.f32 %v717
        %vm735 = vweird.f32 %v728
        %vm736 = vmor %vm734, %vm735
        %v737 = vsel %vm736, %v728, %v733
        %v738 = vmul.f32 %v704, %v727
        %v739 = vmul.f32 %v705, %v737
        %v741 = vperm.slane %v686, 0
        %v743 = vmul.f32 %v738, %v741
        %v744 = vmul.f32 %v739, %v741
        %v746 = vperm.slane %v687, 0
        %v748 = vadd.f32 %v743, %v746
        %v749 = vadd.f32 %v744, %v746
        %750 = vst.msk [vmem:[#allocation2] sm:$0xff] %vm688, %v748
        %751 = vst.msk [vmem:[#allocation2 + $0x8] sm:$0xff] %vm688, %v749
      $region88: #{seq2seq_forward.2} parent=83 // pred_fallthru
        _
      %v752 = vld [vmem:[#allocation2] sm:$0xff]
      %v753 = vld [vmem:[#allocation2 + $0x8] sm:$0xff]
      %v754 = vpack.c.bf16 %v753, %v752
      %v755 = vld [vmem:[%s639] sm:$0xf]
      %v756 = vld [vmem:[%s639 + $0x4] sm:$0xf]
      %v757 = vld [vmem:[%s639 + $0x8] sm:$0xf]
      %v758 = vld [vmem:[%s639 + $0xc] sm:$0xf]
      %v759 = vld [vmem:[%s642] sm:$0x1]
      %v761 = vperm.slane %v759, 0
      %v767 = vunpack.c.l.b16 %v755
      %v768 = vunpack.c.l.b16 %v756
      %v769 = vunpack.c.l.b16 %v757
      %v770 = vunpack.c.l.b16 %v758
      %v771 = vpack.c.b16 %v768, %v767
      %v772 = vpack.c.b16 %v770, %v769
      %vm775 = vcmask 261120
      %v777 = vsel %vm775, %v754, 0
      %779 = vmatpush.bf16.msra.mxu0 0
      %780 = vmatpush.bf16.msra.mxu0 0
      %781 = vmatpush.bf16.msra.mxu0 0
      %782 = vmatpush.bf16.msra.mxu0 0
      %783 = vmatpush.bf16.msra.mxu0 0
      %784 = vmatpush.bf16.msra.mxu0 0
      %785 = vmatpush.bf16.msra.mxu0 %v772
      %786 = vmatpush.bf16.msra.mxu0 %v771
      %787 = vmatmul.bf16.gmra.mxu0 %v777
      %v788 = vpop.f32.mrf.mxu0
      %v789 = vadd.f32 %v761, %v788
      %v790 = vpop.f32.mrf.mxu0
      %v791 = vadd.f32 %v761, %v790
      %792 = vdwg.mxu0
      %v793 = vld [vmem:[%s1] sm:$0x3]
      %v794 = vlaneseq
      %v795 = vshrl.u32 %v794, 7
      %v796 = vlaneseq
      %v797 = vand.u32 %v796, 127
      %vm798 = vcmp.ge.s32.totalorder %v795, %v797
      %v799 = vsel %vm798, 1, 0
      %v800 = vcvt.s32.f32 %v799
      %v801 = vld [vmem:[%s647] sm:$0xf]
      %v802 = vld [vmem:[%s647 + $0x4] sm:$0xf]
      %v803 = vld [vmem:[%s647 + $0x8] sm:$0xf]
      %v804 = vld [vmem:[%s647 + $0xc] sm:$0xf]
      %v805 = vperm.slane %v793, 0
      %806 = vxpose.xlu0.b32.start [1/16] %v805, 128
      %807 = vxpose.xlu0.b32.cont [2/16] 0.0, 128
      %808 = vxpose.xlu0.b32.cont [3/16] 0.0, 128
      %809 = vxpose.xlu0.b32.cont [4/16] 0.0, 128
      %810 = vxpose.xlu0.b32.cont [5/16] 0.0, 128
      %811 = vxpose.xlu0.b32.cont [6/16] 0.0, 128
      %812 = vxpose.xlu0.b32.cont [7/16] 0.0, 128
      %813 = vxpose.xlu0.b32.cont [8/16] 0.0, 128
      %814 = vxpose.xlu0.b32.cont [9/16] 0.0, 128
      %815 = vxpose.xlu0.b32.cont [10/16] 0.0, 128
      %816 = vxpose.xlu0.b32.cont [11/16] 0.0, 128
      %817 = vxpose.xlu0.b32.cont [12/16] 0.0, 128
      %818 = vxpose.xlu0.b32.cont [13/16] 0.0, 128
      %819 = vxpose.xlu0.b32.cont [14/16] 0.0, 128
      %820 = vxpose.xlu0.b32.cont [15/16] 0.0, 128
      %821 = vxpose.xlu0.b32.end [16/16] 0.0, 128
      %v822 = vpop.trf.xlu0
      %v823 = vpop.trf.xlu0
      %v824 = vpop.trf.xlu0
      %v825 = vpop.trf.xlu0
      %v826 = vpop.trf.xlu0
      %v827 = vpop.trf.xlu0
      %v828 = vpop.trf.xlu0
      %v829 = vpop.trf.xlu0
      %v830 = vpop.trf.xlu0
      %v831 = vpop.trf.xlu0
      %v832 = vpop.trf.xlu0
      %v833 = vpop.trf.xlu0
      %v834 = vpop.trf.xlu0
      %v835 = vpop.trf.xlu0
      %v836 = vpop.trf.xlu0
      %v837 = vpop.trf.xlu0
      %v838 = vsub.f32 1.0, %v805
      %v839 = vsub.f32 1.0, %v822
      %v840 = vmul.f32 %v838, %v839
      %v841 = vmul.f32 %v822, %v800
      %v842 = vadd.f32 %v840, %v841
      %v843 = vsub.f32 1.0, %v842
      %v844 = vmul.f32 %v843, -10000.0
      %845 = vxpose.xlu0.b32.start [1/16] %v789, 128
      %846 = vxpose.xlu0.b32.cont [2/16] 0.0, 128
      %847 = vxpose.xlu0.b32.cont [3/16] 0.0, 128
      %848 = vxpose.xlu0.b32.cont [4/16] 0.0, 128
      %849 = vxpose.xlu0.b32.cont [5/16] 0.0, 128
      %850 = vxpose.xlu0.b32.cont [6/16] 0.0, 128
      %851 = vxpose.xlu0.b32.cont [7/16] 0.0, 128
      %852 = vxpose.xlu0.b32.cont [8/16] 0.0, 128
      %853 = vxpose.xlu0.b32.cont [9/16] 0.0, 128
      %854 = vxpose.xlu0.b32.cont [10/16] 0.0, 128
      %855 = vxpose.xlu0.b32.cont [11/16] 0.0, 128
      %856 = vxpose.xlu0.b32.cont [12/16] 0.0, 128
      %857 = vxpose.xlu0.b32.cont [13/16] 0.0, 128
      %858 = vxpose.xlu0.b32.cont [14/16] 0.0, 128
      %859 = vxpose.xlu0.b32.cont [15/16] 0.0, 128
      %860 = vxpose.xlu0.b32.end [16/16] 0.0, 128
      %v861 = vpop.trf.xlu0
      %v862 = vpop.trf.xlu0
      %v863 = vpop.trf.xlu0
      %v864 = vpop.trf.xlu0
      %v865 = vpop.trf.xlu0
      %v866 = vpop.trf.xlu0
      %v867 = vpop.trf.xlu0
      %v868 = vpop.trf.xlu0
      %v869 = vpop.trf.xlu0
      %v870 = vpop.trf.xlu0
      %v871 = vpop.trf.xlu0
      %v872 = vpop.trf.xlu0
      %v873 = vpop.trf.xlu0
      %v874 = vpop.trf.xlu0
      %v875 = vpop.trf.xlu0
      %v876 = vpop.trf.xlu0
      %877 = vxpose.xlu0.b32.start [1/16] %v861, 128
      %878 = vxpose.xlu0.b32.cont [2/16] 0.0, 128
      %879 = vxpose.xlu0.b32.cont [3/16] 0.0, 128
      %880 = vxpose.xlu0.b32.cont [4/16] 0.0, 128
      %881 = vxpose.xlu0.b32.cont [5/16] 0.0, 128
      %882 = vxpose.xlu0.b32.cont [6/16] 0.0, 128
      %883 = vxpose.xlu0.b32.cont [7/16] 0.0, 128
      %884 = vxpose.xlu0.b32.cont [8/16] 0.0, 128
      %885 = vxpose.xlu0.b32.cont [9/16] 0.0, 128
      %886 = vxpose.xlu0.b32.cont [10/16] 0.0, 128
      %887 = vxpose.xlu0.b32.cont [11/16] 0.0, 128
      %888 = vxpose.xlu0.b32.cont [12/16] 0.0, 128
      %889 = vxpose.xlu0.b32.cont [13/16] 0.0, 128
      %890 = vxpose.xlu0.b32.cont [14/16] 0.0, 128
      %891 = vxpose.xlu0.b32.cont [15/16] 0.0, 128
      %892 = vxpose.xlu0.b32.end [16/16] 0.0, 128
      %v893 = vpop.trf.xlu0
      %v894 = vpop.trf.xlu0
      %v895 = vpop.trf.xlu0
      %v896 = vpop.trf.xlu0
      %v897 = vpop.trf.xlu0
      %v898 = vpop.trf.xlu0
      %v899 = vpop.trf.xlu0
      %v900 = vpop.trf.xlu0
      %v901 = vpop.trf.xlu0
      %v902 = vpop.trf.xlu0
      %v903 = vpop.trf.xlu0
      %v904 = vpop.trf.xlu0
      %v905 = vpop.trf.xlu0
      %v906 = vpop.trf.xlu0
      %v907 = vpop.trf.xlu0
      %v908 = vpop.trf.xlu0
      %909 = vxpose.xlu0.b32.start [1/16] %v862, 128
      %910 = vxpose.xlu0.b32.cont [2/16] 0.0, 128
      %911 = vxpose.xlu0.b32.cont [3/16] 0.0, 128
      %912 = vxpose.xlu0.b32.cont [4/16] 0.0, 128
      %913 = vxpose.xlu0.b32.cont [5/16] 0.0, 128
      %914 = vxpose.xlu0.b32.cont [6/16] 0.0, 128
      %915 = vxpose.xlu0.b32.cont [7/16] 0.0, 128
      %916 = vxpose.xlu0.b32.cont [8/16] 0.0, 128
      %917 = vxpose.xlu0.b32.cont [9/16] 0.0, 128
      %918 = vxpose.xlu0.b32.cont [10/16] 0.0, 128
      %919 = vxpose.xlu0.b32.cont [11/16] 0.0, 128
      %920 = vxpose.xlu0.b32.cont [12/16] 0.0, 128
      %921 = vxpose.xlu0.b32.cont [13/16] 0.0, 128
      %922 = vxpose.xlu0.b32.cont [14/16] 0.0, 128
      %923 = vxpose.xlu0.b32.cont [15/16] 0.0, 128
      %924 = vxpose.xlu0.b32.end [16/16] 0.0, 128
      %v925 = vpop.trf.xlu0
      %v926 = vpop.trf.xlu0
      %v927 = vpop.trf.xlu0
      %v928 = vpop.trf.xlu0
      %v929 = vpop.trf.xlu0
      %v930 = vpop.trf.xlu0
      %v931 = vpop.trf.xlu0
      %v932 = vpop.trf.xlu0
      %v933 = vpop.trf.xlu0
      %v934 = vpop.trf.xlu0
      %v935 = vpop.trf.xlu0
      %v936 = vpop.trf.xlu0
      %v937 = vpop.trf.xlu0
      %v938 = vpop.trf.xlu0
      %v939 = vpop.trf.xlu0
      %v940 = vpop.trf.xlu0
      %941 = vxpose.xlu0.b32.start [1/16] %v863, 128
      %942 = vxpose.xlu0.b32.cont [2/16] 0.0, 128
      %943 = vxpose.xlu0.b32.cont [3/16] 0.0, 128
      %944 = vxpose.xlu0.b32.cont [4/16] 0.0, 128
      %945 = vxpose.xlu0.b32.cont [5/16] 0.0, 128
      %946 = vxpose.xlu0.b32.cont [6/16] 0.0, 128
      %947 = vxpose.xlu0.b32.cont [7/16] 0.0, 128
      %948 = vxpose.xlu0.b32.cont [8/16] 0.0, 128
      %949 = vxpose.xlu0.b32.cont [9/16] 0.0, 128
      %950 = vxpose.xlu0.b32.cont [10/16] 0.0, 128
      %951 = vxpose.xlu0.b32.cont [11/16] 0.0, 128
      %952 = vxpose.xlu0.b32.cont [12/16] 0.0, 128
      %953 = vxpose.xlu0.b32.cont [13/16] 0.0, 128
      %954 = vxpose.xlu0.b32.cont [14/16] 0.0, 128
      %955 = vxpose.xlu0.b32.cont [15/16] 0.0, 128
      %956 = vxpose.xlu0.b32.end [16/16] 0.0, 128
      %v957 = vpop.trf.xlu0
      %v958 = vpop.trf.xlu0
      %v959 = vpop.trf.xlu0
      %v960 = vpop.trf.xlu0
      %v961 = vpop.trf.xlu0
      %v962 = vpop.trf.xlu0
      %v963 = vpop.trf.xlu0
      %v964 = vpop.trf.xlu0
      %v965 = vpop.trf.xlu0
      %v966 = vpop.trf.xlu0
      %v967 = vpop.trf.xlu0
      %v968 = vpop.trf.xlu0
      %v969 = vpop.trf.xlu0
      %v970 = vpop.trf.xlu0
      %v971 = vpop.trf.xlu0
      %v972 = vpop.trf.xlu0
      %973 = vxpose.xlu0.b32.start [1/16] %v864, 128
      %974 = vxpose.xlu0.b32.cont [2/16] 0.0, 128
      %975 = vxpose.xlu0.b32.cont [3/16] 0.0, 128
      %976 = vxpose.xlu0.b32.cont [4/16] 0.0, 128
      %977 = vxpose.xlu0.b32.cont [5/16] 0.0, 128
      %978 = vxpose.xlu0.b32.cont [6/16] 0.0, 128
      %979 = vxpose.xlu0.b32.cont [7/16] 0.0, 128
      %980 = vxpose.xlu0.b32.cont [8/16] 0.0, 128
      %981 = vxpose.xlu0.b32.cont [9/16] 0.0, 128
      %982 = vxpose.xlu0.b32.cont [10/16] 0.0, 128
      %983 = vxpose.xlu0.b32.cont [11/16] 0.0, 128
      %984 = vxpose.xlu0.b32.cont [12/16] 0.0, 128
      %985 = vxpose.xlu0.b32.cont [13/16] 0.0, 128
      %986 = vxpose.xlu0.b32.cont [14/16] 0.0, 128
      %987 = vxpose.xlu0.b32.cont [15/16] 0.0, 128
      %988 = vxpose.xlu0.b32.end [16/16] 0.0, 128
      %v989 = vpop.trf.xlu0
      %v990 = vpop.trf.xlu0
      %v991 = vpop.trf.xlu0
      %v992 = vpop.trf.xlu0
      %v993 = vpop.trf.xlu0
      %v994 = vpop.trf.xlu0
      %v995 = vpop.trf.xlu0
      %v996 = vpop.trf.xlu0
      %v997 = vpop.trf.xlu0
      %v998 = vpop.trf.xlu0
      %v999 = vpop.trf.xlu0
      %v1000 = vpop.trf.xlu0
      %v1001 = vpop.trf.xlu0
      %v1002 = vpop.trf.xlu0
      %v1003 = vpop.trf.xlu0
      %v1004 = vpop.trf.xlu0
      %v1005 = vpack.c.bf16 %v893, %v893
      %v1006 = vpack.c.bf16 %v925, %v925
      %v1007 = vpack.c.bf16 %v957, %v957
      %v1008 = vpack.c.bf16 %v989, %v989
      %v1009 = vpack.c.bf16 %v865, %v865
      %v1010 = vpack.c.bf16 %v866, %v866
      %v1011 = vpack.c.bf16 %v867, %v867
      %v1012 = vpack.c.bf16 %v868, %v868
      %v1013 = vpack.c.bf16 %v869, %v869
      %v1014 = vpack.c.bf16 %v870, %v870
      %v1015 = vpack.c.bf16 %v871, %v871
      %v1016 = vpack.c.bf16 %v872, %v872
      %vm1017 = vcmask 64512
      %v1019 = vsel %vm1017, %v1005, 0
      %vm1021 = vcmask 1043456
      %v1023 = vsel %vm1021, %v1009, 0
      %1025 = vmatpush.bf16.msra.mxu0 0
      %1026 = vmatpush.bf16.msra.mxu0 0
      %1027 = vmatpush.bf16.msra.mxu0 0
      %1028 = vmatpush.bf16.msra.mxu0 0
      %1029 = vmatpush.bf16.msra.mxu0 0
      %1030 = vmatpush.bf16.msra.mxu0 0
      %1031 = vmatpush.bf16.msra.mxu0 0
      %1032 = vmatpush.bf16.msra.mxu0 %v1023
      %1033 = vmatmul.bf16.gmra.mxu0 %v1019
      %v1034 = vpop.f32.mrf.mxu0
      %v1035 = vadd.f32 0.0, %v1034
      %v1036 = vpop.f32.mrf.mxu0
      %1037 = vdwg.mxu0
      %v1039 = vsel %vm1017, %v1006, 0
      %v1042 = vsel %vm1021, %v1010, 0
      %1044 = vmatpush.bf16.msra.mxu0 0
      %1045 = vmatpush.bf16.msra.mxu0 0
      %1046 = vmatpush.bf16.msra.mxu0 0
      %1047 = vmatpush.bf16.msra.mxu0 0
      %1048 = vmatpush.bf16.msra.mxu0 0
      %1049 = vmatpush.bf16.msra.mxu0 0
      %1050 = vmatpush.bf16.msra.mxu0 0
      %1051 = vmatpush.bf16.msra.mxu0 %v1042
      %1052 = vmatmul.bf16.gmra.mxu0 %v1039
      %v1053 = vpop.f32.mrf.mxu0
      %v1054 = vadd.f32 0.0, %v1053
      %v1055 = vpop.f32.mrf.mxu0
      %1056 = vdwg.mxu0
      %v1058 = vsel %vm1017, %v1007, 0
      %v1061 = vsel %vm1021, %v1011, 0
      %1063 = vmatpush.bf16.msra.mxu0 0
      %1064 = vmatpush.bf16.msra.mxu0 0
      %1065 = vmatpush.bf16.msra.mxu0 0
      %1066 = vmatpush.bf16.msra.mxu0 0
      %1067 = vmatpush.bf16.msra.mxu0 0
      %1068 = vmatpush.bf16.msra.mxu0 0
      %1069 = vmatpush.bf16.msra.mxu0 0
      %1070 = vmatpush.bf16.msra.mxu0 %v1061
      %1071 = vmatmul.bf16.gmra.mxu0 %v1058
      %v1072 = vpop.f32.mrf.mxu0
      %v1073 = vadd.f32 0.0, %v1072
      %v1074 = vpop.f32.mrf.mxu0
      %1075 = vdwg.mxu0
      %v1077 = vsel %vm1017, %v1008, 0
      %v1080 = vsel %vm1021, %v1012, 0
      %1082 = vmatpush.bf16.msra.mxu0 0
      %1083 = vmatpush.bf16.msra.mxu0 0
      %1084 = vmatpush.bf16.msra.mxu0 0
      %1085 = vmatpush.bf16.msra.mxu0 0
      %1086 = vmatpush.bf16.msra.mxu0 0
      %1087 = vmatpush.bf16.msra.mxu0 0
      %1088 = vmatpush.bf16.msra.mxu0 0
      %1089 = vmatpush.bf16.msra.mxu0 %v1080
      %1090 = vmatmul.bf16.gmra.mxu0 %v1077
      %v1091 = vpop.f32.mrf.mxu0
      %v1092 = vadd.f32 0.0, %v1091
      %v1093 = vpop.f32.mrf.mxu0
      %1094 = vdwg.mxu0
      %v1095 = vmul.f32 %v1035, 0.35355338
      %v1096 = vmul.f32 %v1054, 0.35355338
      %v1097 = vmul.f32 %v1073, 0.35355338
      %v1098 = vmul.f32 %v1092, 0.35355338
      %v1099 = vadd.f32 %v1095, %v844
      %v1100 = vadd.f32 %v1096, %v844
      %v1101 = vadd.f32 %v1097, %v844
      %v1102 = vadd.f32 %v1098, %v844
      %v1103 = vsel %vm1017, %v1099, -inf
      %1104 = vmax.xlane.f32.xlu0 %v1103
      %v1105 = vpop.xlane.xlu0 %1104
      %v1106 = vsel %vm1017, %v1100, -inf
      %1107 = vmax.xlane.f32.xlu0 %v1106
      %v1108 = vpop.xlane.xlu0 %1107
      %v1109 = vsel %vm1017, %v1101, -inf
      %1110 = vmax.xlane.f32.xlu0 %v1109
      %v1111 = vpop.xlane.xlu0 %1110
      %v1112 = vsel %vm1017, %v1102, -inf
      %1113 = vmax.xlane.f32.xlu0 %v1112
      %v1114 = vpop.xlane.xlu0 %1113
      %v1115 = vsub.f32 %v1099, %v1105
      %v1116 = vsub.f32 %v1100, %v1108
      %v1117 = vsub.f32 %v1101, %v1111
      %v1118 = vsub.f32 %v1102, %v1114
      %v1119 = vmul.f32 %v1115, 1.442695
      %v1120 = vpow.pop %v1119
      %v1121 = vmul.f32 %v1116, 1.442695
      %v1122 = vpow.pop %v1121
      %v1123 = vmul.f32 %v1117, 1.442695
      %v1124 = vpow.pop %v1123
      %v1125 = vmul.f32 %v1118, 1.442695
      %v1126 = vpow.pop %v1125
      %v1127 = vsel %vm1017, %v1120, 0.0
      %1128 = vadd.xlane.f32.xlu0 %v1127
      %v1129 = vpop.xlane.xlu0 %1128
      %v1130 = vsel %vm1017, %v1122, 0.0
      %1131 = vadd.xlane.f32.xlu0 %v1130
      %v1132 = vpop.xlane.xlu0 %1131
      %v1133 = vsel %vm1017, %v1124, 0.0
      %1134 = vadd.xlane.f32.xlu0 %v1133
      %v1135 = vpop.xlane.xlu0 %1134
      %v1136 = vsel %vm1017, %v1126, 0.0
      %1137 = vadd.xlane.f32.xlu0 %v1136
      %v1138 = vpop.xlane.xlu0 %1137
      %v1139 = vrcp.pop %v1129
      %v1140 = vmul.f32 %v1129, %v1139
      %v1141 = vsub.f32 1.0, %v1140
      %v1142 = vmul.f32 %v1139, %v1141
      %v1143 = vadd.f32 %v1139, %v1142
      %vm1144 = vweird.f32 %v1129
      %vm1145 = vweird.f32 %v1139
      %vm1146 = vmor %vm1144, %vm1145
      %v1147 = vsel %vm1146, %v1139, %v1143
      %v1148 = vand.u32 2147483647, %v1129
      %vm1149 = vcmp.eq.f32.partialorder %v1148, 8.507059e+37
      %v1150 = vand.u32 %v1129, 2147483648
      %v1151 = vor.u32 1.1754944e-38, %v1150
      %v1152 = vsel %vm1149, %v1151, %v1147
      %v1153 = vmul.f32 %v1120, %v1152
      %v1154 = vrcp.pop %v1132
      %v1155 = vmul.f32 %v1132, %v1154
      %v1156 = vsub.f32 1.0, %v1155
      %v1157 = vmul.f32 %v1154, %v1156
      %v1158 = vadd.f32 %v1154, %v1157
      %vm1159 = vweird.f32 %v1132
      %vm1160 = vweird.f32 %v1154
      %vm1161 = vmor %vm1159, %vm1160
      %v1162 = vsel %vm1161, %v1154, %v1158
      %v1163 = vand.u32 2147483647, %v1132
      %vm1164 = vcmp.eq.f32.partialorder %v1163, 8.507059e+37
      %v1165 = vand.u32 %v1132, 2147483648
      %v1166 = vor.u32 1.1754944e-38, %v1165
      %v1167 = vsel %vm1164, %v1166, %v1162
      %v1168 = vmul.f32 %v1122, %v1167
      %v1169 = vrcp.pop %v1135
      %v1170 = vmul.f32 %v1135, %v1169
      %v1171 = vsub.f32 1.0, %v1170
      %v1172 = vmul.f32 %v1169, %v1171
      %v1173 = vadd.f32 %v1169, %v1172
      %vm1174 = vweird.f32 %v1135
      %vm1175 = vweird.f32 %v1169
      %vm1176 = vmor %vm1174, %vm1175
      %v1177 = vsel %vm1176, %v1169, %v1173
      %v1178 = vand.u32 2147483647, %v1135
      %vm1179 = vcmp.eq.f32.partialorder %v1178, 8.507059e+37
      %v1180 = vand.u32 %v1135, 2147483648
      %v1181 = vor.u32 1.1754944e-38, %v1180
      %v1182 = vsel %vm1179, %v1181, %v1177
      %v1183 = vmul.f32 %v1124, %v1182
      %v1184 = vrcp.pop %v1138
      %v1185 = vmul.f32 %v1138, %v1184
      %v1186 = vsub.f32 1.0, %v1185
      %v1187 = vmul.f32 %v1184, %v1186
      %v1188 = vadd.f32 %v1184, %v1187
      %vm1189 = vweird.f32 %v1138
      %vm1190 = vweird.f32 %v1184
      %vm1191 = vmor %vm1189, %vm1190
      %v1192 = vsel %vm1191, %v1184, %v1188
      %v1193 = vand.u32 2147483647, %v1138
      %vm1194 = vcmp.eq.f32.partialorder %v1193, 8.507059e+37
      %v1195 = vand.u32 %v1138, 2147483648
      %v1196 = vor.u32 1.1754944e-38, %v1195
      %v1197 = vsel %vm1194, %v1196, %v1192
      %v1198 = vmul.f32 %v1126, %v1197
      %v1199 = vpack.c.bf16 %v1153, %v1153
      %v1200 = vpack.c.bf16 %v1168, %v1168
      %v1201 = vpack.c.bf16 %v1183, %v1183
      %v1202 = vpack.c.bf16 %v1198, %v1198
      %v1204 = vsel %vm1017, %v1013, 0
      %v1207 = vsel %vm1017, %v1199, 0
      %1209 = vmatpush.bf16.xpose.msra.mxu0 0
      %1210 = vmatpush.bf16.xpose.msra.mxu0 0
      %1211 = vmatpush.bf16.xpose.msra.mxu0 0
      %1212 = vmatpush.bf16.xpose.msra.mxu0 0
      %1213 = vmatpush.bf16.xpose.msra.mxu0 0
      %1214 = vmatpush.bf16.xpose.msra.mxu0 0
      %1215 = vmatpush.bf16.xpose.msra.mxu0 0
      %1216 = vmatpush.bf16.xpose.msra.mxu0 %v1207
      %1217 = vmatmul.bf16.gmra.mxu0 %v1204
      %v1218 = vpop.f32.mrf.mxu0
      %v1219 = vadd.f32 0.0, %v1218
      %v1220 = vpop.f32.mrf.mxu0
      %1221 = vdwg.mxu0
      %v1223 = vsel %vm1017, %v1014, 0
      %v1226 = vsel %vm1017, %v1200, 0
      %1228 = vmatpush.bf16.xpose.msra.mxu0 0
      %1229 = vmatpush.bf16.xpose.msra.mxu0 0
      %1230 = vmatpush.bf16.xpose.msra.mxu0 0
      %1231 = vmatpush.bf16.xpose.msra.mxu0 0
      %1232 = vmatpush.bf16.xpose.msra.mxu0 0
      %1233 = vmatpush.bf16.xpose.msra.mxu0 0
      %1234 = vmatpush.bf16.xpose.msra.mxu0 0
      %1235 = vmatpush.bf16.xpose.msra.mxu0 %v1226
      %1236 = vmatmul.bf16.gmra.mxu0 %v1223
      %v1237 = vpop.f32.mrf.mxu0
      %v1238 = vadd.f32 0.0, %v1237
      %v1239 = vpop.f32.mrf.mxu0
      %1240 = vdwg.mxu0
      %v1242 = vsel %vm1017, %v1015, 0
      %v1245 = vsel %vm1017, %v1201, 0
      %1247 = vmatpush.bf16.xpose.msra.mxu0 0
      %1248 = vmatpush.bf16.xpose.msra.mxu0 0
      %1249 = vmatpush.bf16.xpose.msra.mxu0 0
      %1250 = vmatpush.bf16.xpose.msra.mxu0 0
      %1251 = vmatpush.bf16.xpose.msra.mxu0 0
      %1252 = vmatpush.bf16.xpose.msra.mxu0 0
      %1253 = vmatpush.bf16.xpose.msra.mxu0 0
      %1254 = vmatpush.bf16.xpose.msra.mxu0 %v1245
      %1255 = vmatmul.bf16.gmra.mxu0 %v1242
      %v1256 = vpop.f32.mrf.mxu0
      %v1257 = vadd.f32 0.0, %v1256
      %v1258 = vpop.f32.mrf.mxu0
      %1259 = vdwg.mxu0
      %v1261 = vsel %vm1017, %v1016, 0
      %v1264 = vsel %vm1017, %v1202, 0
      %1266 = vmatpush.bf16.xpose.msra.mxu0 0
      %1267 = vmatpush.bf16.xpose.msra.mxu0 0
      %1268 = vmatpush.bf16.xpose.msra.mxu0 0
      %1269 = vmatpush.bf16.xpose.msra.mxu0 0
      %1270 = vmatpush.bf16.xpose.msra.mxu0 0
      %1271 = vmatpush.bf16.xpose.msra.mxu0 0
      %1272 = vmatpush.bf16.xpose.msra.mxu0 0
      %1273 = vmatpush.bf16.xpose.msra.mxu0 %v1264
      %1274 = vmatmul.bf16.gmra.mxu0 %v1261
      %v1275 = vpop.f32.mrf.mxu0
      %v1276 = vadd.f32 0.0, %v1275
      %v1277 = vpop.f32.mrf.mxu0
      %1278 = vdwg.mxu0
      %1279 = vxpose.xlu0.b32.start [1/16] %v1219, 128
      %1280 = vxpose.xlu0.b32.cont [2/16] %v1238, 128
      %1281 = vxpose.xlu0.b32.cont [3/16] %v1257, 128
      %1282 = vxpose.xlu0.b32.cont [4/16] %v1276, 128
      %1283 = vxpose.xlu0.b32.cont [5/16] 0.0, 128
      %1284 = vxpose.xlu0.b32.cont [6/16] 0.0, 128
      %1285 = vxpose.xlu0.b32.cont [7/16] 0.0, 128
      %1286 = vxpose.xlu0.b32.cont [8/16] 0.0, 128
      %1287 = vxpose.xlu0.b32.cont [9/16] 0.0, 128
      %1288 = vxpose.xlu0.b32.cont [10/16] 0.0, 128
      %1289 = vxpose.xlu0.b32.cont [11/16] 0.0, 128
      %1290 = vxpose.xlu0.b32.cont [12/16] 0.0, 128
      %1291 = vxpose.xlu0.b32.cont [13/16] 0.0, 128
      %1292 = vxpose.xlu0.b32.cont [14/16] 0.0, 128
      %1293 = vxpose.xlu0.b32.cont [15/16] 0.0, 128
      %1294 = vxpose.xlu0.b32.end [16/16] 0.0, 128
      %v1295 = vpop.trf.xlu0
      %v1296 = vpop.trf.xlu0
      %v1297 = vpop.trf.xlu0
      %v1298 = vpop.trf.xlu0
      %v1299 = vpop.trf.xlu0
      %v1300 = vpop.trf.xlu0
      %v1301 = vpop.trf.xlu0
      %v1302 = vpop.trf.xlu0
      %v1303 = vpop.trf.xlu0
      %v1304 = vpop.trf.xlu0
      %v1305 = vpop.trf.xlu0
      %v1306 = vpop.trf.xlu0
      %v1307 = vpop.trf.xlu0
      %v1308 = vpop.trf.xlu0
      %v1309 = vpop.trf.xlu0
      %v1310 = vpop.trf.xlu0
      %v1311 = vpack.c.bf16 %v1295, %v1295
      %v1316 = vunpack.c.l.b16 %v801
      %v1317 = vunpack.c.l.b16 %v802
      %v1318 = vunpack.c.l.b16 %v803
      %v1319 = vunpack.c.l.b16 %v804
      %v1320 = vpack.c.b16 %v1317, %v1316
      %v1321 = vpack.c.b16 %v1319, %v1318
      %v1325 = vsel %vm775, %v1311, 0
      %1327 = vmatpush.bf16.msra.mxu0 0
      %1328 = vmatpush.bf16.msra.mxu0 0
      %1329 = vmatpush.bf16.msra.mxu0 0
      %1330 = vmatpush.bf16.msra.mxu0 0
      %1331 = vmatpush.bf16.msra.mxu0 0
      %1332 = vmatpush.bf16.msra.mxu0 0
      %1333 = vmatpush.bf16.msra.mxu0 %v1321
      %1334 = vmatpush.bf16.msra.mxu0 %v1320
      %1335 = vmatmul.bf16.gmra.mxu0 %v1325
      %v1336 = vpop.f32.mrf.mxu0
      %v1337 = vadd.f32 0.0, %v1336
      %v1338 = vpop.f32.mrf.mxu0
      %1339 = vdwg.mxu0
      %v1340 = vperm.slane %v793, 1
      %1341 = vxpose.xlu0.b32.start [1/16] %v1340, 128
      %1342 = vxpose.xlu0.b32.cont [2/16] 0.0, 128
      %1343 = vxpose.xlu0.b32.cont [3/16] 0.0, 128
      %1344 = vxpose.xlu0.b32.cont [4/16] 0.0, 128
      %1345 = vxpose.xlu0.b32.cont [5/16] 0.0, 128
      %1346 = vxpose.xlu0.b32.cont [6/16] 0.0, 128
      %1347 = vxpose.xlu0.b32.cont [7/16] 0.0, 128
      %1348 = vxpose.xlu0.b32.cont [8/16] 0.0, 128
      %1349 = vxpose.xlu0.b32.cont [9/16] 0.0, 128
      %1350 = vxpose.xlu0.b32.cont [10/16] 0.0, 128
      %1351 = vxpose.xlu0.b32.cont [11/16] 0.0, 128
      %1352 = vxpose.xlu0.b32.cont [12/16] 0.0, 128
      %1353 = vxpose.xlu0.b32.cont [13/16] 0.0, 128
      %1354 = vxpose.xlu0.b32.cont [14/16] 0.0, 128
      %1355 = vxpose.xlu0.b32.cont [15/16] 0.0, 128
      %1356 = vxpose.xlu0.b32.end [16/16] 0.0, 128
      %v1357 = vpop.trf.xlu0
      %v1358 = vpop.trf.xlu0
      %v1359 = vpop.trf.xlu0
      %v1360 = vpop.trf.xlu0
      %v1361 = vpop.trf.xlu0
      %v1362 = vpop.trf.xlu0
      %v1363 = vpop.trf.xlu0
      %v1364 = vpop.trf.xlu0
      %v1365 = vpop.trf.xlu0
      %v1366 = vpop.trf.xlu0
      %v1367 = vpop.trf.xlu0
      %v1368 = vpop.trf.xlu0
      %v1369 = vpop.trf.xlu0
      %v1370 = vpop.trf.xlu0
      %v1371 = vpop.trf.xlu0
      %v1372 = vpop.trf.xlu0
      %v1373 = vsub.f32 1.0, %v1340
      %v1374 = vsub.f32 1.0, %v1357
      %v1375 = vmul.f32 %v1373, %v1374
      %v1376 = vmul.f32 %v1357, %v800
      %v1377 = vadd.f32 %v1375, %v1376
      %v1378 = vsub.f32 1.0, %v1377
      %v1379 = vmul.f32 %v1378, -10000.0
      %1380 = vxpose.xlu0.b32.start [1/16] %v791, 128
      %1381 = vxpose.xlu0.b32.cont [2/16] 0.0, 128
      %1382 = vxpose.xlu0.b32.cont [3/16] 0.0, 128
      %1383 = vxpose.xlu0.b32.cont [4/16] 0.0, 128
      %1384 = vxpose.xlu0.b32.cont [5/16] 0.0, 128
      %1385 = vxpose.xlu0.b32.cont [6/16] 0.0, 128
      %1386 = vxpose.xlu0.b32.cont [7/16] 0.0, 128
      %1387 = vxpose.xlu0.b32.cont [8/16] 0.0, 128
      %1388 = vxpose.xlu0.b32.cont [9/16] 0.0, 128
      %1389 = vxpose.xlu0.b32.cont [10/16] 0.0, 128
      %1390 = vxpose.xlu0.b32.cont [11/16] 0.0, 128
      %1391 = vxpose.xlu0.b32.cont [12/16] 0.0, 128
      %1392 = vxpose.xlu0.b32.cont [13/16] 0.0, 128
      %1393 = vxpose.xlu0.b32.cont [14/16] 0.0, 128
      %1394 = vxpose.xlu0.b32.cont [15/16] 0.0, 128
      %1395 = vxpose.xlu0.b32.end [16/16] 0.0, 128
      %v1396 = vpop.trf.xlu0
      %v1397 = vpop.trf.xlu0
      %v1398 = vpop.trf.xlu0
      %v1399 = vpop.trf.xlu0
      %v1400 = vpop.trf.xlu0
      %v1401 = vpop.trf.xlu0
      %v1402 = vpop.trf.xlu0
      %v1403 = vpop.trf.xlu0
      %v1404 = vpop.trf.xlu0
      %v1405 = vpop.trf.xlu0
      %v1406 = vpop.trf.xlu0
      %v1407 = vpop.trf.xlu0
      %v1408 = vpop.trf.xlu0
      %v1409 = vpop.trf.xlu0
      %v1410 = vpop.trf.xlu0
      %v1411 = vpop.trf.xlu0
      %1412 = vxpose.xlu0.b32.start [1/16] %v1396, 128
      %1413 = vxpose.xlu0.b32.cont [2/16] 0.0, 128
      %1414 = vxpose.xlu0.b32.cont [3/16] 0.0, 128
      %1415 = vxpose.xlu0.b32.cont [4/16] 0.0, 128
      %1416 = vxpose.xlu0.b32.cont [5/16] 0.0, 128
      %1417 = vxpose.xlu0.b32.cont [6/16] 0.0, 128
      %1418 = vxpose.xlu0.b32.cont [7/16] 0.0, 128
      %1419 = vxpose.xlu0.b32.cont [8/16] 0.0, 128
      %1420 = vxpose.xlu0.b32.cont [9/16] 0.0, 128
      %1421 = vxpose.xlu0.b32.cont [10/16] 0.0, 128
      %1422 = vxpose.xlu0.b32.cont [11/16] 0.0, 128
      %1423 = vxpose.xlu0.b32.cont [12/16] 0.0, 128
      %1424 = vxpose.xlu0.b32.cont [13/16] 0.0, 128
      %1425 = vxpose.xlu0.b32.cont [14/16] 0.0, 128
      %1426 = vxpose.xlu0.b32.cont [15/16] 0.0, 128
      %1427 = vxpose.xlu0.b32.end [16/16] 0.0, 128
      %v1428 = vpop.trf.xlu0
      %v1429 = vpop.trf.xlu0
      %v1430 = vpop.trf.xlu0
      %v1431 = vpop.trf.xlu0
      %v1432 = vpop.trf.xlu0
      %v1433 = vpop.trf.xlu0
      %v1434 = vpop.trf.xlu0
      %v1435 = vpop.trf.xlu0
      %v1436 = vpop.trf.xlu0
      %v1437 = vpop.trf.xlu0
      %v1438 = vpop.trf.xlu0
      %v1439 = vpop.trf.xlu0
      %v1440 = vpop.trf.xlu0
      %v1441 = vpop.trf.xlu0
      %v1442 = vpop.trf.xlu0
      %v1443 = vpop.trf.xlu0
      %1444 = vxpose.xlu0.b32.start [1/16] %v1397, 128
      %1445 = vxpose.xlu0.b32.cont [2/16] 0.0, 128
      %1446 = vxpose.xlu0.b32.cont [3/16] 0.0, 128
      %1447 = vxpose.xlu0.b32.cont [4/16] 0.0, 128
      %1448 = vxpose.xlu0.b32.cont [5/16] 0.0, 128
      %1449 = vxpose.xlu0.b32.cont [6/16] 0.0, 128
      %1450 = vxpose.xlu0.b32.cont [7/16] 0.0, 128
      %1451 = vxpose.xlu0.b32.cont [8/16] 0.0, 128
      %1452 = vxpose.xlu0.b32.cont [9/16] 0.0, 128
      %1453 = vxpose.xlu0.b32.cont [10/16] 0.0, 128
      %1454 = vxpose.xlu0.b32.cont [11/16] 0.0, 128
      %1455 = vxpose.xlu0.b32.cont [12/16] 0.0, 128
      %1456 = vxpose.xlu0.b32.cont [13/16] 0.0, 128
      %1457 = vxpose.xlu0.b32.cont [14/16] 0.0, 128
      %1458 = vxpose.xlu0.b32.cont [15/16] 0.0, 128
      %1459 = vxpose.xlu0.b32.end [16/16] 0.0, 128
      %v1460 = vpop.trf.xlu0
      %v1461 = vpop.trf.xlu0
      %v1462 = vpop.trf.xlu0
      %v1463 = vpop.trf.xlu0
      %v1464 = vpop.trf.xlu0
      %v1465 = vpop.trf.xlu0
      %v1466 = vpop.trf.xlu0
      %v1467 = vpop.trf.xlu0
      %v1468 = vpop.trf.xlu0
      %v1469 = vpop.trf.xlu0
      %v1470 = vpop.trf.xlu0
      %v1471 = vpop.trf.xlu0
      %v1472 = vpop.trf.xlu0
      %v1473 = vpop.trf.xlu0
      %v1474 = vpop.trf.xlu0
      %v1475 = vpop.trf.xlu0
      %1476 = vxpose.xlu0.b32.start [1/16] %v1398, 128
      %1477 = vxpose.xlu0.b32.cont [2/16] 0.0, 128
      %1478 = vxpose.xlu0.b32.cont [3/16] 0.0, 128
      %1479 = vxpose.xlu0.b32.cont [4/16] 0.0, 128
      %1480 = vxpose.xlu0.b32.cont [5/16] 0.0, 128
      %1481 = vxpose.xlu0.b32.cont [6/16] 0.0, 128
      %1482 = vxpose.xlu0.b32.cont [7/16] 0.0, 128
      %1483 = vxpose.xlu0.b32.cont [8/16] 0.0, 128
      %1484 = vxpose.xlu0.b32.cont [9/16] 0.0, 128
      %1485 = vxpose.xlu0.b32.cont [10/16] 0.0, 128
      %1486 = vxpose.xlu0.b32.cont [11/16] 0.0, 128
      %1487 = vxpose.xlu0.b32.cont [12/16] 0.0, 128
      %1488 = vxpose.xlu0.b32.cont [13/16] 0.0, 128
      %1489 = vxpose.xlu0.b32.cont [14/16] 0.0, 128
      %1490 = vxpose.xlu0.b32.cont [15/16] 0.0, 128
      %1491 = vxpose.xlu0.b32.end [16/16] 0.0, 128
      %v1492 = vpop.trf.xlu0
      %v1493 = vpop.trf.xlu0
      %v1494 = vpop.trf.xlu0
      %v1495 = vpop.trf.xlu0
      %v1496 = vpop.trf.xlu0
      %v1497 = vpop.trf.xlu0
      %v1498 = vpop.trf.xlu0
      %v1499 = vpop.trf.xlu0
      %v1500 = vpop.trf.xlu0
      %v1501 = vpop.trf.xlu0
      %v1502 = vpop.trf.xlu0
      %v1503 = vpop.trf.xlu0
      %v1504 = vpop.trf.xlu0
      %v1505 = vpop.trf.xlu0
      %v1506 = vpop.trf.xlu0
      %v1507 = vpop.trf.xlu0
      %1508 = vxpose.xlu0.b32.start [1/16] %v1399, 128
      %1509 = vxpose.xlu0.b32.cont [2/16] 0.0, 128
      %1510 = vxpose.xlu0.b32.cont [3/16] 0.0, 128
      %1511 = vxpose.xlu0.b32.cont [4/16] 0.0, 128
      %1512 = vxpose.xlu0.b32.cont [5/16] 0.0, 128
      %1513 = vxpose.xlu0.b32.cont [6/16] 0.0, 128
      %1514 = vxpose.xlu0.b32.cont [7/16] 0.0, 128
      %1515 = vxpose.xlu0.b32.cont [8/16] 0.0, 128
      %1516 = vxpose.xlu0.b32.cont [9/16] 0.0, 128
      %1517 = vxpose.xlu0.b32.cont [10/16] 0.0, 128
      %1518 = vxpose.xlu0.b32.cont [11/16] 0.0, 128
      %1519 = vxpose.xlu0.b32.cont [12/16] 0.0, 128
      %1520 = vxpose.xlu0.b32.cont [13/16] 0.0, 128
      %1521 = vxpose.xlu0.b32.cont [14/16] 0.0, 128
      %1522 = vxpose.xlu0.b32.cont [15/16] 0.0, 128
      %1523 = vxpose.xlu0.b32.end [16/16] 0.0, 128
      %v1524 = vpop.trf.xlu0
      %v1525 = vpop.trf.xlu0
      %v1526 = vpop.trf.xlu0
      %v1527 = vpop.trf.xlu0
      %v1528 = vpop.trf.xlu0
      %v1529 = vpop.trf.xlu0
      %v1530 = vpop.trf.xlu0
      %v1531 = vpop.trf.xlu0
      %v1532 = vpop.trf.xlu0
      %v1533 = vpop.trf.xlu0
      %v1534 = vpop.trf.xlu0
      %v1535 = vpop.trf.xlu0
      %v1536 = vpop.trf.xlu0
      %v1537 = vpop.trf.xlu0
      %v1538 = vpop.trf.xlu0
      %v1539 = vpop.trf.xlu0
      %v1540 = vpack.c.bf16 %v1428, %v1428
      %v1541 = vpack.c.bf16 %v1460, %v1460
      %v1542 = vpack.c.bf16 %v1492, %v1492
      %v1543 = vpack.c.bf16 %v1524, %v1524
      %v1544 = vpack.c.bf16 %v1400, %v1400
      %v1545 = vpack.c.bf16 %v1401, %v1401
      %v1546 = vpack.c.bf16 %v1402, %v1402
      %v1547 = vpack.c.bf16 %v1403, %v1403
      %v1548 = vpack.c.bf16 %v1404, %v1404
      %v1549 = vpack.c.bf16 %v1405, %v1405
      %v1550 = vpack.c.bf16 %v1406, %v1406
      %v1551 = vpack.c.bf16 %v1407, %v1407
      %v1553 = vsel %vm1017, %v1540, 0
      %v1556 = vsel %vm1021, %v1544, 0
      %1558 = vmatpush.bf16.msra.mxu0 0
      %1559 = vmatpush.bf16.msra.mxu0 0
      %1560 = vmatpush.bf16.msra.mxu0 0
      %1561 = vmatpush.bf16.msra.mxu0 0
      %1562 = vmatpush.bf16.msra.mxu0 0
      %1563 = vmatpush.bf16.msra.mxu0 0
      %1564 = vmatpush.bf16.msra.mxu0 0
      %1565 = vmatpush.bf16.msra.mxu0 %v1556
      %1566 = vmatmul.bf16.gmra.mxu0 %v1553
      %v1567 = vpop.f32.mrf.mxu0
      %v1568 = vadd.f32 0.0, %v1567
      %v1569 = vpop.f32.mrf.mxu0
      %1570 = vdwg.mxu0
      %v1572 = vsel %vm1017, %v1541, 0
      %v1575 = vsel %vm1021, %v1545, 0
      %1577 = vmatpush.bf16.msra.mxu0 0
      %1578 = vmatpush.bf16.msra.mxu0 0
      %1579 = vmatpush.bf16.msra.mxu0 0
      %1580 = vmatpush.bf16.msra.mxu0 0
      %1581 = vmatpush.bf16.msra.mxu0 0
      %1582 = vmatpush.bf16.msra.mxu0 0
      %1583 = vmatpush.bf16.msra.mxu0 0
      %1584 = vmatpush.bf16.msra.mxu0 %v1575
      %1585 = vmatmul.bf16.gmra.mxu0 %v1572
      %v1586 = vpop.f32.mrf.mxu0
      %v1587 = vadd.f32 0.0, %v1586
      %v1588 = vpop.f32.mrf.mxu0
      %1589 = vdwg.mxu0
      %v1591 = vsel %vm1017, %v1542, 0
      %v1594 = vsel %vm1021, %v1546, 0
      %1596 = vmatpush.bf16.msra.mxu0 0
      %1597 = vmatpush.bf16.msra.mxu0 0
      %1598 = vmatpush.bf16.msra.mxu0 0
      %1599 = vmatpush.bf16.msra.mxu0 0
      %1600 = vmatpush.bf16.msra.mxu0 0
      %1601 = vmatpush.bf16.msra.mxu0 0
      %1602 = vmatpush.bf16.msra.mxu0 0
      %1603 = vmatpush.bf16.msra.mxu0 %v1594
      %1604 = vmatmul.bf16.gmra.mxu0 %v1591
      %v1605 = vpop.f32.mrf.mxu0
      %v1606 = vadd.f32 0.0, %v1605
      %v1607 = vpop.f32.mrf.mxu0
      %1608 = vdwg.mxu0
      %v1610 = vsel %vm1017, %v1543, 0
      %v1613 = vsel %vm1021, %v1547, 0
      %1615 = vmatpush.bf16.msra.mxu0 0
      %1616 = vmatpush.bf16.msra.mxu0 0
      %1617 = vmatpush.bf16.msra.mxu0 0
      %1618 = vmatpush.bf16.msra.mxu0 0
      %1619 = vmatpush.bf16.msra.mxu0 0
      %1620 = vmatpush.bf16.msra.mxu0 0
      %1621 = vmatpush.bf16.msra.mxu0 0
      %1622 = vmatpush.bf16.msra.mxu0 %v1613
      %1623 = vmatmul.bf16.gmra.mxu0 %v1610
      %v1624 = vpop.f32.mrf.mxu0
      %v1625 = vadd.f32 0.0, %v1624
      %v1626 = vpop.f32.mrf.mxu0
      %1627 = vdwg.mxu0
      %v1628 = vmul.f32 %v1568, 0.35355338
      %v1629 = vmul.f32 %v1587, 0.35355338
      %v1630 = vmul.f32 %v1606, 0.35355338
      %v1631 = vmul.f32 %v1625, 0.35355338
      %v1632 = vadd.f32 %v1628, %v1379
      %v1633 = vadd.f32 %v1629, %v1379
      %v1634 = vadd.f32 %v1630, %v1379
      %v1635 = vadd.f32 %v1631, %v1379
      %v1636 = vsel %vm1017, %v1632, -inf
      %1637 = vmax.xlane.f32.xlu0 %v1636
      %v1638 = vpop.xlane.xlu0 %1637
      %v1639 = vsel %vm1017, %v1633, -inf
      %1640 = vmax.xlane.f32.xlu0 %v1639
      %v1641 = vpop.xlane.xlu0 %1640
      %v1642 = vsel %vm1017, %v1634, -inf
      %1643 = vmax.xlane.f32.xlu0 %v1642
      %v1644 = vpop.xlane.xlu0 %1643
      %v1645 = vsel %vm1017, %v1635, -inf
      %1646 = vmax.xlane.f32.xlu0 %v1645
      %v1647 = vpop.xlane.xlu0 %1646
      %v1648 = vsub.f32 %v1632, %v1638
      %v1649 = vsub.f32 %v1633, %v1641
      %v1650 = vsub.f32 %v1634, %v1644
      %v1651 = vsub.f32 %v1635, %v1647
      %v1652 = vmul.f32 %v1648, 1.442695
      %v1653 = vpow.pop %v1652
      %v1654 = vmul.f32 %v1649, 1.442695
      %v1655 = vpow.pop %v1654
      %v1656 = vmul.f32 %v1650, 1.442695
      %v1657 = vpow.pop %v1656
      %v1658 = vmul.f32 %v1651, 1.442695
      %v1659 = vpow.pop %v1658
      %v1660 = vsel %vm1017, %v1653, 0.0
      %1661 = vadd.xlane.f32.xlu0 %v1660
      %v1662 = vpop.xlane.xlu0 %1661
      %v1663 = vsel %vm1017, %v1655, 0.0
      %1664 = vadd.xlane.f32.xlu0 %v1663
      %v1665 = vpop.xlane.xlu0 %1664
      %v1666 = vsel %vm1017, %v1657, 0.0
      %1667 = vadd.xlane.f32.xlu0 %v1666
      %v1668 = vpop.xlane.xlu0 %1667
      %v1669 = vsel %vm1017, %v1659, 0.0
      %1670 = vadd.xlane.f32.xlu0 %v1669
      %v1671 = vpop.xlane.xlu0 %1670
      %v1672 = vrcp.pop %v1662
      %v1673 = vmul.f32 %v1662, %v1672
      %v1674 = vsub.f32 1.0, %v1673
      %v1675 = vmul.f32 %v1672, %v1674
      %v1676 = vadd.f32 %v1672, %v1675
      %vm1677 = vweird.f32 %v1662
      %vm1678 = vweird.f32 %v1672
      %vm1679 = vmor %vm1677, %vm1678
      %v1680 = vsel %vm1679, %v1672, %v1676
      %v1681 = vand.u32 2147483647, %v1662
      %vm1682 = vcmp.eq.f32.partialorder %v1681, 8.507059e+37
      %v1683 = vand.u32 %v1662, 2147483648
      %v1684 = vor.u32 1.1754944e-38, %v1683
      %v1685 = vsel %vm1682, %v1684, %v1680
      %v1686 = vmul.f32 %v1653, %v1685
      %v1687 = vrcp.pop %v1665
      %v1688 = vmul.f32 %v1665, %v1687
      %v1689 = vsub.f32 1.0, %v1688
      %v1690 = vmul.f32 %v1687, %v1689
      %v1691 = vadd.f32 %v1687, %v1690
      %vm1692 = vweird.f32 %v1665
      %vm1693 = vweird.f32 %v1687
      %vm1694 = vmor %vm1692, %vm1693
      %v1695 = vsel %vm1694, %v1687, %v1691
      %v1696 = vand.u32 2147483647, %v1665
      %vm1697 = vcmp.eq.f32.partialorder %v1696, 8.507059e+37
      %v1698 = vand.u32 %v1665, 2147483648
      %v1699 = vor.u32 1.1754944e-38, %v1698
      %v1700 = vsel %vm1697, %v1699, %v1695
      %v1701 = vmul.f32 %v1655, %v1700
      %v1702 = vrcp.pop %v1668
      %v1703 = vmul.f32 %v1668, %v1702
      %v1704 = vsub.f32 1.0, %v1703
      %v1705 = vmul.f32 %v1702, %v1704
      %v1706 = vadd.f32 %v1702, %v1705
      %vm1707 = vweird.f32 %v1668
      %vm1708 = vweird.f32 %v1702
      %vm1709 = vmor %vm1707, %vm1708
      %v1710 = vsel %vm1709, %v1702, %v1706
      %v1711 = vand.u32 2147483647, %v1668
      %vm1712 = vcmp.eq.f32.partialorder %v1711, 8.507059e+37
      %v1713 = vand.u32 %v1668, 2147483648
      %v1714 = vor.u32 1.1754944e-38, %v1713
      %v1715 = vsel %vm1712, %v1714, %v1710
      %v1716 = vmul.f32 %v1657, %v1715
      %v1717 = vrcp.pop %v1671
      %v1718 = vmul.f32 %v1671, %v1717
      %v1719 = vsub.f32 1.0, %v1718
      %v1720 = vmul.f32 %v1717, %v1719
      %v1721 = vadd.f32 %v1717, %v1720
      %vm1722 = vweird.f32 %v1671
      %vm1723 = vweird.f32 %v1717
      %vm1724 = vmor %vm1722, %vm1723
      %v1725 = vsel %vm1724, %v1717, %v1721
      %v1726 = vand.u32 2147483647, %v1671
      %vm1727 = vcmp.eq.f32.partialorder %v1726, 8.507059e+37
      %v1728 = vand.u32 %v1671, 2147483648
      %v1729 = vor.u32 1.1754944e-38, %v1728
      %v1730 = vsel %vm1727, %v1729, %v1725
      %v1731 = vmul.f32 %v1659, %v1730
      %v1732 = vpack.c.bf16 %v1686, %v1686
      %v1733 = vpack.c.bf16 %v1701, %v1701
      %v1734 = vpack.c.bf16 %v1716, %v1716
      %v1735 = vpack.c.bf16 %v1731, %v1731
      %v1737 = vsel %vm1017, %v1548, 0
      %v1740 = vsel %vm1017, %v1732, 0
      %1742 = vmatpush.bf16.xpose.msra.mxu0 0
      %1743 = vmatpush.bf16.xpose.msra.mxu0 0
      %1744 = vmatpush.bf16.xpose.msra.mxu0 0
      %1745 = vmatpush.bf16.xpose.msra.mxu0 0
      %1746 = vmatpush.bf16.xpose.msra.mxu0 0
      %1747 = vmatpush.bf16.xpose.msra.mxu0 0
      %1748 = vmatpush.bf16.xpose.msra.mxu0 0
      %1749 = vmatpush.bf16.xpose.msra.mxu0 %v1740
      %1750 = vmatmul.bf16.gmra.mxu0 %v1737
      %v1751 = vpop.f32.mrf.mxu0
      %v1752 = vadd.f32 0.0, %v1751
      %v1753 = vpop.f32.mrf.mxu0
      %1754 = vdwg.mxu0
      %v1756 = vsel %vm1017, %v1549, 0
      %v1759 = vsel %vm1017, %v1733, 0
      %1761 = vmatpush.bf16.xpose.msra.mxu0 0
      %1762 = vmatpush.bf16.xpose.msra.mxu0 0
      %1763 = vmatpush.bf16.xpose.msra.mxu0 0
      %1764 = vmatpush.bf16.xpose.msra.mxu0 0
      %1765 = vmatpush.bf16.xpose.msra.mxu0 0
      %1766 = vmatpush.bf16.xpose.msra.mxu0 0
      %1767 = vmatpush.bf16.xpose.msra.mxu0 0
      %1768 = vmatpush.bf16.xpose.msra.mxu0 %v1759
      %1769 = vmatmul.bf16.gmra.mxu0 %v1756
      %v1770 = vpop.f32.mrf.mxu0
      %v1771 = vadd.f32 0.0, %v1770
      %v1772 = vpop.f32.mrf.mxu0
      %1773 = vdwg.mxu0
      %v1775 = vsel %vm1017, %v1550, 0
      %v1778 = vsel %vm1017, %v1734, 0
      %1780 = vmatpush.bf16.xpose.msra.mxu0 0
      %1781 = vmatpush.bf16.xpose.msra.mxu0 0
      %1782 = vmatpush.bf16.xpose.msra.mxu0 0
      %1783 = vmatpush.bf16.xpose.msra.mxu0 0
      %1784 = vmatpush.bf16.xpose.msra.mxu0 0
      %1785 = vmatpush.bf16.xpose.msra.mxu0 0
      %1786 = vmatpush.bf16.xpose.msra.mxu0 0
      %1787 = vmatpush.bf16.xpose.msra.mxu0 %v1778
      %1788 = vmatmul.bf16.gmra.mxu0 %v1775
      %v1789 = vpop.f32.mrf.mxu0
      %v1790 = vadd.f32 0.0, %v1789
      %v1791 = vpop.f32.mrf.mxu0
      %1792 = vdwg.mxu0
      %v1794 = vsel %vm1017, %v1551, 0
      %v1797 = vsel %vm1017, %v1735, 0
      %1799 = vmatpush.bf16.xpose.msra.mxu0 0
      %1800 = vmatpush.bf16.xpose.msra.mxu0 0
      %1801 = vmatpush.bf16.xpose.msra.mxu0 0
      %1802 = vmatpush.bf16.xpose.msra.mxu0 0
      %1803 = vmatpush.bf16.xpose.msra.mxu0 0
      %1804 = vmatpush.bf16.xpose.msra.mxu0 0
      %1805 = vmatpush.bf16.xpose.msra.mxu0 0
      %1806 = vmatpush.bf16.xpose.msra.mxu0 %v1797
      %1807 = vmatmul.bf16.gmra.mxu0 %v1794
      %v1808 = vpop.f32.mrf.mxu0
      %v1809 = vadd.f32 0.0, %v1808
      %v1810 = vpop.f32.mrf.mxu0
      %1811 = vdwg.mxu0
      %1812 = vxpose.xlu0.b32.start [1/16] %v1752, 128
      %1813 = vxpose.xlu0.b32.cont [2/16] %v1771, 128
      %1814 = vxpose.xlu0.b32.cont [3/16] %v1790, 128
      %1815 = vxpose.xlu0.b32.cont [4/16] %v1809, 128
      %1816 = vxpose.xlu0.b32.cont [5/16] 0.0, 128
      %1817 = vxpose.xlu0.b32.cont [6/16] 0.0, 128
      %1818 = vxpose.xlu0.b32.cont [7/16] 0.0, 128
      %1819 = vxpose.xlu0.b32.cont [8/16] 0.0, 128
      %1820 = vxpose.xlu0.b32.cont [9/16] 0.0, 128
      %1821 = vxpose.xlu0.b32.cont [10/16] 0.0, 128
      %1822 = vxpose.xlu0.b32.cont [11/16] 0.0, 128
      %1823 = vxpose.xlu0.b32.cont [12/16] 0.0, 128
      %1824 = vxpose.xlu0.b32.cont [13/16] 0.0, 128
      %1825 = vxpose.xlu0.b32.cont [14/16] 0.0, 128
      %1826 = vxpose.xlu0.b32.cont [15/16] 0.0, 128
      %1827 = vxpose.xlu0.b32.end [16/16] 0.0, 128
      %v1828 = vpop.trf.xlu0
      %v1829 = vpop.trf.xlu0
      %v1830 = vpop.trf.xlu0
      %v1831 = vpop.trf.xlu0
      %v1832 = vpop.trf.xlu0
      %v1833 = vpop.trf.xlu0
      %v1834 = vpop.trf.xlu0
      %v1835 = vpop.trf.xlu0
      %v1836 = vpop.trf.xlu0
      %v1837 = vpop.trf.xlu0
      %v1838 = vpop.trf.xlu0
      %v1839 = vpop.trf.xlu0
      %v1840 = vpop.trf.xlu0
      %v1841 = vpop.trf.xlu0
      %v1842 = vpop.trf.xlu0
      %v1843 = vpop.trf.xlu0
      %v1844 = vpack.c.bf16 %v1828, %v1828
      %v1846 = vsel %vm775, %v1844, 0
      %1848 = vmatpush.bf16.msra.mxu0 0
      %1849 = vmatpush.bf16.msra.mxu0 0
      %1850 = vmatpush.bf16.msra.mxu0 0
      %1851 = vmatpush.bf16.msra.mxu0 0
      %1852 = vmatpush.bf16.msra.mxu0 0
      %1853 = vmatpush.bf16.msra.mxu0 0
      %1854 = vmatpush.bf16.msra.mxu0 %v1321
      %1855 = vmatpush.bf16.msra.mxu0 %v1320
      %1856 = vmatmul.bf16.gmra.mxu0 %v1846
      %v1857 = vpop.f32.mrf.mxu0
      %v1858 = vadd.f32 0.0, %v1857
      %v1859 = vpop.f32.mrf.mxu0
      %1860 = vdwg.mxu0
      %v1861 = vld [vmem:[%s650] sm:$0x1]
      %v1863 = vperm.slane %v1861, 0
      %v1865 = vadd.f32 %v1337, %v1863
      %v1866 = vadd.f32 %v1858, %v1863
      %v1867 = vadd.f32 %v1865, %v752
      %v1868 = vadd.f32 %v1866, %v753
      %v1869 = vld [vmem:[%s653] sm:$0x1]
      %v1870 = vld [vmem:[%s656] sm:$0x1]
      %v1871 = vsel %vm775, %v1867, 0.0
      %1872 = vadd.xlane.f32.xlu0 %v1871
      %v1873 = vpop.xlane.xlu0 %1872
      %v1874 = vsel %vm775, %v1868, 0.0
      %1875 = vadd.xlane.f32.xlu0 %v1874
      %v1876 = vpop.xlane.xlu0 %1875
      %v1877 = vrcp.pop 32.0
      %v1878 = vmul.f32 32.0, %v1877
      %v1879 = vsub.f32 1.0, %v1878
      %v1880 = vmul.f32 %v1877, %v1879
      %v1881 = vadd.f32 %v1877, %v1880
      %vm1882 = vweird.f32 %v1877
      %v1883 = vsel %vm1882, %v1877, %v1881
      %v1884 = vmul.f32 %v1873, %v1883
      %v1885 = vmul.f32 %v1876, %v1883
      %v1886 = vsub.f32 %v1867, %v1884
      %v1887 = vsub.f32 %v1868, %v1885
      %v1888 = vmul.f32 %v1886, %v1886
      %v1889 = vmul.f32 %v1887, %v1887
      %v1890 = vsel %vm775, %v1888, 0.0
      %1891 = vadd.xlane.f32.xlu0 %v1890
      %v1892 = vpop.xlane.xlu0 %1891
      %v1893 = vsel %vm775, %v1889, 0.0
      %1894 = vadd.xlane.f32.xlu0 %v1893
      %v1895 = vpop.xlane.xlu0 %1894
      %v1896 = vmul.f32 %v1892, %v1883
      %v1897 = vmul.f32 %v1895, %v1883
      %v1898 = vadd.f32 %v1896, 1e-12
      %v1899 = vadd.f32 %v1897, 1e-12
      %v1900 = vrsqrt.pop %v1898
      %v1901 = vmul.f32 %v1900, %v1898
      %v1902 = vmul.f32 %v1901, %v1900
      %v1903 = vmul.f32 0.5, %v1902
      %v1904 = vsub.f32 1.5, %v1903
      %v1905 = vmul.f32 %v1900, %v1904
      %vm1906 = vweird.f32 %v1898
      %vm1907 = vweird.f32 %v1900
      %vm1908 = vmor %vm1906, %vm1907
      %v1909 = vsel %vm1908, %v1900, %v1905
      %v1910 = vrsqrt.pop %v1899
      %v1911 = vmul.f32 %v1910, %v1899
      %v1912 = vmul.f32 %v1911, %v1910
      %v1913 = vmul.f32 0.5, %v1912
      %v1914 = vsub.f32 1.5, %v1913
      %v1915 = vmul.f32 %v1910, %v1914
      %vm1916 = vweird.f32 %v1899
      %vm1917 = vweird.f32 %v1910
      %vm1918 = vmor %vm1916, %vm1917
      %v1919 = vsel %vm1918, %v1910, %v1915
      %v1920 = vmul.f32 %v1886, %v1909
      %v1921 = vmul.f32 %v1887, %v1919
      %v1923 = vperm.slane %v1869, 0
      %v1925 = vmul.f32 %v1920, %v1923
      %v1926 = vmul.f32 %v1921, %v1923
      %v1928 = vperm.slane %v1870, 0
      %v1930 = vadd.f32 %v1925, %v1928
      %v1931 = vadd.f32 %v1926, %v1928
      %v1932 = vpack.c.bf16 %v1931, %v1930
      %v1933 = vld [vmem:[%s661] sm:$0xf]
      %v1934 = vld [vmem:[%s661 + $0x4] sm:$0xf]
      %v1935 = vld [vmem:[%s661 + $0x8] sm:$0xf]
      %v1936 = vld [vmem:[%s661 + $0xc] sm:$0xf]
      %v1937 = vld [vmem:[%s664] sm:$0x1]
      %v1939 = vperm.slane %v1937, 0
      %v1945 = vunpack.c.l.b16 %v1933
      %v1946 = vunpack.c.l.b16 %v1934
      %v1947 = vunpack.c.l.b16 %v1935
      %v1948 = vunpack.c.l.b16 %v1936
      %v1949 = vpack.c.b16 %v1946, %v1945
      %v1950 = vpack.c.b16 %v1948, %v1947
      %v1954 = vsel %vm775, %v1932, 0
      %1956 = vmatpush.bf16.msra.mxu0 0
      %1957 = vmatpush.bf16.msra.mxu0 0
      %1958 = vmatpush.bf16.msra.mxu0 0
      %1959 = vmatpush.bf16.msra.mxu0 0
      %1960 = vmatpush.bf16.msra.mxu0 0
      %1961 = vmatpush.bf16.msra.mxu0 0
      %1962 = vmatpush.bf16.msra.mxu0 %v1950
      %1963 = vmatpush.bf16.msra.mxu0 %v1949
      %1964 = vmatmul.bf16.gmra.mxu0 %v1954
      %v1965 = vpop.f32.mrf.mxu0
      %v1966 = vadd.f32 %v1939, %v1965
      %v1967 = vpop.f32.mrf.mxu0
      %v1968 = vadd.f32 %v1939, %v1967
      %1969 = vdwg.mxu0
      %v1970 = vmul.f32 %v1966, 0.5
      %v1971 = vmul.f32 %v1968, 0.5
      %v1972 = vmul.f32 %v1966, 0.70710677
      %v1973 = vmul.f32 %v1968, 0.70710677
      %v1974 = vmul.f32 %v1972, %v1972
      %v1975 = vmin.f32 16.0, %v1974
      %v1976 = vmul.f32 %v1975, 2.1237322e-06
      %v1977 = vadd.f32 %v1976, 0.00028619796
      %v1978 = vmul.f32 %v1975, %v1977
      %v1979 = vadd.f32 %v1978, 0.0036580483
      %v1980 = vmul.f32 %v1975, %v1979
      %v1981 = vadd.f32 %v1980, 0.05243302
      %v1982 = vmul.f32 %v1975, %v1981
      %v1983 = vadd.f32 %v1982, 0.18741608
      %v1984 = vmul.f32 %v1975, %v1983
      %v1985 = vadd.f32 %v1984, 1.1283791
      %v1986 = vmul.f32 %v1972, %v1985
      %v1987 = vmul.f32 %v1975, 3.8918573e-05
      %v1988 = vadd.f32 %v1987, 0.001143296
      %v1989 = vmul.f32 %v1975, %v1988
      %v1990 = vadd.f32 %v1989, 0.014752088
      %v1991 = vmul.f32 %v1975, %v1990
      %v1992 = vadd.f32 %v1991, 0.112945676
      %v1993 = vmul.f32 %v1975, %v1992
      %v1994 = vadd.f32 %v1993, 0.4994258
      %v1995 = vmul.f32 %v1975, %v1994
      %v1996 = vadd.f32 %v1995, 1.0
      %v1997 = vrcp.pop %v1996
      %v1998 = vmul.f32 %v1996, %v1997
      %v1999 = vsub.f32 1.0, %v1998
      %v2000 = vmul.f32 %v1997, %v1999
      %v2001 = vadd.f32 %v1997, %v2000
      %vm2002 = vweird.f32 %v1996
      %vm2003 = vweird.f32 %v1997
      %vm2004 = vmor %vm2002, %vm2003
      %v2005 = vsel %vm2004, %v1997, %v2001
      %v2006 = vand.u32 2147483647, %v1996
      %vm2007 = vcmp.eq.f32.partialorder %v2006, 8.507059e+37
      %v2008 = vand.u32 %v1996, 2147483648
      %v2009 = vor.u32 1.1754944e-38, %v2008
      %v2010 = vsel %vm2007, %v2009, %v2005
      %v2011 = vmul.f32 %v1986, %v2010
      %v2012 = vmin.f32 %v2011, 1.0
      %v2013 = vmax.f32 %v2012, -1.0
      %v2014 = vmul.f32 %v1973, %v1973
      %v2015 = vmin.f32 16.0, %v2014
      %v2016 = vmul.f32 %v2015, 2.1237322e-06
      %v2017 = vadd.f32 %v2016, 0.00028619796
      %v2018 = vmul.f32 %v2015, %v2017
      %v2019 = vadd.f32 %v2018, 0.0036580483
      %v2020 = vmul.f32 %v2015, %v2019
      %v2021 = vadd.f32 %v2020, 0.05243302
      %v2022 = vmul.f32 %v2015, %v2021
      %v2023 = vadd.f32 %v2022, 0.18741608
      %v2024 = vmul.f32 %v2015, %v2023
      %v2025 = vadd.f32 %v2024, 1.1283791
      %v2026 = vmul.f32 %v1973, %v2025
      %v2027 = vmul.f32 %v2015, 3.8918573e-05
      %v2028 = vadd.f32 %v2027, 0.001143296
      %v2029 = vmul.f32 %v2015, %v2028
      %v2030 = vadd.f32 %v2029, 0.014752088
      %v2031 = vmul.f32 %v2015, %v2030
      %v2032 = vadd.f32 %v2031, 0.112945676
      %v2033 = vmul.f32 %v2015, %v2032
      %v2034 = vadd.f32 %v2033, 0.4994258
      %v2035 = vmul.f32 %v2015, %v2034
      %v2036 = vadd.f32 %v2035, 1.0
      %v2037 = vrcp.pop %v2036
      %v2038 = vmul.f32 %v2036, %v2037
      %v2039 = vsub.f32 1.0, %v2038
      %v2040 = vmul.f32 %v2037, %v2039
      %v2041 = vadd.f32 %v2037, %v2040
      %vm2042 = vweird.f32 %v2036
      %vm2043 = vweird.f32 %v2037
      %vm2044 = vmor %vm2042, %vm2043
      %v2045 = vsel %vm2044, %v2037, %v2041
      %v2046 = vand.u32 2147483647, %v2036
      %vm2047 = vcmp.eq.f32.partialorder %v2046, 8.507059e+37
      %v2048 = vand.u32 %v2036, 2147483648
      %v2049 = vor.u32 1.1754944e-38, %v2048
      %v2050 = vsel %vm2047, %v2049, %v2045
      %v2051 = vmul.f32 %v2026, %v2050
      %v2052 = vmin.f32 %v2051, 1.0
      %v2053 = vmax.f32 %v2052, -1.0
      %v2054 = vadd.f32 %v2013, 1.0
      %v2055 = vadd.f32 %v2053, 1.0
      %v2056 = vmul.f32 %v1970, %v2054
      %v2057 = vmul.f32 %v1971, %v2055
      %v2058 = vpack.c.bf16 %v2057, %v2056
      %v2059 = vld [vmem:[%s669] sm:$0xf]
      %v2060 = vld [vmem:[%s669 + $0x4] sm:$0xf]
      %v2061 = vld [vmem:[%s669 + $0x8] sm:$0xf]
      %v2062 = vld [vmem:[%s669 + $0xc] sm:$0xf]
      %v2063 = vld [vmem:[%s669 + $0x10] sm:$0xf]
      %v2064 = vld [vmem:[%s669 + $0x14] sm:$0xf]
      %v2065 = vld [vmem:[%s669 + $0x18] sm:$0xf]
      %v2066 = vld [vmem:[%s669 + $0x1c] sm:$0xf]
      %v2067 = vld [vmem:[%s672] sm:$0x1]
      %v2069 = vperm.slane %v2067, 0
      %v2079 = vunpack.c.l.b16 %v2059
      %v2080 = vunpack.c.l.b16 %v2060
      %v2081 = vunpack.c.l.b16 %v2061
      %v2082 = vunpack.c.l.b16 %v2062
      %v2083 = vunpack.c.l.b16 %v2063
      %v2084 = vunpack.c.l.b16 %v2064
      %v2085 = vunpack.c.l.b16 %v2065
      %v2086 = vunpack.c.l.b16 %v2066
      %v2087 = vpack.c.b16 %v2080, %v2079
      %v2088 = vpack.c.b16 %v2082, %v2081
      %v2089 = vpack.c.b16 %v2084, %v2083
      %v2090 = vpack.c.b16 %v2086, %v2085
      %vm2095 = vcmask 523264
      %v2097 = vsel %vm2095, %v2058, 0
      %2099 = vmatpush.bf16.msra.mxu0 0
      %2100 = vmatpush.bf16.msra.mxu0 0
      %2101 = vmatpush.bf16.msra.mxu0 0
      %2102 = vmatpush.bf16.msra.mxu0 0
      %2103 = vmatpush.bf16.msra.mxu0 %v2090
      %2104 = vmatpush.bf16.msra.mxu0 %v2089
      %2105 = vmatpush.bf16.msra.mxu0 %v2088
      %2106 = vmatpush.bf16.msra.mxu0 %v2087
      %2107 = vmatmul.bf16.gmra.mxu0 %v2097
      %v2108 = vpop.f32.mrf.mxu0
      %v2109 = vadd.f32 %v2069, %v2108
      %v2110 = vpop.f32.mrf.mxu0
      %v2111 = vadd.f32 %v2069, %v2110
      %2112 = vdwg.mxu0
      %v2113 = vadd.f32 %v2109, %v1930
      %v2114 = vadd.f32 %v2111, %v1931
      %v2115 = vld [vmem:[%s675] sm:$0x1]
      %v2116 = vld [vmem:[%s678] sm:$0x1]
      %v2117 = vsel %vm775, %v2113, 0.0
      %2118 = vadd.xlane.f32.xlu0 %v2117
      %v2119 = vpop.xlane.xlu0 %2118
      %v2120 = vsel %vm775, %v2114, 0.0
      %2121 = vadd.xlane.f32.xlu0 %v2120
      %v2122 = vpop.xlane.xlu0 %2121
      %v2123 = vmul.f32 %v2119, %v1883
      %v2124 = vmul.f32 %v2122, %v1883
      %v2125 = vsub.f32 %v2113, %v2123
      %v2126 = vsub.f32 %v2114, %v2124
      %v2127 = vmul.f32 %v2125, %v2125
      %v2128 = vmul.f32 %v2126, %v2126
      %v2129 = vsel %vm775, %v2127, 0.0
      %2130 = vadd.xlane.f32.xlu0 %v2129
      %v2131 = vpop.xlane.xlu0 %2130
      %v2132 = vsel %vm775, %v2128, 0.0
      %2133 = vadd.xlane.f32.xlu0 %v2132
      %v2134 = vpop.xlane.xlu0 %2133
      %v2135 = vmul.f32 %v2131, %v1883
      %v2136 = vmul.f32 %v2134, %v1883
      %v2137 = vadd.f32 %v2135, 1e-12
      %v2138 = vadd.f32 %v2136, 1e-12
      %v2139 = vrsqrt.pop %v2137
      %v2140 = vmul.f32 %v2139, %v2137
      %v2141 = vmul.f32 %v2140, %v2139
      %v2142 = vmul.f32 0.5, %v2141
      %v2143 = vsub.f32 1.5, %v2142
      %v2144 = vmul.f32 %v2139, %v2143
      %vm2145 = vweird.f32 %v2137
      %vm2146 = vweird.f32 %v2139
      %vm2147 = vmor %vm2145, %vm2146
      %v2148 = vsel %vm2147, %v2139, %v2144
      %v2149 = vrsqrt.pop %v2138
      %v2150 = vmul.f32 %v2149, %v2138
      %v2151 = vmul.f32 %v2150, %v2149
      %v2152 = vmul.f32 0.5, %v2151
      %v2153 = vsub.f32 1.5, %v2152
      %v2154 = vmul.f32 %v2149, %v2153
      %vm2155 = vweird.f32 %v2138
      %vm2156 = vweird.f32 %v2149
      %vm2157 = vmor %vm2155, %vm2156
      %v2158 = vsel %vm2157, %v2149, %v2154
      %v2159 = vmul.f32 %v2125, %v2148
      %v2160 = vmul.f32 %v2126, %v2158
      %v2162 = vperm.slane %v2115, 0
      %v2164 = vmul.f32 %v2159, %v2162
      %v2165 = vmul.f32 %v2160, %v2162
      %v2167 = vperm.slane %v2116, 0
      %v2169 = vadd.f32 %v2164, %v2167
      %v2170 = vadd.f32 %v2165, %v2167
      %2171 = vst.msk [vmem:[#allocation2] sm:$0xff] %vm775, %v2169
      %2172 = vst.msk [vmem:[#allocation2 + $0x8] sm:$0xff] %vm775, %v2170
      %p2173 = scmp.eq.s32.totalorder %s27, 1
      // Predicated region
      $region89: #{seq2seq_forward.2} parent=83 // pred_check
        %p2174 = pneg %p2173
      $region90: #{seq2seq_forward.2} parent=83 // pred_check_branch
        %2176 = sbr.rel (%p2174) target = $region92
      $region91: #{seq2seq_forward.2} parent=83 // pred_region
        %v2177 = vpack.c.bf16 %v2169, %v2169
        %v2178 = vpack.c.bf16 %v2170, %v2170
        %vm2179 = vcmask 257024
        %2180 = vst.msk [vmem:[%s16] sm:$0xf] %vm2179, %v2177
        %2181 = vst.msk [vmem:[%s16 + $0x4] sm:$0xf] %vm2179, %v2178
      $region92: #{seq2seq_forward.2} parent=83 // pred_fallthru
        _
      // Predicated region
      $region93: #{seq2seq_forward.2} parent=83 // pred_check
        %p2182 = pneg %p436
      $region94: #{seq2seq_forward.2} parent=83 // pred_check_branch
        %2184 = sbr.rel (%p2182) target = $region96
      $region95: #{seq2seq_forward.2} parent=83 // pred_region
        _
      $region96: #{seq2seq_forward.2} parent=83 // pred_fallthru
        _
      // Predicated region
      $region97: #{seq2seq_forward.2} parent=83 // pred_check
        %p2185 = pneg %p436
      $region98: #{seq2seq_forward.2} parent=83 // pred_check_branch
        %2187 = sbr.rel (%p2185) target = $region100
      $region99: #{seq2seq_forward.2} parent=83 // pred_region
        _
      $region100: #{seq2seq_forward.2} parent=83 // pred_fallthru
        _
    $region84: #{seq2seq_forward.2} parent=5 // pred_fallthru
      _
    %p2188 = scmp.le.s32.totalorder 2, %s22
    // Predicated region
    $region101: #{seq2seq_forward.2} parent=5 // pred_check
      %p2189 = pneg %p2188
    $region102: #{seq2seq_forward.2} parent=5 // pred_check_branch
      %2191 = sbr.rel (%p2189) target = $region104
    $region103: #{seq2seq_forward.2} parent=5 // pred_region
      %s2192 = ssub.s32 %s22, 2
    $region104: #{seq2seq_forward.2} parent=5 // pred_fallthru
      _
  $region6: #{seq2seq_forward.2} parent=0 // loop_footer
    %s26 = sadd.s32 1, %s22
  $region7: #{seq2seq_forward.2} parent=0 // loop_footer_branch
    %21 = sbr.rel target = $region3
  $region8: #{seq2seq_forward.2} parent=0 // loop_exit
    _

</llo_original>
